<compile_context>
chip_gen: v7x
topology: tpu7x:2x2x1
jax: 0.10.0
libtpu: 0.0.40
codegen_flags: <defaults>
</compile_context>

<pallas_src>
import math

import jax
import jax.numpy as jnp
from jax import lax
from jax.experimental import pallas as pl
from jax.experimental.pallas import tpu as pltpu

DT = jnp.float32

# ------------------------------ config ---------------------------------------
BATCH = 2
NUM_OBJS = 8          # num_objs
OBJ_DIM = 32          # obj_dim
B_DIM = 4             # bounding-box feature dim (only used by 'ban' fusion)
SEQ = 8               # question seq_length
VOCAB = 100
WORD_DIM = 16
HIDDEN = 32
JOINT_DIM = 32
POS_E = 16            # implicit position embedding dim
NUM_EDGE = 5          # edge labels for sem/spa adjacency (unused for implicit)
NUM_ANS = 10
REASON_STEP = 2
LANE = 128            # lane-dense padded width for HBM outputs
RELATION_TYPE = "implicit"
FUSION = "mutan"      # -> the `else` branch of the fusion switch

# ----------------------- packed weight-slab row offsets -----------------------
_R_QEMB = 0                              # W_qemb       rows [0, 16)    cols [0, 32)
_R_CTRL = _R_QEMB + WORD_DIM             # W_ctrl_pack  rows [16, 48)   cols [0, 64)
_R_QKV = _R_CTRL + HIDDEN                # W_qkv        rows [48, 80)   cols [0, 96)
_R_JVQ = _R_QKV + OBJ_DIM                # W_jv|W_jq    rows [80, 112)  cols [0,32)|[32,64)
_R_CLS = _R_JVQ + HIDDEN                 # W_c (padded) rows [112, 144) cols [0, 128)
_R_POS = _R_CLS + JOINT_DIM              # W_pos_diag   rows [144, 272) cols [0, 8)
_W_ROWS = _R_POS + NUM_OBJS * POS_E      # 272
_B_ROWS = 8                              # bias slab: one (8, 128) vreg


# --------------------------- fused ReGAT kernel -------------------------------
def _regat_fused_kernel(wemb_ref, mask_ref, v_ref, pos_ref,
                        wslab_ref, bslab_ref, out_ref):
    H = HIDDEN
    S = SEQ
    N = NUM_OBJS
    R = REASON_STEP
    J = JOINT_DIM
    BB = mask_ref.shape[0]               # batch block (B for grid=(1,), 1 on v7x split)
    scale = 1.0 / math.sqrt(H)

    def dot(a, b):                        # 2-D MXU matmul, f32 accumulate
        return jnp.dot(a, b, preferred_element_type=jnp.float32)

    def bmm(a, b):                        # (BB,M,K) @ (BB,K,N) -> (BB,M,N)
        return lax.dot_general(a, b, (((2,), (1,)), ((0,), (0,))),
                               preferred_element_type=jnp.float32)

    def bmm_t(a, b):                      # (BB,M,K) @ (BB,N,K)^T -> (BB,M,N)
        return lax.dot_general(a, b, (((2,), (2,)), ((0,), (0,))),
                               preferred_element_type=jnp.float32)

    def softmax_last(s, mask=None):
        if mask is not None:
            s = jnp.where(mask > 0.0, s, jnp.full_like(s, -1e30))
        s = s - jnp.max(s, axis=-1, keepdims=True)
        e = jnp.exp(s)
        return e / (jnp.sum(e, axis=-1, keepdims=True) + 1e-9)

    # ---- static slices of the two weight slabs (ref views -> tiny loads) -----
    W_qemb = wslab_ref[_R_QEMB:_R_QEMB + WORD_DIM, 0:H]           # (16, 32)
    W_ctrl = wslab_ref[_R_CTRL:_R_CTRL + H, 0:R * H]              # (32, 64)
    W_qkv = wslab_ref[_R_QKV:_R_QKV + OBJ_DIM, 0:3 * H]           # (32, 96)
    W_jv = wslab_ref[_R_JVQ:_R_JVQ + H, 0:J]                      # (32, 32)
    W_jq = wslab_ref[_R_JVQ:_R_JVQ + H, J:2 * J]                  # (32, 32)
    W_c = wslab_ref[_R_CLS:_R_CLS + J, :]                         # (32, 128)
    W_pos = wslab_ref[_R_POS:_R_POS + N * POS_E, 0:N]             # (128, 8)

    b_qemb = bslab_ref[0:1, 0:H]
    w_qatt = bslab_ref[1:2, 0:H]
    b_ctrl = bslab_ref[2:3, 0:R * H]
    b_qkv = bslab_ref[3:4, 0:3 * H]
    b_jv = bslab_ref[4:5, 0:J]
    b_jq = bslab_ref[5:6, 0:J]
    b_c = bslab_ref[6:7, :]

    mask = mask_ref[...]                                          # (BB, 1, S)

    # ---- question encoder: one MXU matmul + tanh over all tokens -------------
    q_seq2 = jnp.tanh(dot(wemb_ref[...], W_qemb) + b_qemb)        # (BB*S, H)
    q_seq = q_seq2.reshape(BB, S, H)

    # ---- q_att: learned-query masked attention pooling (batched over B) ------
    qatt_b = jnp.broadcast_to(w_qatt.reshape(1, 1, H), (BB, 1, H))
    sq = bmm_t(qatt_b, q_seq) * scale                             # (BB, 1, S)
    wq = softmax_last(sq, mask)
    q_self1 = bmm(wq, q_seq)                                      # (BB, 1, H)
    q_self = q_self1[:, 0, :]                                     # (BB, H)

    # ---- controller: all steps packed into one matmul -------------------------
    ctrl_all = dot(q_self, W_ctrl) + b_ctrl                       # (BB, R*H)

    # ---- packed QKV projection of object features (step-invariant) -----------
    vqkv = dot(v_ref[...], W_qkv) + b_qkv                         # (BB*N, 3H)
    vq = vqkv[:, 0:H].reshape(BB, N, H)
    vk = vqkv[:, H:2 * H].reshape(BB, N, H)
    vv = vqkv[:, 2 * H:3 * H].reshape(BB, N, H)

    # ---- implicit position bias: lane-dense MXU dot (step-invariant) ---------
    pos_bias = dot(pos_ref[...], W_pos).reshape(BB, N, N)         # (BB, N, N)

    # ---- q-side joint projection (step-invariant) -----------------------------
    jq = jnp.maximum(dot(q_self, W_jq) + b_jq, 0.0)               # (BB, J)

    acc_jv = jnp.zeros((BB, J), jnp.float32)
    aw = None
    for r in range(R):                        # static reasoning-step loop
        # control vector for step r (batched masked attention over the question)
        ctrl_r = ctrl_all[:, r * H:(r + 1) * H][:, None, :]       # (BB, 1, H)
        sc = bmm_t(ctrl_r, q_seq) * scale                         # (BB, 1, S)
        cv = bmm(softmax_last(sc, mask), q_seq)                   # (BB, 1, H)

        # control-conditioned graph attention (v_relation surrogate), batched
        qs = vq * cv                                              # (BB, N, H)
        s = bmm_t(qs, vk) * scale + pos_bias                      # (BB, N, N)
        p = softmax_last(s)
        v_emb = jnp.maximum(bmm(p, vv) + vv, 0.0)                 # (BB, N, H)

        # joint_embedding: question-conditioned pooling over objects
        s2 = bmm_t(q_self1, v_emb) * scale                        # (BB, 1, N)
        aw = softmax_last(s2)                                     # (BB, 1, N)
        v_pool = bmm(aw, v_emb)[:, 0, :]                          # (BB, H)

        acc_jv = acc_jv + jnp.maximum(dot(v_pool, W_jv) + b_jv, 0.0)

    # mean over steps (hoisted classifier: linear -> classify the mean joint)
    joint = (acc_jv * (1.0 / R)) * jq                             # (BB, J)
    pred = dot(joint, W_c) + b_c                                  # (BB, 128)

    # att from the LAST step (matches PyTorch loop semantics), lane padded
    att_pad = jnp.concatenate(
        [aw[:, 0, :], jnp.zeros((BB, LANE - N), jnp.float32)], axis=-1)  # (BB,128)

    # single unmasked lane-dense store: row 0 = prediction, row 1 = att
    out = jnp.concatenate([pred[:, None, :], att_pad[:, None, :]], axis=1)
    out_ref[...] = out.astype(out_ref.dtype)


# ------------------------------ parameters -----------------------------------
def init_params(key):
    ks = jax.random.split(key, 12)
    s = 0.1
    W_qemb = s * jax.random.normal(ks[1], (WORD_DIM, HIDDEN), DT)
    w_qatt = s * jax.random.normal(ks[2], (HIDDEN,), DT)
    W_ctrl = s * jax.random.normal(ks[3], (REASON_STEP, HIDDEN, HIDDEN), DT)
    Wq = s * jax.random.normal(ks[4], (OBJ_DIM, HIDDEN), DT)
    Wk = s * jax.random.normal(ks[5], (OBJ_DIM, HIDDEN), DT)
    Wv = s * jax.random.normal(ks[6], (OBJ_DIM, HIDDEN), DT)
    w_pos = s * jax.random.normal(ks[7], (POS_E,), DT)
    W_jv = s * jax.random.normal(ks[8], (HIDDEN, JOINT_DIM), DT)
    W_jq = s * jax.random.normal(ks[9], (HIDDEN, JOINT_DIM), DT)
    W_c = s * jax.random.normal(ks[10], (JOINT_DIM, NUM_ANS), DT)

    def pad_lanes(w):
        r, c = w.shape
        return jnp.zeros((r, LANE), DT).at[:, :c].set(w)

    W_ctrl_pack = jnp.concatenate([W_ctrl[r] for r in range(REASON_STEP)], axis=1)
    W_qkv = jnp.concatenate([Wq, Wk, Wv], axis=1)                    # (OBJ_DIM, 3H)
    W_jvq = jnp.concatenate([W_jv, W_jq], axis=1)                    # (H, 2*JOINT)
    # block-diagonal copy of w_pos so pos_bias becomes one lane-dense MXU dot
    W_pos_diag = jnp.kron(jnp.eye(NUM_OBJS, dtype=DT), w_pos.reshape(POS_E, 1))

    W_slab = jnp.concatenate(
        [pad_lanes(W_qemb), pad_lanes(W_ctrl_pack), pad_lanes(W_qkv),
         pad_lanes(W_jvq), pad_lanes(W_c), pad_lanes(W_pos_diag)], axis=0)
    assert W_slab.shape == (_W_ROWS, LANE)

    # bias slab (one vreg): row0 b_qemb, row1 w_qatt, row2 b_ctrl, row3 b_qkv,
    # row4 b_jv, row5 b_jq, row6 b_c, row7 unused.  All biases init to zero.
    B_slab = jnp.zeros((_B_ROWS, LANE), DT).at[1, :HIDDEN].set(w_qatt)

    return {
        "emb_table": s * jax.random.normal(ks[0], (VOCAB, WORD_DIM), DT),
        "W_slab": W_slab,
        "B_slab": B_slab,
    }


# --------------------------- pallas_call construction -------------------------
def _split_batch_over_cores():
    """Use per-batch grid only on v7x (2 TensorCores); perf-only decision."""
    try:
        kind = jax.devices()[0].device_kind.lower()
    except Exception:
        return False
    return ("v7" in kind) or ("7x" in kind)


def _build_regat_call():
    out_shape = jax.ShapeDtypeStruct((BATCH, 2, LANE), DT)
    if _split_batch_over_cores() and BATCH > 1:
        grid = (BATCH,)
        in_specs = [
            pl.BlockSpec((SEQ, WORD_DIM), lambda b: (b, 0)),
            pl.BlockSpec((1, 1, SEQ), lambda b: (b, 0, 0)),
            pl.BlockSpec((NUM_OBJS, OBJ_DIM), lambda b: (b, 0)),
            pl.BlockSpec((NUM_OBJS, NUM_OBJS * POS_E), lambda b: (b, 0)),
            pl.BlockSpec((_W_ROWS, LANE), lambda b: (0, 0)),
            pl.BlockSpec((_B_ROWS, LANE), lambda b: (0, 0)),
        ]
        out_specs = pl.BlockSpec((1, 2, LANE), lambda b: (b, 0, 0))
        sem = ("parallel",)
    else:
        grid = (1,)
        in_specs = [
            pl.BlockSpec((BATCH * SEQ, WORD_DIM), lambda i: (0, 0)),
            pl.BlockSpec((BATCH, 1, SEQ), lambda i: (0, 0, 0)),
            pl.BlockSpec((BATCH * NUM_OBJS, OBJ_DIM), lambda i: (0, 0)),
            pl.BlockSpec((BATCH * NUM_OBJS, NUM_OBJS * POS_E), lambda i: (0, 0)),
            pl.BlockSpec((_W_ROWS, LANE), lambda i: (0, 0)),
            pl.BlockSpec((_B_ROWS, LANE), lambda i: (0, 0)),
        ]
        out_specs = pl.BlockSpec((BATCH, 2, LANE), lambda i: (0, 0, 0))
        sem = ("arbitrary",)
    return pl.pallas_call(
        _regat_fused_kernel,
        out_shape=out_shape,
        grid=grid,
        in_specs=in_specs,
        out_specs=out_specs,
        compiler_params=pltpu.CompilerParams(dimension_semantics=sem),
    )


# ------------------------------ ReGAT forward ---------------------------------
@jax.jit
def regat_forward(params, v, b, q_tokens, mask, implicit_pos_emb,
                  sem_adj_matrix, spa_adj_matrix, labels):
    """Mirrors ReGAT.forward (relation_type='implicit', fusion='mutan')."""
    del b, sem_adj_matrix, spa_adj_matrix, labels  # unused on implicit / non-ban path
    B, N, obj_dim = v.shape
    _, S = q_tokens.shape

    # self.w_emb(q): token embedding lookup.
    # TODO(synk): data-dependent token gather stays as XLA glue outside the
    # fused kernel (an in-kernel gather is possible but not worth it here).
    w_emb = jnp.take(params["emb_table"], q_tokens, axis=0)       # [B, S, WORD_DIM]

    wemb2d = w_emb.reshape(B * S, WORD_DIM)
    mask3 = mask.reshape(B, 1, S)
    v2d = v.reshape(B * N, obj_dim)
    pos2d = implicit_pos_emb.reshape(B * N, N * POS_E)            # lane-dense (16,128)

    out = _build_regat_call()(wemb2d, mask3, v2d, pos2d,
                              params["W_slab"], params["B_slab"])

    prediction = out[:, 0, :NUM_ANS]      # mean over steps, computed in-kernel
    att = out[:, 1, :N]                   # object attention of the last step
    return prediction, att


# ---------------------------------- main --------------------------------------
if __name__ == "__main__":
    key = jax.random.PRNGKey(0)
    ks = jax.random.split(key, 8)

    v = jax.random.normal(ks[0], (BATCH, NUM_OBJS, OBJ_DIM), DT)
    b = jax.random.normal(ks[1], (BATCH, NUM_OBJS, B_DIM), DT)
    q = jax.random.randint(ks[2], (BATCH, SEQ), 0, VOCAB)
    mask = jnp.ones((BATCH, SEQ), DT).at[1, 6:].set(0.0)   # pad last 2 tokens of ex 1
    implicit_pos_emb = jax.random.normal(ks[3], (BATCH, NUM_OBJS, NUM_OBJS, POS_E), DT)
    sem_adj_matrix = jax.random.normal(ks[4], (BATCH, NUM_OBJS, NUM_OBJS, NUM_EDGE), DT)
    spa_adj_matrix = jax.random.normal(ks[5], (BATCH, NUM_OBJS, NUM_OBJS, NUM_EDGE), DT)
    labels = jnp.zeros((BATCH, NUM_ANS), DT)

    params = init_params(jax.random.PRNGKey(42))

    prediction, att = regat_forward(params, v, b, q, mask, implicit_pos_emb,
                                    sem_adj_matrix, spa_adj_matrix, labels)
    jax.block_until_ready((prediction, att))

    assert prediction.shape == (BATCH, NUM_ANS), prediction.shape
    assert att.shape == (BATCH, NUM_OBJS), att.shape
    assert bool(jnp.all(jnp.isfinite(prediction)))
    assert bool(jnp.all(jnp.isfinite(att)))
    print("KERNEL_OK")
</pallas_src>

<mosaic_0001>
module attributes {stable_mosaic.version = 11 : i64} {
  func.func @_regat_fused_kernel(%arg0: i32, %arg1: memref<16x16xf32, #tpu.memory_space<vmem>>, %arg2: memref<2x1x8xf32, #tpu.memory_space<vmem>>, %arg3: memref<16x32xf32, #tpu.memory_space<vmem>>, %arg4: memref<16x128xf32, #tpu.memory_space<vmem>>, %arg5: memref<272x128xf32, #tpu.memory_space<vmem>>, %arg6: memref<8x128xf32, #tpu.memory_space<vmem>>, %arg7: memref<2x2x128xf32, #tpu.memory_space<vmem>>) attributes {dimension_semantics = [#tpu.dimension_semantics<arbitrary>], iteration_bounds = array<i64: 1>, scalar_prefetch = 0 : i64, scratch_operands = 0 : i64, tpu.core_type = #tpu.core_type<tc>, window_params = [{pipeline_mode = #tpu.pipeline_mode<synchronous>, transform_indices = @transform_0, window_bounds = array<i64: 16, 16>}, {pipeline_mode = #tpu.pipeline_mode<synchronous>, transform_indices = @transform_1, window_bounds = array<i64: 2, 1, 8>}, {pipeline_mode = #tpu.pipeline_mode<synchronous>, transform_indices = @transform_2, window_bounds = array<i64: 16, 32>}, {pipeline_mode = #tpu.pipeline_mode<synchronous>, transform_indices = @transform_3, window_bounds = array<i64: 16, 128>}, {pipeline_mode = #tpu.pipeline_mode<synchronous>, transform_indices = @transform_4, window_bounds = array<i64: 272, 128>}, {pipeline_mode = #tpu.pipeline_mode<synchronous>, transform_indices = @transform_5, window_bounds = array<i64: 8, 128>}, {pipeline_mode = #tpu.pipeline_mode<synchronous>, transform_indices = @transform_6, window_bounds = array<i64: 2, 2, 128>}]} {
    %c0 = arith.constant 0 : index
    %c0_0 = arith.constant 0 : index
    %0 = vector.load %arg5[%c0, %c0_0] : memref<272x128xf32, #tpu.memory_space<vmem>>, vector<16x32xf32>
    %c16 = arith.constant 16 : index
    %c0_1 = arith.constant 0 : index
    %1 = vector.load %arg5[%c16, %c0_1] : memref<272x128xf32, #tpu.memory_space<vmem>>, vector<32x64xf32>
    %c48 = arith.constant 48 : index
    %c0_2 = arith.constant 0 : index
    %2 = vector.load %arg5[%c48, %c0_2] : memref<272x128xf32, #tpu.memory_space<vmem>>, vector<32x96xf32>
    %c80 = arith.constant 80 : index
    %c0_3 = arith.constant 0 : index
    %3 = vector.load %arg5[%c80, %c0_3] : memref<272x128xf32, #tpu.memory_space<vmem>>, vector<32x32xf32>
    %c80_4 = arith.constant 80 : index
    %c32 = arith.constant 32 : index
    %4 = vector.load %arg5[%c80_4, %c32] : memref<272x128xf32, #tpu.memory_space<vmem>>, vector<32x32xf32>
    %c112 = arith.constant 112 : index
    %c0_5 = arith.constant 0 : index
    %5 = vector.load %arg5[%c112, %c0_5] : memref<272x128xf32, #tpu.memory_space<vmem>>, vector<32x128xf32>
    %c144 = arith.constant 144 : index
    %c0_6 = arith.constant 0 : index
    %6 = vector.load %arg5[%c144, %c0_6] : memref<272x128xf32, #tpu.memory_space<vmem>>, vector<128x8xf32>
    %c0_7 = arith.constant 0 : index
    %c0_8 = arith.constant 0 : index
    %7 = vector.load %arg6[%c0_7, %c0_8] : memref<8x128xf32, #tpu.memory_space<vmem>>, vector<1x32xf32>
    %c1 = arith.constant 1 : index
    %c0_9 = arith.constant 0 : index
    %8 = vector.load %arg6[%c1, %c0_9] : memref<8x128xf32, #tpu.memory_space<vmem>>, vector<1x32xf32>
    %c2 = arith.constant 2 : index
    %c0_10 = arith.constant 0 : index
    %9 = vector.load %arg6[%c2, %c0_10] : memref<8x128xf32, #tpu.memory_space<vmem>>, vector<1x64xf32>
    %c3 = arith.constant 3 : index
    %c0_11 = arith.constant 0 : index
    %10 = vector.load %arg6[%c3, %c0_11] : memref<8x128xf32, #tpu.memory_space<vmem>>, vector<1x96xf32>
    %c4 = arith.constant 4 : index
    %c0_12 = arith.constant 0 : index
    %11 = vector.load %arg6[%c4, %c0_12] : memref<8x128xf32, #tpu.memory_space<vmem>>, vector<1x32xf32>
    %c5 = arith.constant 5 : index
    %c0_13 = arith.constant 0 : index
    %12 = vector.load %arg6[%c5, %c0_13] : memref<8x128xf32, #tpu.memory_space<vmem>>, vector<1x32xf32>
    %c6 = arith.constant 6 : index
    %c0_14 = arith.constant 0 : index
    %13 = vector.load %arg6[%c6, %c0_14] : memref<8x128xf32, #tpu.memory_space<vmem>>, vector<1x128xf32>
    %c0_15 = arith.constant 0 : index
    %c0_16 = arith.constant 0 : index
    %c0_17 = arith.constant 0 : index
    %14 = vector.load %arg2[%c0_15, %c0_16, %c0_17] : memref<2x1x8xf32, #tpu.memory_space<vmem>>, vector<2x1x8xf32>
    %c0_18 = arith.constant 0 : index
    %c0_19 = arith.constant 0 : index
    %15 = vector.load %arg1[%c0_18, %c0_19] : memref<16x16xf32, #tpu.memory_space<vmem>>, vector<16x16xf32>
    %cst = arith.constant dense<0.000000e+00> : vector<16x32xf32>
    %16 = tpu.matmul %15, %0, %cst {dimension_numbers = #tpu.dot_dimension_numbers<[1], [0], [0], [1], [0, 0, 1, 1], [], []>} : vector<16x16xf32>, vector<16x32xf32>, vector<16x32xf32> -> vector<16x32xf32>
    %17 = vector.broadcast %7 : vector<1x32xf32> to vector<16x32xf32>
    %18 = arith.addf %16, %17 : vector<16x32xf32>
    %19 = math.tanh %18 : vector<16x32xf32>
    %20 = vector.shape_cast %19 : vector<16x32xf32> to vector<2x8x32xf32>
    %21 = vector.shape_cast %8 : vector<1x32xf32> to vector<1x1x32xf32>
    %22 = vector.shape_cast %21 : vector<1x1x32xf32> to vector<1x1x32xf32>
    %23 = vector.broadcast %22 : vector<1x1x32xf32> to vector<2x1x32xf32>
    %cst_20 = arith.constant dense<0.000000e+00> : vector<2x1x8xf32>
    %24 = tpu.matmul %23, %20, %cst_20 {dimension_numbers = #tpu.dot_dimension_numbers<[2], [2], [1], [1], [0, 0, 0, 1, 1, 1], [0], [0]>} : vector<2x1x32xf32>, vector<2x8x32xf32>, vector<2x1x8xf32> -> vector<2x1x8xf32>
    %cst_21 = arith.constant 0.176776692 : f32
    %25 = vector.broadcast %cst_21 : f32 to vector<2x1x8xf32>
    %26 = arith.mulf %24, %25 : vector<2x1x8xf32>
    %cst_22 = arith.constant 0.000000e+00 : f32
    %27 = vector.broadcast %cst_22 : f32 to vector<2x1x8xf32>
    %28 = arith.cmpf ogt, %14, %27 : vector<2x1x8xf32>
    %cst_23 = arith.constant -1.000000e+30 : f32
    %29 = vector.broadcast %cst_23 : f32 to vector<2x1x8xf32>
    %30 = arith.select %28, %26, %29 : vector<2x1x8xi1>, vector<2x1x8xf32>
    %cst_24 = arith.constant dense<0xFF800000> : vector<2x1xf32>
    %31 = vector.multi_reduction <maximumf>, %30, %cst_24 [2] : vector<2x1x8xf32> to vector<2x1xf32>
    %32 = vector.shape_cast %31 : vector<2x1xf32> to vector<2x1x1xf32>
    %33 = vector.broadcast %32 : vector<2x1x1xf32> to vector<2x1x8xf32>
    %34 = arith.subf %30, %33 : vector<2x1x8xf32>
    %35 = math.exp %34 : vector<2x1x8xf32>
    %cst_25 = arith.constant dense<0.000000e+00> : vector<2x1xf32>
    %36 = vector.multi_reduction <add>, %35, %cst_25 [2] : vector<2x1x8xf32> to vector<2x1xf32>
    %37 = vector.shape_cast %36 : vector<2x1xf32> to vector<2x1x1xf32>
    %cst_26 = arith.constant 9.99999971E-10 : f32
    %38 = vector.broadcast %cst_26 : f32 to vector<2x1x1xf32>
    %39 = arith.addf %37, %38 : vector<2x1x1xf32>
    %40 = vector.broadcast %39 : vector<2x1x1xf32> to vector<2x1x8xf32>
    %41 = arith.divf %35, %40 : vector<2x1x8xf32>
    %cst_27 = arith.constant dense<0.000000e+00> : vector<2x1x32xf32>
    %42 = tpu.matmul %41, %20, %cst_27 {dimension_numbers = #tpu.dot_dimension_numbers<[2], [1], [1], [2], [0, 0, 0, 1, 1, 2], [0], [0]>} : vector<2x1x8xf32>, vector<2x8x32xf32>, vector<2x1x32xf32> -> vector<2x1x32xf32>
    %43 = vector.shape_cast %42 : vector<2x1x32xf32> to vector<2x32xf32>
    %cst_28 = arith.constant dense<0.000000e+00> : vector<2x64xf32>
    %44 = tpu.matmul %43, %1, %cst_28 {dimension_numbers = #tpu.dot_dimension_numbers<[1], [0], [0], [1], [0, 0, 1, 1], [], []>} : vector<2x32xf32>, vector<32x64xf32>, vector<2x64xf32> -> vector<2x64xf32>
    %45 = vector.broadcast %9 : vector<1x64xf32> to vector<2x64xf32>
    %46 = arith.addf %44, %45 : vector<2x64xf32>
    %c0_29 = arith.constant 0 : index
    %c0_30 = arith.constant 0 : index
    %47 = vector.load %arg3[%c0_29, %c0_30] : memref<16x32xf32, #tpu.memory_space<vmem>>, vector<16x32xf32>
    %cst_31 = arith.constant dense<0.000000e+00> : vector<16x96xf32>
    %48 = tpu.matmul %47, %2, %cst_31 {dimension_numbers = #tpu.dot_dimension_numbers<[1], [0], [0], [1], [0, 0, 1, 1], [], []>} : vector<16x32xf32>, vector<32x96xf32>, vector<16x96xf32> -> vector<16x96xf32>
    %49 = vector.broadcast %10 : vector<1x96xf32> to vector<16x96xf32>
    %50 = arith.addf %48, %49 : vector<16x96xf32>
    %51 = vector.extract_strided_slice %50 {offsets = [0, 0], sizes = [16, 32], strides = [1, 1]} : vector<16x96xf32> to vector<16x32xf32>
    %52 = vector.shape_cast %51 : vector<16x32xf32> to vector<2x8x32xf32>
    %53 = vector.extract_strided_slice %50 {offsets = [0, 32], sizes = [16, 32], strides = [1, 1]} : vector<16x96xf32> to vector<16x32xf32>
    %54 = vector.shape_cast %53 : vector<16x32xf32> to vector<2x8x32xf32>
    %55 = vector.extract_strided_slice %50 {offsets = [0, 64], sizes = [16, 32], strides = [1, 1]} : vector<16x96xf32> to vector<16x32xf32>
    %56 = vector.shape_cast %55 : vector<16x32xf32> to vector<2x8x32xf32>
    %c0_32 = arith.constant 0 : index
    %c0_33 = arith.constant 0 : index
    %57 = vector.load %arg4[%c0_32, %c0_33] : memref<16x128xf32, #tpu.memory_space<vmem>>, vector<16x128xf32>
    %cst_34 = arith.constant dense<0.000000e+00> : vector<16x8xf32>
    %58 = tpu.matmul %57, %6, %cst_34 {dimension_numbers = #tpu.dot_dimension_numbers<[1], [0], [0], [1], [0, 0, 1, 1], [], []>} : vector<16x128xf32>, vector<128x8xf32>, vector<16x8xf32> -> vector<16x8xf32>
    %59 = vector.shape_cast %58 : vector<16x8xf32> to vector<2x8x8xf32>
    %cst_35 = arith.constant dense<0.000000e+00> : vector<2x32xf32>
    %60 = tpu.matmul %43, %4, %cst_35 {dimension_numbers = #tpu.dot_dimension_numbers<[1], [0], [0], [1], [0, 0, 1, 1], [], []>} : vector<2x32xf32>, vector<32x32xf32>, vector<2x32xf32> -> vector<2x32xf32>
    %61 = vector.broadcast %12 : vector<1x32xf32> to vector<2x32xf32>
    %62 = arith.addf %60, %61 : vector<2x32xf32>
    %cst_36 = arith.constant 0.000000e+00 : f32
    %63 = vector.broadcast %cst_36 : f32 to vector<2x32xf32>
    %64 = arith.maximumf %62, %63 : vector<2x32xf32>
    %cst_37 = arith.constant 0.000000e+00 : f32
    %65 = vector.broadcast %cst_37 : f32 to vector<2x32xf32>
    %66 = vector.extract_strided_slice %46 {offsets = [0, 0], sizes = [2, 32], strides = [1, 1]} : vector<2x64xf32> to vector<2x32xf32>
    %67 = vector.shape_cast %66 : vector<2x32xf32> to vector<2x1x32xf32>
    %cst_38 = arith.constant dense<0.000000e+00> : vector<2x1x8xf32>
    %68 = tpu.matmul %67, %20, %cst_38 {dimension_numbers = #tpu.dot_dimension_numbers<[2], [2], [1], [1], [0, 0, 0, 1, 1, 1], [0], [0]>} : vector<2x1x32xf32>, vector<2x8x32xf32>, vector<2x1x8xf32> -> vector<2x1x8xf32>
    %cst_39 = arith.constant 0.176776692 : f32
    %69 = vector.broadcast %cst_39 : f32 to vector<2x1x8xf32>
    %70 = arith.mulf %68, %69 : vector<2x1x8xf32>
    %cst_40 = arith.constant 0.000000e+00 : f32
    %71 = vector.broadcast %cst_40 : f32 to vector<2x1x8xf32>
    %72 = arith.cmpf ogt, %14, %71 : vector<2x1x8xf32>
    %cst_41 = arith.constant -1.000000e+30 : f32
    %73 = vector.broadcast %cst_41 : f32 to vector<2x1x8xf32>
    %74 = arith.select %72, %70, %73 : vector<2x1x8xi1>, vector<2x1x8xf32>
    %cst_42 = arith.constant dense<0xFF800000> : vector<2x1xf32>
    %75 = vector.multi_reduction <maximumf>, %74, %cst_42 [2] : vector<2x1x8xf32> to vector<2x1xf32>
    %76 = vector.shape_cast %75 : vector<2x1xf32> to vector<2x1x1xf32>
    %77 = vector.broadcast %76 : vector<2x1x1xf32> to vector<2x1x8xf32>
    %78 = arith.subf %74, %77 : vector<2x1x8xf32>
    %79 = math.exp %78 : vector<2x1x8xf32>
    %cst_43 = arith.constant dense<0.000000e+00> : vector<2x1xf32>
    %80 = vector.multi_reduction <add>, %79, %cst_43 [2] : vector<2x1x8xf32> to vector<2x1xf32>
    %81 = vector.shape_cast %80 : vector<2x1xf32> to vector<2x1x1xf32>
    %cst_44 = arith.constant 9.99999971E-10 : f32
    %82 = vector.broadcast %cst_44 : f32 to vector<2x1x1xf32>
    %83 = arith.addf %81, %82 : vector<2x1x1xf32>
    %84 = vector.broadcast %83 : vector<2x1x1xf32> to vector<2x1x8xf32>
    %85 = arith.divf %79, %84 : vector<2x1x8xf32>
    %cst_45 = arith.constant dense<0.000000e+00> : vector<2x1x32xf32>
    %86 = tpu.matmul %85, %20, %cst_45 {dimension_numbers = #tpu.dot_dimension_numbers<[2], [1], [1], [2], [0, 0, 0, 1, 1, 2], [0], [0]>} : vector<2x1x8xf32>, vector<2x8x32xf32>, vector<2x1x32xf32> -> vector<2x1x32xf32>
    %87 = vector.broadcast %86 : vector<2x1x32xf32> to vector<2x8x32xf32>
    %88 = arith.mulf %52, %87 : vector<2x8x32xf32>
    %cst_46 = arith.constant dense<0.000000e+00> : vector<2x8x8xf32>
    %89 = tpu.matmul %88, %54, %cst_46 {dimension_numbers = #tpu.dot_dimension_numbers<[2], [2], [1], [1], [0, 0, 0, 1, 1, 1], [0], [0]>} : vector<2x8x32xf32>, vector<2x8x32xf32>, vector<2x8x8xf32> -> vector<2x8x8xf32>
    %cst_47 = arith.constant 0.176776692 : f32
    %90 = vector.broadcast %cst_47 : f32 to vector<2x8x8xf32>
    %91 = arith.mulf %89, %90 : vector<2x8x8xf32>
    %92 = arith.addf %91, %59 : vector<2x8x8xf32>
    %cst_48 = arith.constant dense<0xFF800000> : vector<2x8xf32>
    %93 = vector.multi_reduction <maximumf>, %92, %cst_48 [2] : vector<2x8x8xf32> to vector<2x8xf32>
    %94 = vector.shape_cast %93 : vector<2x8xf32> to vector<2x8x1xf32>
    %95 = vector.broadcast %94 : vector<2x8x1xf32> to vector<2x8x8xf32>
    %96 = arith.subf %92, %95 : vector<2x8x8xf32>
    %97 = math.exp %96 : vector<2x8x8xf32>
    %cst_49 = arith.constant dense<0.000000e+00> : vector<2x8xf32>
    %98 = vector.multi_reduction <add>, %97, %cst_49 [2] : vector<2x8x8xf32> to vector<2x8xf32>
    %99 = vector.shape_cast %98 : vector<2x8xf32> to vector<2x8x1xf32>
    %cst_50 = arith.constant 9.99999971E-10 : f32
    %100 = vector.broadcast %cst_50 : f32 to vector<2x8x1xf32>
    %101 = arith.addf %99, %100 : vector<2x8x1xf32>
    %102 = vector.broadcast %101 : vector<2x8x1xf32> to vector<2x8x8xf32>
    %103 = arith.divf %97, %102 : vector<2x8x8xf32>
    %cst_51 = arith.constant dense<0.000000e+00> : vector<2x8x32xf32>
    %104 = tpu.matmul %103, %56, %cst_51 {dimension_numbers = #tpu.dot_dimension_numbers<[2], [1], [1], [2], [0, 0, 0, 1, 1, 2], [0], [0]>} : vector<2x8x8xf32>, vector<2x8x32xf32>, vector<2x8x32xf32> -> vector<2x8x32xf32>
    %105 = arith.addf %104, %56 : vector<2x8x32xf32>
    %cst_52 = arith.constant 0.000000e+00 : f32
    %106 = vector.broadcast %cst_52 : f32 to vector<2x8x32xf32>
    %107 = arith.maximumf %105, %106 : vector<2x8x32xf32>
    %cst_53 = arith.constant dense<0.000000e+00> : vector<2x1x8xf32>
    %108 = tpu.matmul %42, %107, %cst_53 {dimension_numbers = #tpu.dot_dimension_numbers<[2], [2], [1], [1], [0, 0, 0, 1, 1, 1], [0], [0]>} : vector<2x1x32xf32>, vector<2x8x32xf32>, vector<2x1x8xf32> -> vector<2x1x8xf32>
    %cst_54 = arith.constant 0.176776692 : f32
    %109 = vector.broadcast %cst_54 : f32 to vector<2x1x8xf32>
    %110 = arith.mulf %108, %109 : vector<2x1x8xf32>
    %cst_55 = arith.constant dense<0xFF800000> : vector<2x1xf32>
    %111 = vector.multi_reduction <maximumf>, %110, %cst_55 [2] : vector<2x1x8xf32> to vector<2x1xf32>
    %112 = vector.shape_cast %111 : vector<2x1xf32> to vector<2x1x1xf32>
    %113 = vector.broadcast %112 : vector<2x1x1xf32> to vector<2x1x8xf32>
    %114 = arith.subf %110, %113 : vector<2x1x8xf32>
    %115 = math.exp %114 : vector<2x1x8xf32>
    %cst_56 = arith.constant dense<0.000000e+00> : vector<2x1xf32>
    %116 = vector.multi_reduction <add>, %115, %cst_56 [2] : vector<2x1x8xf32> to vector<2x1xf32>
    %117 = vector.shape_cast %116 : vector<2x1xf32> to vector<2x1x1xf32>
    %cst_57 = arith.constant 9.99999971E-10 : f32
    %118 = vector.broadcast %cst_57 : f32 to vector<2x1x1xf32>
    %119 = arith.addf %117, %118 : vector<2x1x1xf32>
    %120 = vector.broadcast %119 : vector<2x1x1xf32> to vector<2x1x8xf32>
    %121 = arith.divf %115, %120 : vector<2x1x8xf32>
    %cst_58 = arith.constant dense<0.000000e+00> : vector<2x1x32xf32>
    %122 = tpu.matmul %121, %107, %cst_58 {dimension_numbers = #tpu.dot_dimension_numbers<[2], [1], [1], [2], [0, 0, 0, 1, 1, 2], [0], [0]>} : vector<2x1x8xf32>, vector<2x8x32xf32>, vector<2x1x32xf32> -> vector<2x1x32xf32>
    %123 = vector.shape_cast %122 : vector<2x1x32xf32> to vector<2x32xf32>
    %cst_59 = arith.constant dense<0.000000e+00> : vector<2x32xf32>
    %124 = tpu.matmul %123, %3, %cst_59 {dimension_numbers = #tpu.dot_dimension_numbers<[1], [0], [0], [1], [0, 0, 1, 1], [], []>} : vector<2x32xf32>, vector<32x32xf32>, vector<2x32xf32> -> vector<2x32xf32>
    %125 = vector.broadcast %11 : vector<1x32xf32> to vector<2x32xf32>
    %126 = arith.addf %124, %125 : vector<2x32xf32>
    %cst_60 = arith.constant 0.000000e+00 : f32
    %127 = vector.broadcast %cst_60 : f32 to vector<2x32xf32>
    %128 = arith.maximumf %126, %127 : vector<2x32xf32>
    %129 = arith.addf %65, %128 : vector<2x32xf32>
    %130 = vector.extract_strided_slice %46 {offsets = [0, 32], sizes = [2, 32], strides = [1, 1]} : vector<2x64xf32> to vector<2x32xf32>
    %131 = vector.shape_cast %130 : vector<2x32xf32> to vector<2x1x32xf32>
    %cst_61 = arith.constant dense<0.000000e+00> : vector<2x1x8xf32>
    %132 = tpu.matmul %131, %20, %cst_61 {dimension_numbers = #tpu.dot_dimension_numbers<[2], [2], [1], [1], [0, 0, 0, 1, 1, 1], [0], [0]>} : vector<2x1x32xf32>, vector<2x8x32xf32>, vector<2x1x8xf32> -> vector<2x1x8xf32>
    %cst_62 = arith.constant 0.176776692 : f32
    %133 = vector.broadcast %cst_62 : f32 to vector<2x1x8xf32>
    %134 = arith.mulf %132, %133 : vector<2x1x8xf32>
    %cst_63 = arith.constant 0.000000e+00 : f32
    %135 = vector.broadcast %cst_63 : f32 to vector<2x1x8xf32>
    %136 = arith.cmpf ogt, %14, %135 : vector<2x1x8xf32>
    %cst_64 = arith.constant -1.000000e+30 : f32
    %137 = vector.broadcast %cst_64 : f32 to vector<2x1x8xf32>
    %138 = arith.select %136, %134, %137 : vector<2x1x8xi1>, vector<2x1x8xf32>
    %cst_65 = arith.constant dense<0xFF800000> : vector<2x1xf32>
    %139 = vector.multi_reduction <maximumf>, %138, %cst_65 [2] : vector<2x1x8xf32> to vector<2x1xf32>
    %140 = vector.shape_cast %139 : vector<2x1xf32> to vector<2x1x1xf32>
    %141 = vector.broadcast %140 : vector<2x1x1xf32> to vector<2x1x8xf32>
    %142 = arith.subf %138, %141 : vector<2x1x8xf32>
    %143 = math.exp %142 : vector<2x1x8xf32>
    %cst_66 = arith.constant dense<0.000000e+00> : vector<2x1xf32>
    %144 = vector.multi_reduction <add>, %143, %cst_66 [2] : vector<2x1x8xf32> to vector<2x1xf32>
    %145 = vector.shape_cast %144 : vector<2x1xf32> to vector<2x1x1xf32>
    %cst_67 = arith.constant 9.99999971E-10 : f32
    %146 = vector.broadcast %cst_67 : f32 to vector<2x1x1xf32>
    %147 = arith.addf %145, %146 : vector<2x1x1xf32>
    %148 = vector.broadcast %147 : vector<2x1x1xf32> to vector<2x1x8xf32>
    %149 = arith.divf %143, %148 : vector<2x1x8xf32>
    %cst_68 = arith.constant dense<0.000000e+00> : vector<2x1x32xf32>
    %150 = tpu.matmul %149, %20, %cst_68 {dimension_numbers = #tpu.dot_dimension_numbers<[2], [1], [1], [2], [0, 0, 0, 1, 1, 2], [0], [0]>} : vector<2x1x8xf32>, vector<2x8x32xf32>, vector<2x1x32xf32> -> vector<2x1x32xf32>
    %151 = vector.broadcast %150 : vector<2x1x32xf32> to vector<2x8x32xf32>
    %152 = arith.mulf %52, %151 : vector<2x8x32xf32>
    %cst_69 = arith.constant dense<0.000000e+00> : vector<2x8x8xf32>
    %153 = tpu.matmul %152, %54, %cst_69 {dimension_numbers = #tpu.dot_dimension_numbers<[2], [2], [1], [1], [0, 0, 0, 1, 1, 1], [0], [0]>} : vector<2x8x32xf32>, vector<2x8x32xf32>, vector<2x8x8xf32> -> vector<2x8x8xf32>
    %cst_70 = arith.constant 0.176776692 : f32
    %154 = vector.broadcast %cst_70 : f32 to vector<2x8x8xf32>
    %155 = arith.mulf %153, %154 : vector<2x8x8xf32>
    %156 = arith.addf %155, %59 : vector<2x8x8xf32>
    %cst_71 = arith.constant dense<0xFF800000> : vector<2x8xf32>
    %157 = vector.multi_reduction <maximumf>, %156, %cst_71 [2] : vector<2x8x8xf32> to vector<2x8xf32>
    %158 = vector.shape_cast %157 : vector<2x8xf32> to vector<2x8x1xf32>
    %159 = vector.broadcast %158 : vector<2x8x1xf32> to vector<2x8x8xf32>
    %160 = arith.subf %156, %159 : vector<2x8x8xf32>
    %161 = math.exp %160 : vector<2x8x8xf32>
    %cst_72 = arith.constant dense<0.000000e+00> : vector<2x8xf32>
    %162 = vector.multi_reduction <add>, %161, %cst_72 [2] : vector<2x8x8xf32> to vector<2x8xf32>
    %163 = vector.shape_cast %162 : vector<2x8xf32> to vector<2x8x1xf32>
    %cst_73 = arith.constant 9.99999971E-10 : f32
    %164 = vector.broadcast %cst_73 : f32 to vector<2x8x1xf32>
    %165 = arith.addf %163, %164 : vector<2x8x1xf32>
    %166 = vector.broadcast %165 : vector<2x8x1xf32> to vector<2x8x8xf32>
    %167 = arith.divf %161, %166 : vector<2x8x8xf32>
    %cst_74 = arith.constant dense<0.000000e+00> : vector<2x8x32xf32>
    %168 = tpu.matmul %167, %56, %cst_74 {dimension_numbers = #tpu.dot_dimension_numbers<[2], [1], [1], [2], [0, 0, 0, 1, 1, 2], [0], [0]>} : vector<2x8x8xf32>, vector<2x8x32xf32>, vector<2x8x32xf32> -> vector<2x8x32xf32>
    %169 = arith.addf %168, %56 : vector<2x8x32xf32>
    %cst_75 = arith.constant 0.000000e+00 : f32
    %170 = vector.broadcast %cst_75 : f32 to vector<2x8x32xf32>
    %171 = arith.maximumf %169, %170 : vector<2x8x32xf32>
    %cst_76 = arith.constant dense<0.000000e+00> : vector<2x1x8xf32>
    %172 = tpu.matmul %42, %171, %cst_76 {dimension_numbers = #tpu.dot_dimension_numbers<[2], [2], [1], [1], [0, 0, 0, 1, 1, 1], [0], [0]>} : vector<2x1x32xf32>, vector<2x8x32xf32>, vector<2x1x8xf32> -> vector<2x1x8xf32>
    %cst_77 = arith.constant 0.176776692 : f32
    %173 = vector.broadcast %cst_77 : f32 to vector<2x1x8xf32>
    %174 = arith.mulf %172, %173 : vector<2x1x8xf32>
    %cst_78 = arith.constant dense<0xFF800000> : vector<2x1xf32>
    %175 = vector.multi_reduction <maximumf>, %174, %cst_78 [2] : vector<2x1x8xf32> to vector<2x1xf32>
    %176 = vector.shape_cast %175 : vector<2x1xf32> to vector<2x1x1xf32>
    %177 = vector.broadcast %176 : vector<2x1x1xf32> to vector<2x1x8xf32>
    %178 = arith.subf %174, %177 : vector<2x1x8xf32>
    %179 = math.exp %178 : vector<2x1x8xf32>
    %cst_79 = arith.constant dense<0.000000e+00> : vector<2x1xf32>
    %180 = vector.multi_reduction <add>, %179, %cst_79 [2] : vector<2x1x8xf32> to vector<2x1xf32>
    %181 = vector.shape_cast %180 : vector<2x1xf32> to vector<2x1x1xf32>
    %cst_80 = arith.constant 9.99999971E-10 : f32
    %182 = vector.broadcast %cst_80 : f32 to vector<2x1x1xf32>
    %183 = arith.addf %181, %182 : vector<2x1x1xf32>
    %184 = vector.broadcast %183 : vector<2x1x1xf32> to vector<2x1x8xf32>
    %185 = arith.divf %179, %184 : vector<2x1x8xf32>
    %cst_81 = arith.constant dense<0.000000e+00> : vector<2x1x32xf32>
    %186 = tpu.matmul %185, %171, %cst_81 {dimension_numbers = #tpu.dot_dimension_numbers<[2], [1], [1], [2], [0, 0, 0, 1, 1, 2], [0], [0]>} : vector<2x1x8xf32>, vector<2x8x32xf32>, vector<2x1x32xf32> -> vector<2x1x32xf32>
    %187 = vector.shape_cast %186 : vector<2x1x32xf32> to vector<2x32xf32>
    %cst_82 = arith.constant dense<0.000000e+00> : vector<2x32xf32>
    %188 = tpu.matmul %187, %3, %cst_82 {dimension_numbers = #tpu.dot_dimension_numbers<[1], [0], [0], [1], [0, 0, 1, 1], [], []>} : vector<2x32xf32>, vector<32x32xf32>, vector<2x32xf32> -> vector<2x32xf32>
    %189 = vector.broadcast %11 : vector<1x32xf32> to vector<2x32xf32>
    %190 = arith.addf %188, %189 : vector<2x32xf32>
    %cst_83 = arith.constant 0.000000e+00 : f32
    %191 = vector.broadcast %cst_83 : f32 to vector<2x32xf32>
    %192 = arith.maximumf %190, %191 : vector<2x32xf32>
    %193 = arith.addf %129, %192 : vector<2x32xf32>
    %cst_84 = arith.constant 5.000000e-01 : f32
    %194 = vector.broadcast %cst_84 : f32 to vector<2x32xf32>
    %195 = arith.mulf %193, %194 : vector<2x32xf32>
    %196 = arith.mulf %195, %64 : vector<2x32xf32>
    %cst_85 = arith.constant dense<0.000000e+00> : vector<2x128xf32>
    %197 = tpu.matmul %196, %5, %cst_85 {dimension_numbers = #tpu.dot_dimension_numbers<[1], [0], [0], [1], [0, 0, 1, 1], [], []>} : vector<2x32xf32>, vector<32x128xf32>, vector<2x128xf32> -> vector<2x128xf32>
    %198 = vector.broadcast %13 : vector<1x128xf32> to vector<2x128xf32>
    %199 = arith.addf %197, %198 : vector<2x128xf32>
    %200 = vector.shape_cast %185 : vector<2x1x8xf32> to vector<2x8xf32>
    %cst_86 = arith.constant 0.000000e+00 : f32
    %201 = vector.broadcast %cst_86 : f32 to vector<2x120xf32>
    %202 = tpu.concatenate %200, %201 in 1 : vector<2x8xf32>, vector<2x120xf32> -> vector<2x128xf32>
    %203 = vector.shape_cast %199 : vector<2x128xf32> to vector<2x1x128xf32>
    %204 = vector.shape_cast %202 : vector<2x128xf32> to vector<2x1x128xf32>
    %205 = tpu.concatenate %203, %204 in 1 : vector<2x1x128xf32>, vector<2x1x128xf32> -> vector<2x2x128xf32>
    %c0_87 = arith.constant 0 : index
    %c0_88 = arith.constant 0 : index
    %c0_89 = arith.constant 0 : index
    %206 = vector.load %arg7[%c0_87, %c0_88, %c0_89] : memref<2x2x128xf32, #tpu.memory_space<vmem>>, vector<2x2x128xf32>
    tpu.vector_store %arg7[%c0_87, %c0_88, %c0_89], %205 {strides = array<i32>} : memref<2x2x128xf32, #tpu.memory_space<vmem>>, vector<2x2x128xf32>,
    return
  }
  func.func @transform_0(%arg0: i32) -> (i32, i32) {
    %c0_i32 = arith.constant 0 : i32
    %c0_i32_0 = arith.constant 0 : i32
    %c0_i32_1 = arith.constant 0 : i32
    return %c0_i32, %c0_i32_0 : i32, i32
  }
  func.func @transform_1(%arg0: i32) -> (i32, i32, i32) {
    %c0_i32 = arith.constant 0 : i32
    %c0_i32_0 = arith.constant 0 : i32
    %c0_i32_1 = arith.constant 0 : i32
    %c0_i32_2 = arith.constant 0 : i32
    return %c0_i32, %c0_i32_0, %c0_i32_1 : i32, i32, i32
  }
  func.func @transform_2(%arg0: i32) -> (i32, i32) {
    %c0_i32 = arith.constant 0 : i32
    %c0_i32_0 = arith.constant 0 : i32
    %c0_i32_1 = arith.constant 0 : i32
    return %c0_i32, %c0_i32_0 : i32, i32
  }
  func.func @transform_3(%arg0: i32) -> (i32, i32) {
    %c0_i32 = arith.constant 0 : i32
    %c0_i32_0 = arith.constant 0 : i32
    %c0_i32_1 = arith.constant 0 : i32
    return %c0_i32, %c0_i32_0 : i32, i32
  }
  func.func @transform_4(%arg0: i32) -> (i32, i32) {
    %c0_i32 = arith.constant 0 : i32
    %c0_i32_0 = arith.constant 0 : i32
    %c0_i32_1 = arith.constant 0 : i32
    return %c0_i32, %c0_i32_0 : i32, i32
  }
  func.func @transform_5(%arg0: i32) -> (i32, i32) {
    %c0_i32 = arith.constant 0 : i32
    %c0_i32_0 = arith.constant 0 : i32
    %c0_i32_1 = arith.constant 0 : i32
    return %c0_i32, %c0_i32_0 : i32, i32
  }
  func.func @transform_6(%arg0: i32) -> (i32, i32, i32) {
    %c0_i32 = arith.constant 0 : i32
    %c0_i32_0 = arith.constant 0 : i32
    %c0_i32_1 = arith.constant 0 : i32
    %c0_i32_2 = arith.constant 0 : i32
    return %c0_i32, %c0_i32_0, %c0_i32_1 : i32, i32, i32
  }
}

</mosaic_0001>

<llo_original>
// kernel: regat_forward.1
$region0: #{regat_forward.1}
  #allocation0 [shape = 'u32[]', space=smem, size = 0x4, offset = 0x4, fixed_abs, tag = 'smem constant byte address 0x4 - core index']
  #allocation1 [shape = 'u32[144,128]{1,0:T(1,128)}', space=vmem, size = 0x12000, scoped, tag = 'internal scratch']
  %s0 = inlined_call_operand.vmem [shape: f32[16,16], index: 0, kind: input, shape index: {}]
  %s1 = inlined_call_operand.vmem [shape: f32[2,1,8], index: 1, kind: input, shape index: {}]
  %s2 = inlined_call_operand.vmem [shape: f32[16,32], index: 2, kind: input, shape index: {}]
  %s3 = inlined_call_operand.vmem [shape: f32[16,128], index: 3, kind: input, shape index: {}]
  %s4 = inlined_call_operand.vmem [shape: f32[272,128], index: 4, kind: input, shape index: {}]
  %s5 = inlined_call_operand.vmem [shape: f32[8,128], index: 5, kind: input, shape index: {}]
  %s6 = inlined_call_operand.vmem [shape: f32[2,2,128], index: 6, kind: output, shape index: {}]
  %s7 = sld [smem:[#allocation0]]
  $region34: #{regat_forward.1} parent=0
    _
  %s9 = ssub.s32 1, %s7
  %s10 = scalar_select 0, %s9, %s7
  // Predicated region
  $region2: #{regat_forward.1} parent=0 // pred_check
    _
  $region3: #{regat_forward.1} parent=0 // pred_check_branch
    %12 = sbr.rel (0) target = $region5
  $region4: #{regat_forward.1} parent=0 // pred_region
    _
  $region5: #{regat_forward.1} parent=0 // pred_fallthru
    _
  // Predicated region
  $region6: #{regat_forward.1} parent=0 // pred_check
    _
  $region7: #{regat_forward.1} parent=0 // pred_check_branch
    %14 = sbr.rel (0) target = $region9
  $region8: #{regat_forward.1} parent=0 // pred_region
    _
  $region9: #{regat_forward.1} parent=0 // pred_fallthru
    _
  // Predicated region
  $region10: #{regat_forward.1} parent=0 // pred_check
    _
  $region11: #{regat_forward.1} parent=0 // pred_check_branch
    %16 = sbr.rel (0) target = $region13
  $region12: #{regat_forward.1} parent=0 // pred_region
    _
  $region13: #{regat_forward.1} parent=0 // pred_fallthru
    _
  // Predicated region
  $region14: #{regat_forward.1} parent=0 // pred_check
    _
  $region15: #{regat_forward.1} parent=0 // pred_check_branch
    %18 = sbr.rel (0) target = $region17
  $region16: #{regat_forward.1} parent=0 // pred_region
    _
  $region17: #{regat_forward.1} parent=0 // pred_fallthru
    _
  // Predicated region
  $region18: #{regat_forward.1} parent=0 // pred_check
    _
  $region19: #{regat_forward.1} parent=0 // pred_check_branch
    %20 = sbr.rel (0) target = $region21
  $region20: #{regat_forward.1} parent=0 // pred_region
    _
  $region21: #{regat_forward.1} parent=0 // pred_fallthru
    _
  // Predicated region
  $region22: #{regat_forward.1} parent=0 // pred_check
    _
  $region23: #{regat_forward.1} parent=0 // pred_check_branch
    %22 = sbr.rel (0) target = $region25
  $region24: #{regat_forward.1} parent=0 // pred_region
    _
  $region25: #{regat_forward.1} parent=0 // pred_fallthru
    _
  %v23 = vld [vmem:[%s4] sm:$0xff]
  %v24 = vld [vmem:[%s4 + $0x8] sm:$0xff]
  %v25 = vld [vmem:[%s4 + $0x10] sm:$0xff]
  %v26 = vld [vmem:[%s4 + $0x18] sm:$0xff]
  %v27 = vld [vmem:[%s4 + $0x20] sm:$0xff]
  %v28 = vld [vmem:[%s4 + $0x28] sm:$0xff]
  %v29 = vld [vmem:[%s4 + $0x30] sm:$0xff]
  %v30 = vld [vmem:[%s4 + $0x38] sm:$0xff]
  %v31 = vld [vmem:[%s4 + $0x40] sm:$0xff]
  %v32 = vld [vmem:[%s4 + $0x48] sm:$0xff]
  %v33 = vld [vmem:[%s4 + $0x50] sm:$0xff]
  %v34 = vld [vmem:[%s4 + $0x58] sm:$0xff]
  %v35 = vld [vmem:[%s4 + $0x60] sm:$0xff]
  %v36 = vld [vmem:[%s4 + $0x68] sm:$0xff]
  %v37 = vld [vmem:[%s4 + $0x70] sm:$0xff]
  %v38 = vld [vmem:[%s4 + $0x78] sm:$0xff]
  %v39 = vld [vmem:[%s4 + $0x80] sm:$0xff]
  %v40 = vld [vmem:[%s4 + $0x88] sm:$0xff]
  %v41 = vld [vmem:[%s4 + $0x90] sm:$0xff]
  %v42 = vld [vmem:[%s4 + $0x98] sm:$0xff]
  %v43 = vld [vmem:[%s4 + $0xa0] sm:$0xff]
  %v44 = vld [vmem:[%s4 + $0xa8] sm:$0xff]
  %v45 = vld [vmem:[%s4 + $0xb0] sm:$0xff]
  %v46 = vld [vmem:[%s4 + $0xb8] sm:$0xff]
  %v47 = vld [vmem:[%s4 + $0xc0] sm:$0xff]
  %v48 = vld [vmem:[%s4 + $0xc8] sm:$0xff]
  %v49 = vld [vmem:[%s4 + $0xd0] sm:$0xff]
  %v50 = vld [vmem:[%s4 + $0xd8] sm:$0xff]
  %v51 = vld [vmem:[%s4 + $0xe0] sm:$0xff]
  %v52 = vld [vmem:[%s4 + $0xe8] sm:$0xff]
  %v53 = vld [vmem:[%s4 + $0xf0] sm:$0xff]
  %v54 = vld [vmem:[%s4 + $0xf8] sm:$0xff]
  %v55 = vld [vmem:[%s4 + $0x100] sm:$0xff]
  %v56 = vld [vmem:[%s4 + $0x108] sm:$0xff]
  %v57 = vld [vmem:[%s5] sm:$0x1]
  %v58 = vld [vmem:[%s5 + $0x1] sm:$0x1]
  %v59 = vld [vmem:[%s5 + $0x2] sm:$0x1]
  %v60 = vld [vmem:[%s5 + $0x3] sm:$0x1]
  %v61 = vld [vmem:[%s5 + $0x4] sm:$0x1]
  %v62 = vld [vmem:[%s5 + $0x5] sm:$0x1]
  %v63 = vld [vmem:[%s5 + $0x6] sm:$0x1]
  %v64 = vld [vmem:[%s1] sm:$0x1]
  %v65 = vld [vmem:[%s1 + $0x1] sm:$0x1]
  %v66 = vld [vmem:[%s0] sm:$0xff]
  %v67 = vld [vmem:[%s0 + $0x8] sm:$0xff]
  %v68 = vlaneseq
  %v69 = vshrl.u32 %v68, 7
  %v70 = vsub.s32 0, %v69
  %v71 = vrot.slane %v57, %v70
  %vm72 = vcmask 130048
  %v74 = vsel %vm72, %v66, 0
  %v77 = vsel %vm72, %v67, 0
  %79 = vmatprep.subr.mxu0 0.0
  %80 = vmatpush1.msra.mxu0 %v23
  %81 = vmatprep.subr.mxu0 0.0
  %82 = vmatpush1.msra.mxu0 %v24
  %83 = vmatprep.subr.mxu0 0.0
  %84 = vmatpush1.msra.mxu0 0.0
  %85 = vmatprep.subr.mxu0 0.0
  %86 = vmatpush1.msra.mxu0 0.0
  %87 = vmatprep.subr.mxu0 0.0
  %88 = vmatpush1.msra.mxu0 0.0
  %89 = vmatprep.subr.mxu0 0.0
  %90 = vmatpush1.msra.mxu0 0.0
  %91 = vmatprep.subr.mxu0 0.0
  %92 = vmatpush1.msra.mxu0 0.0
  %93 = vmatprep.subr.mxu0 0.0
  %94 = vmatpush1.msra.mxu0 0.0
  %95 = vmatprep.subr.mxu0 0.0
  %96 = vmatpush1.msra.mxu0 0.0
  %97 = vmatprep.subr.mxu0 0.0
  %98 = vmatpush1.msra.mxu0 0.0
  %99 = vmatprep.subr.mxu0 0.0
  %100 = vmatpush1.msra.mxu0 0.0
  %101 = vmatprep.subr.mxu0 0.0
  %102 = vmatpush1.msra.mxu0 0.0
  %103 = vmatprep.subr.mxu0 0.0
  %104 = vmatpush1.msra.mxu0 0.0
  %105 = vmatprep.subr.mxu0 0.0
  %106 = vmatpush1.msra.mxu0 0.0
  %107 = vmatprep.subr.mxu0 0.0
  %108 = vmatpush1.msra.mxu0 0.0
  %109 = vmatprep.subr.mxu0 0.0
  %110 = vmatpush1.msra.mxu0 0.0
  %111 = vmatprep.subr.mxu0 0.0
  %112 = vmatpush1.msra.mxu0 0.0
  %113 = vmatprep.subr.mxu0 0.0
  %114 = vmatpush1.msra.mxu0 0.0
  %115 = vmatprep.subr.mxu0 0.0
  %116 = vmatpush1.msra.mxu0 0.0
  %117 = vmatprep.subr.mxu0 0.0
  %118 = vmatpush1.msra.mxu0 0.0
  %119 = vmatprep.subr.mxu0 0.0
  %120 = vmatpush1.msra.mxu0 0.0
  %121 = vmatprep.subr.mxu0 0.0
  %122 = vmatpush1.msra.mxu0 0.0
  %123 = vmatprep.subr.mxu0 0.0
  %124 = vmatpush1.msra.mxu0 0.0
  %125 = vmatprep.subr.mxu0 0.0
  %126 = vmatpush1.msra.mxu0 0.0
  %127 = vmatprep.subr.mxu0 0.0
  %128 = vmatpush1.msra.mxu0 0.0
  %129 = vmatprep.subr.mxu0 0.0
  %130 = vmatpush1.msra.mxu0 0.0
  %131 = vmatprep.subr.mxu0 0.0
  %132 = vmatpush1.msra.mxu0 0.0
  %133 = vmatprep.subr.mxu0 0.0
  %134 = vmatpush1.msra.mxu0 0.0
  %135 = vmatprep.subr.mxu0 0.0
  %136 = vmatpush1.msra.mxu0 0.0
  %137 = vmatprep.subr.mxu0 0.0
  %138 = vmatpush1.msra.mxu0 0.0
  %139 = vmatprep.subr.mxu0 0.0
  %140 = vmatpush1.msra.mxu0 0.0
  %141 = vmatprep.subr.mxu0 0.0
  %142 = vmatpush1.msra.mxu0 0.0
  %143 = vmatprep.mubr.f32.mxu0 0.0
  %144 = vmatmul.mubr.f32.gmra.mrb[0].mxu0 %v74
  %v145 = vpop.f32.mrb[0].mxu0
  %v146 = vadd.f32 %v71, %v145
  %v147 = vpop.f32.mrb[0].mxu0
  %148 = vmatprep.mubr.f32.mxu0 0.0
  %149 = vmatmul.mubr.f32.gmra.mrb[0].mxu0 %v77
  %v150 = vpop.f32.mrb[0].mxu0
  %v151 = vadd.f32 %v71, %v150
  %v152 = vpop.f32.mrb[0].mxu0
  %153 = vdwg.mxu0
  %v154 = vtanh.pop %v146
  %v155 = vtanh.pop %v151
  %vm156 = vcmask 261120
  %v158 = vsel %vm156, %v58, 0
  %v161 = vsel %vm156, %v154, 0
  %163 = vmatprep.subr.mxu0 0.0
  %164 = vmatpush1.xpose.msra.mxu0 %v161
  %165 = vmatprep.subr.mxu0 0.0
  %166 = vmatpush1.xpose.msra.mxu0 0.0
  %167 = vmatprep.subr.mxu0 0.0
  %168 = vmatpush1.xpose.msra.mxu0 0.0
  %169 = vmatprep.subr.mxu0 0.0
  %170 = vmatpush1.xpose.msra.mxu0 0.0
  %171 = vmatprep.subr.mxu0 0.0
  %172 = vmatpush1.xpose.msra.mxu0 0.0
  %173 = vmatprep.subr.mxu0 0.0
  %174 = vmatpush1.xpose.msra.mxu0 0.0
  %175 = vmatprep.subr.mxu0 0.0
  %176 = vmatpush1.xpose.msra.mxu0 0.0
  %177 = vmatprep.subr.mxu0 0.0
  %178 = vmatpush1.xpose.msra.mxu0 0.0
  %179 = vmatprep.subr.mxu0 0.0
  %180 = vmatpush1.xpose.msra.mxu0 0.0
  %181 = vmatprep.subr.mxu0 0.0
  %182 = vmatpush1.xpose.msra.mxu0 0.0
  %183 = vmatprep.subr.mxu0 0.0
  %184 = vmatpush1.xpose.msra.mxu0 0.0
  %185 = vmatprep.subr.mxu0 0.0
  %186 = vmatpush1.xpose.msra.mxu0 0.0
  %187 = vmatprep.subr.mxu0 0.0
  %188 = vmatpush1.xpose.msra.mxu0 0.0
  %189 = vmatprep.subr.mxu0 0.0
  %190 = vmatpush1.xpose.msra.mxu0 0.0
  %191 = vmatprep.subr.mxu0 0.0
  %192 = vmatpush1.xpose.msra.mxu0 0.0
  %193 = vmatprep.subr.mxu0 0.0
  %194 = vmatpush1.xpose.msra.mxu0 0.0
  %195 = vmatprep.subr.mxu0 0.0
  %196 = vmatpush1.xpose.msra.mxu0 0.0
  %197 = vmatprep.subr.mxu0 0.0
  %198 = vmatpush1.xpose.msra.mxu0 0.0
  %199 = vmatprep.subr.mxu0 0.0
  %200 = vmatpush1.xpose.msra.mxu0 0.0
  %201 = vmatprep.subr.mxu0 0.0
  %202 = vmatpush1.xpose.msra.mxu0 0.0
  %203 = vmatprep.subr.mxu0 0.0
  %204 = vmatpush1.xpose.msra.mxu0 0.0
  %205 = vmatprep.subr.mxu0 0.0
  %206 = vmatpush1.xpose.msra.mxu0 0.0
  %207 = vmatprep.subr.mxu0 0.0
  %208 = vmatpush1.xpose.msra.mxu0 0.0
  %209 = vmatprep.subr.mxu0 0.0
  %210 = vmatpush1.xpose.msra.mxu0 0.0
  %211 = vmatprep.subr.mxu0 0.0
  %212 = vmatpush1.xpose.msra.mxu0 0.0
  %213 = vmatprep.subr.mxu0 0.0
  %214 = vmatpush1.xpose.msra.mxu0 0.0
  %215 = vmatprep.subr.mxu0 0.0
  %216 = vmatpush1.xpose.msra.mxu0 0.0
  %217 = vmatprep.subr.mxu0 0.0
  %218 = vmatpush1.xpose.msra.mxu0 0.0
  %219 = vmatprep.subr.mxu0 0.0
  %220 = vmatpush1.xpose.msra.mxu0 0.0
  %221 = vmatprep.subr.mxu0 0.0
  %222 = vmatpush1.xpose.msra.mxu0 0.0
  %223 = vmatprep.subr.mxu0 0.0
  %224 = vmatpush1.xpose.msra.mxu0 0.0
  %225 = vmatprep.subr.mxu0 0.0
  %226 = vmatpush1.xpose.msra.mxu0 0.0
  %227 = vmatprep.mubr.f32.mxu0 0.0
  %228 = vmatmul.mubr.f32.gmra.mrb[0].mxu0 %v158
  %v229 = vpop.f32.mrb[0].mxu0
  %v230 = vadd.f32 0.0, %v229
  %v231 = vpop.f32.mrb[0].mxu0
  %232 = vdwg.mxu0
  %v234 = vsel %vm156, %v155, 0
  %236 = vmatprep.subr.mxu0 0.0
  %237 = vmatpush1.xpose.msra.mxu0 %v234
  %238 = vmatprep.subr.mxu0 0.0
  %239 = vmatpush1.xpose.msra.mxu0 0.0
  %240 = vmatprep.subr.mxu0 0.0
  %241 = vmatpush1.xpose.msra.mxu0 0.0
  %242 = vmatprep.subr.mxu0 0.0
  %243 = vmatpush1.xpose.msra.mxu0 0.0
  %244 = vmatprep.subr.mxu0 0.0
  %245 = vmatpush1.xpose.msra.mxu0 0.0
  %246 = vmatprep.subr.mxu0 0.0
  %247 = vmatpush1.xpose.msra.mxu0 0.0
  %248 = vmatprep.subr.mxu0 0.0
  %249 = vmatpush1.xpose.msra.mxu0 0.0
  %250 = vmatprep.subr.mxu0 0.0
  %251 = vmatpush1.xpose.msra.mxu0 0.0
  %252 = vmatprep.subr.mxu0 0.0
  %253 = vmatpush1.xpose.msra.mxu0 0.0
  %254 = vmatprep.subr.mxu0 0.0
  %255 = vmatpush1.xpose.msra.mxu0 0.0
  %256 = vmatprep.subr.mxu0 0.0
  %257 = vmatpush1.xpose.msra.mxu0 0.0
  %258 = vmatprep.subr.mxu0 0.0
  %259 = vmatpush1.xpose.msra.mxu0 0.0
  %260 = vmatprep.subr.mxu0 0.0
  %261 = vmatpush1.xpose.msra.mxu0 0.0
  %262 = vmatprep.subr.mxu0 0.0
  %263 = vmatpush1.xpose.msra.mxu0 0.0
  %264 = vmatprep.subr.mxu0 0.0
  %265 = vmatpush1.xpose.msra.mxu0 0.0
  %266 = vmatprep.subr.mxu0 0.0
  %267 = vmatpush1.xpose.msra.mxu0 0.0
  %268 = vmatprep.subr.mxu0 0.0
  %269 = vmatpush1.xpose.msra.mxu0 0.0
  %270 = vmatprep.subr.mxu0 0.0
  %271 = vmatpush1.xpose.msra.mxu0 0.0
  %272 = vmatprep.subr.mxu0 0.0
  %273 = vmatpush1.xpose.msra.mxu0 0.0
  %274 = vmatprep.subr.mxu0 0.0
  %275 = vmatpush1.xpose.msra.mxu0 0.0
  %276 = vmatprep.subr.mxu0 0.0
  %277 = vmatpush1.xpose.msra.mxu0 0.0
  %278 = vmatprep.subr.mxu0 0.0
  %279 = vmatpush1.xpose.msra.mxu0 0.0
  %280 = vmatprep.subr.mxu0 0.0
  %281 = vmatpush1.xpose.msra.mxu0 0.0
  %282 = vmatprep.subr.mxu0 0.0
  %283 = vmatpush1.xpose.msra.mxu0 0.0
  %284 = vmatprep.subr.mxu0 0.0
  %285 = vmatpush1.xpose.msra.mxu0 0.0
  %286 = vmatprep.subr.mxu0 0.0
  %287 = vmatpush1.xpose.msra.mxu0 0.0
  %288 = vmatprep.subr.mxu0 0.0
  %289 = vmatpush1.xpose.msra.mxu0 0.0
  %290 = vmatprep.subr.mxu0 0.0
  %291 = vmatpush1.xpose.msra.mxu0 0.0
  %292 = vmatprep.subr.mxu0 0.0
  %293 = vmatpush1.xpose.msra.mxu0 0.0
  %294 = vmatprep.subr.mxu0 0.0
  %295 = vmatpush1.xpose.msra.mxu0 0.0
  %296 = vmatprep.subr.mxu0 0.0
  %297 = vmatpush1.xpose.msra.mxu0 0.0
  %298 = vmatprep.subr.mxu0 0.0
  %299 = vmatpush1.xpose.msra.mxu0 0.0
  %300 = vmatprep.mubr.f32.mxu0 0.0
  %301 = vmatmul.mubr.f32.gmra.mrb[0].mxu0 %v158
  %v302 = vpop.f32.mrb[0].mxu0
  %v303 = vadd.f32 0.0, %v302
  %v304 = vpop.f32.mrb[0].mxu0
  %305 = vdwg.mxu0
  %v306 = vmul.f32 %v230, 0.17677669
  %v307 = vmul.f32 %v303, 0.17677669
  %vm308 = vcmp.gt.f32.partialorder %v64, 0.0
  %vm309 = vcmp.gt.f32.partialorder %v65, 0.0
  %v310 = vsel %vm308, %v306, -1e+30
  %v311 = vsel %vm309, %v307, -1e+30
  %vm312 = vcmask 57344
  %v313 = vsel %vm312, %v310, -inf
  %314 = vmax.xlane.f32.xlu0 %v313
  %v315 = vpop.xlane.xlu0 %314
  %v316 = vsel %vm312, %v311, -inf
  %317 = vmax.xlane.f32.xlu0 %v316
  %v318 = vpop.xlane.xlu0 %317
  %v319 = vsub.f32 %v310, %v315
  %v320 = vsub.f32 %v311, %v318
  %v321 = vmul.f32 %v319, 1.442695
  %v322 = vpow.pop %v321
  %v323 = vmul.f32 %v320, 1.442695
  %v324 = vpow.pop %v323
  %v325 = vsel %vm312, %v322, 0.0
  %326 = vadd.xlane.f32.xlu0 %v325
  %v327 = vpop.xlane.xlu0 %326
  %v328 = vsel %vm312, %v324, 0.0
  %329 = vadd.xlane.f32.xlu0 %v328
  %v330 = vpop.xlane.xlu0 %329
  %v331 = vadd.f32 %v327, 1e-09
  %v332 = vadd.f32 %v330, 1e-09
  %v333 = vrcp.pop %v331
  %v334 = vmul.f32 %v322, %v333
  %v335 = vrcp.pop %v332
  %v336 = vmul.f32 %v324, %v335
  %vm337 = vcmask 64512
  %v339 = vsel %vm337, %v334, 0
  %341 = vmatprep.subr.mxu0 0.0
  %342 = vmatpush1.msra.mxu0 %v154
  %343 = vmatprep.subr.mxu0 0.0
  %344 = vmatpush1.msra.mxu0 0.0
  %345 = vmatprep.subr.mxu0 0.0
  %346 = vmatpush1.msra.mxu0 0.0
  %347 = vmatprep.subr.mxu0 0.0
  %348 = vmatpush1.msra.mxu0 0.0
  %349 = vmatprep.subr.mxu0 0.0
  %350 = vmatpush1.msra.mxu0 0.0
  %351 = vmatprep.subr.mxu0 0.0
  %352 = vmatpush1.msra.mxu0 0.0
  %353 = vmatprep.subr.mxu0 0.0
  %354 = vmatpush1.msra.mxu0 0.0
  %355 = vmatprep.subr.mxu0 0.0
  %356 = vmatpush1.msra.mxu0 0.0
  %357 = vmatprep.subr.mxu0 0.0
  %358 = vmatpush1.msra.mxu0 0.0
  %359 = vmatprep.subr.mxu0 0.0
  %360 = vmatpush1.msra.mxu0 0.0
  %361 = vmatprep.subr.mxu0 0.0
  %362 = vmatpush1.msra.mxu0 0.0
  %363 = vmatprep.subr.mxu0 0.0
  %364 = vmatpush1.msra.mxu0 0.0
  %365 = vmatprep.subr.mxu0 0.0
  %366 = vmatpush1.msra.mxu0 0.0
  %367 = vmatprep.subr.mxu0 0.0
  %368 = vmatpush1.msra.mxu0 0.0
  %369 = vmatprep.subr.mxu0 0.0
  %370 = vmatpush1.msra.mxu0 0.0
  %371 = vmatprep.subr.mxu0 0.0
  %372 = vmatpush1.msra.mxu0 0.0
  %373 = vmatprep.subr.mxu0 0.0
  %374 = vmatpush1.msra.mxu0 0.0
  %375 = vmatprep.subr.mxu0 0.0
  %376 = vmatpush1.msra.mxu0 0.0
  %377 = vmatprep.subr.mxu0 0.0
  %378 = vmatpush1.msra.mxu0 0.0
  %379 = vmatprep.subr.mxu0 0.0
  %380 = vmatpush1.msra.mxu0 0.0
  %381 = vmatprep.subr.mxu0 0.0
  %382 = vmatpush1.msra.mxu0 0.0
  %383 = vmatprep.subr.mxu0 0.0
  %384 = vmatpush1.msra.mxu0 0.0
  %385 = vmatprep.subr.mxu0 0.0
  %386 = vmatpush1.msra.mxu0 0.0
  %387 = vmatprep.subr.mxu0 0.0
  %388 = vmatpush1.msra.mxu0 0.0
  %389 = vmatprep.subr.mxu0 0.0
  %390 = vmatpush1.msra.mxu0 0.0
  %391 = vmatprep.subr.mxu0 0.0
  %392 = vmatpush1.msra.mxu0 0.0
  %393 = vmatprep.subr.mxu0 0.0
  %394 = vmatpush1.msra.mxu0 0.0
  %395 = vmatprep.subr.mxu0 0.0
  %396 = vmatpush1.msra.mxu0 0.0
  %397 = vmatprep.subr.mxu0 0.0
  %398 = vmatpush1.msra.mxu0 0.0
  %399 = vmatprep.subr.mxu0 0.0
  %400 = vmatpush1.msra.mxu0 0.0
  %401 = vmatprep.subr.mxu0 0.0
  %402 = vmatpush1.msra.mxu0 0.0
  %403 = vmatprep.subr.mxu0 0.0
  %404 = vmatpush1.msra.mxu0 0.0
  %405 = vmatprep.mubr.f32.mxu0 0.0
  %406 = vmatmul.mubr.f32.gmra.mrb[0].mxu0 %v339
  %v407 = vpop.f32.mrb[0].mxu0
  %v408 = vadd.f32 0.0, %v407
  %v409 = vpop.f32.mrb[0].mxu0
  %410 = vdwg.mxu0
  %v412 = vsel %vm337, %v336, 0
  %414 = vmatprep.subr.mxu0 0.0
  %415 = vmatpush1.msra.mxu0 %v155
  %416 = vmatprep.subr.mxu0 0.0
  %417 = vmatpush1.msra.mxu0 0.0
  %418 = vmatprep.subr.mxu0 0.0
  %419 = vmatpush1.msra.mxu0 0.0
  %420 = vmatprep.subr.mxu0 0.0
  %421 = vmatpush1.msra.mxu0 0.0
  %422 = vmatprep.subr.mxu0 0.0
  %423 = vmatpush1.msra.mxu0 0.0
  %424 = vmatprep.subr.mxu0 0.0
  %425 = vmatpush1.msra.mxu0 0.0
  %426 = vmatprep.subr.mxu0 0.0
  %427 = vmatpush1.msra.mxu0 0.0
  %428 = vmatprep.subr.mxu0 0.0
  %429 = vmatpush1.msra.mxu0 0.0
  %430 = vmatprep.subr.mxu0 0.0
  %431 = vmatpush1.msra.mxu0 0.0
  %432 = vmatprep.subr.mxu0 0.0
  %433 = vmatpush1.msra.mxu0 0.0
  %434 = vmatprep.subr.mxu0 0.0
  %435 = vmatpush1.msra.mxu0 0.0
  %436 = vmatprep.subr.mxu0 0.0
  %437 = vmatpush1.msra.mxu0 0.0
  %438 = vmatprep.subr.mxu0 0.0
  %439 = vmatpush1.msra.mxu0 0.0
  %440 = vmatprep.subr.mxu0 0.0
  %441 = vmatpush1.msra.mxu0 0.0
  %442 = vmatprep.subr.mxu0 0.0
  %443 = vmatpush1.msra.mxu0 0.0
  %444 = vmatprep.subr.mxu0 0.0
  %445 = vmatpush1.msra.mxu0 0.0
  %446 = vmatprep.subr.mxu0 0.0
  %447 = vmatpush1.msra.mxu0 0.0
  %448 = vmatprep.subr.mxu0 0.0
  %449 = vmatpush1.msra.mxu0 0.0
  %450 = vmatprep.subr.mxu0 0.0
  %451 = vmatpush1.msra.mxu0 0.0
  %452 = vmatprep.subr.mxu0 0.0
  %453 = vmatpush1.msra.mxu0 0.0
  %454 = vmatprep.subr.mxu0 0.0
  %455 = vmatpush1.msra.mxu0 0.0
  %456 = vmatprep.subr.mxu0 0.0
  %457 = vmatpush1.msra.mxu0 0.0
  %458 = vmatprep.subr.mxu0 0.0
  %459 = vmatpush1.msra.mxu0 0.0
  %460 = vmatprep.subr.mxu0 0.0
  %461 = vmatpush1.msra.mxu0 0.0
  %462 = vmatprep.subr.mxu0 0.0
  %463 = vmatpush1.msra.mxu0 0.0
  %464 = vmatprep.subr.mxu0 0.0
  %465 = vmatpush1.msra.mxu0 0.0
  %466 = vmatprep.subr.mxu0 0.0
  %467 = vmatpush1.msra.mxu0 0.0
  %468 = vmatprep.subr.mxu0 0.0
  %469 = vmatpush1.msra.mxu0 0.0
  %470 = vmatprep.subr.mxu0 0.0
  %471 = vmatpush1.msra.mxu0 0.0
  %472 = vmatprep.subr.mxu0 0.0
  %473 = vmatpush1.msra.mxu0 0.0
  %474 = vmatprep.subr.mxu0 0.0
  %475 = vmatpush1.msra.mxu0 0.0
  %476 = vmatprep.subr.mxu0 0.0
  %477 = vmatpush1.msra.mxu0 0.0
  %478 = vmatprep.mubr.f32.mxu0 0.0
  %479 = vmatmul.mubr.f32.gmra.mrb[0].mxu0 %v412
  %v480 = vpop.f32.mrb[0].mxu0
  %v481 = vadd.f32 0.0, %v480
  %v482 = vpop.f32.mrb[0].mxu0
  %483 = vdwg.mxu0
  %v484 = vlaneseq
  %v485 = vshrl.u32 %v484, 7
  %v486 = vsub.s32 0, %v485
  %v487 = vrot.slane %v59, %v486
  %v490 = vrot.slane %v481, 7
  %vm491 = vcmask 1041409
  %v492 = vsel %vm491, %v490, %v408
  %v493 = vsel %vm156, %v492, 0
  %495 = vmatprep.subr.mxu0 0.0
  %496 = vmatpush1.msra.mxu0 %v25
  %497 = vmatprep.subr.mxu0 0.0
  %498 = vmatpush1.msra.mxu0 %v26
  %499 = vmatprep.subr.mxu0 0.0
  %500 = vmatpush1.msra.mxu0 %v27
  %501 = vmatprep.subr.mxu0 0.0
  %502 = vmatpush1.msra.mxu0 %v28
  %503 = vmatprep.subr.mxu0 0.0
  %504 = vmatpush1.msra.mxu0 0.0
  %505 = vmatprep.subr.mxu0 0.0
  %506 = vmatpush1.msra.mxu0 0.0
  %507 = vmatprep.subr.mxu0 0.0
  %508 = vmatpush1.msra.mxu0 0.0
  %509 = vmatprep.subr.mxu0 0.0
  %510 = vmatpush1.msra.mxu0 0.0
  %511 = vmatprep.subr.mxu0 0.0
  %512 = vmatpush1.msra.mxu0 0.0
  %513 = vmatprep.subr.mxu0 0.0
  %514 = vmatpush1.msra.mxu0 0.0
  %515 = vmatprep.subr.mxu0 0.0
  %516 = vmatpush1.msra.mxu0 0.0
  %517 = vmatprep.subr.mxu0 0.0
  %518 = vmatpush1.msra.mxu0 0.0
  %519 = vmatprep.subr.mxu0 0.0
  %520 = vmatpush1.msra.mxu0 0.0
  %521 = vmatprep.subr.mxu0 0.0
  %522 = vmatpush1.msra.mxu0 0.0
  %523 = vmatprep.subr.mxu0 0.0
  %524 = vmatpush1.msra.mxu0 0.0
  %525 = vmatprep.subr.mxu0 0.0
  %526 = vmatpush1.msra.mxu0 0.0
  %527 = vmatprep.subr.mxu0 0.0
  %528 = vmatpush1.msra.mxu0 0.0
  %529 = vmatprep.subr.mxu0 0.0
  %530 = vmatpush1.msra.mxu0 0.0
  %531 = vmatprep.subr.mxu0 0.0
  %532 = vmatpush1.msra.mxu0 0.0
  %533 = vmatprep.subr.mxu0 0.0
  %534 = vmatpush1.msra.mxu0 0.0
  %535 = vmatprep.subr.mxu0 0.0
  %536 = vmatpush1.msra.mxu0 0.0
  %537 = vmatprep.subr.mxu0 0.0
  %538 = vmatpush1.msra.mxu0 0.0
  %539 = vmatprep.subr.mxu0 0.0
  %540 = vmatpush1.msra.mxu0 0.0
  %541 = vmatprep.subr.mxu0 0.0
  %542 = vmatpush1.msra.mxu0 0.0
  %543 = vmatprep.subr.mxu0 0.0
  %544 = vmatpush1.msra.mxu0 0.0
  %545 = vmatprep.subr.mxu0 0.0
  %546 = vmatpush1.msra.mxu0 0.0
  %547 = vmatprep.subr.mxu0 0.0
  %548 = vmatpush1.msra.mxu0 0.0
  %549 = vmatprep.subr.mxu0 0.0
  %550 = vmatpush1.msra.mxu0 0.0
  %551 = vmatprep.subr.mxu0 0.0
  %552 = vmatpush1.msra.mxu0 0.0
  %553 = vmatprep.subr.mxu0 0.0
  %554 = vmatpush1.msra.mxu0 0.0
  %555 = vmatprep.subr.mxu0 0.0
  %556 = vmatpush1.msra.mxu0 0.0
  %557 = vmatprep.subr.mxu0 0.0
  %558 = vmatpush1.msra.mxu0 0.0
  %559 = vmatprep.mubr.f32.mxu0 0.0
  %560 = vmatmul.mubr.f32.gmra.mrb[0].mxu0 %v493
  %v561 = vpop.f32.mrb[0].mxu0
  %v562 = vadd.f32 %v487, %v561
  %v563 = vpop.f32.mrb[0].mxu0
  %564 = vdwg.mxu0
  %v565 = vld [vmem:[%s2] sm:$0xff]
  %v566 = vld [vmem:[%s2 + $0x8] sm:$0xff]
  %v567 = vlaneseq
  %v568 = vshrl.u32 %v567, 7
  %v569 = vsub.s32 0, %v568
  %v570 = vrot.slane %v60, %v569
  %v572 = vsel %vm156, %v565, 0
  %v575 = vsel %vm156, %v566, 0
  %577 = vmatprep.subr.mxu0 0.0
  %578 = vmatpush1.msra.mxu0 %v29
  %579 = vmatprep.subr.mxu0 0.0
  %580 = vmatpush1.msra.mxu0 %v30
  %581 = vmatprep.subr.mxu0 0.0
  %582 = vmatpush1.msra.mxu0 %v31
  %583 = vmatprep.subr.mxu0 0.0
  %584 = vmatpush1.msra.mxu0 %v32
  %585 = vmatprep.subr.mxu0 0.0
  %586 = vmatpush1.msra.mxu0 0.0
  %587 = vmatprep.subr.mxu0 0.0
  %588 = vmatpush1.msra.mxu0 0.0
  %589 = vmatprep.subr.mxu0 0.0
  %590 = vmatpush1.msra.mxu0 0.0
  %591 = vmatprep.subr.mxu0 0.0
  %592 = vmatpush1.msra.mxu0 0.0
  %593 = vmatprep.subr.mxu0 0.0
  %594 = vmatpush1.msra.mxu0 0.0
  %595 = vmatprep.subr.mxu0 0.0
  %596 = vmatpush1.msra.mxu0 0.0
  %597 = vmatprep.subr.mxu0 0.0
  %598 = vmatpush1.msra.mxu0 0.0
  %599 = vmatprep.subr.mxu0 0.0
  %600 = vmatpush1.msra.mxu0 0.0
  %601 = vmatprep.subr.mxu0 0.0
  %602 = vmatpush1.msra.mxu0 0.0
  %603 = vmatprep.subr.mxu0 0.0
  %604 = vmatpush1.msra.mxu0 0.0
  %605 = vmatprep.subr.mxu0 0.0
  %606 = vmatpush1.msra.mxu0 0.0
  %607 = vmatprep.subr.mxu0 0.0
  %608 = vmatpush1.msra.mxu0 0.0
  %609 = vmatprep.subr.mxu0 0.0
  %610 = vmatpush1.msra.mxu0 0.0
  %611 = vmatprep.subr.mxu0 0.0
  %612 = vmatpush1.msra.mxu0 0.0
  %613 = vmatprep.subr.mxu0 0.0
  %614 = vmatpush1.msra.mxu0 0.0
  %615 = vmatprep.subr.mxu0 0.0
  %616 = vmatpush1.msra.mxu0 0.0
  %617 = vmatprep.subr.mxu0 0.0
  %618 = vmatpush1.msra.mxu0 0.0
  %619 = vmatprep.subr.mxu0 0.0
  %620 = vmatpush1.msra.mxu0 0.0
  %621 = vmatprep.subr.mxu0 0.0
  %622 = vmatpush1.msra.mxu0 0.0
  %623 = vmatprep.subr.mxu0 0.0
  %624 = vmatpush1.msra.mxu0 0.0
  %625 = vmatprep.subr.mxu0 0.0
  %626 = vmatpush1.msra.mxu0 0.0
  %627 = vmatprep.subr.mxu0 0.0
  %628 = vmatpush1.msra.mxu0 0.0
  %629 = vmatprep.subr.mxu0 0.0
  %630 = vmatpush1.msra.mxu0 0.0
  %631 = vmatprep.subr.mxu0 0.0
  %632 = vmatpush1.msra.mxu0 0.0
  %633 = vmatprep.subr.mxu0 0.0
  %634 = vmatpush1.msra.mxu0 0.0
  %635 = vmatprep.subr.mxu0 0.0
  %636 = vmatpush1.msra.mxu0 0.0
  %637 = vmatprep.subr.mxu0 0.0
  %638 = vmatpush1.msra.mxu0 0.0
  %639 = vmatprep.subr.mxu0 0.0
  %640 = vmatpush1.msra.mxu0 0.0
  %641 = vmatprep.mubr.f32.mxu0 0.0
  %642 = vmatmul.mubr.f32.gmra.mrb[0].mxu0 %v572
  %v643 = vpop.f32.mrb[0].mxu0
  %v644 = vadd.f32 %v570, %v643
  %v645 = vpop.f32.mrb[0].mxu0
  %646 = vmatprep.mubr.f32.mxu0 0.0
  %647 = vmatmul.mubr.f32.gmra.mrb[0].mxu0 %v575
  %v648 = vpop.f32.mrb[0].mxu0
  %v649 = vadd.f32 %v570, %v648
  %v650 = vpop.f32.mrb[0].mxu0
  %651 = vdwg.mxu0
  %v652 = vld [vmem:[%s3] sm:$0xff]
  %v653 = vld [vmem:[%s3 + $0x8] sm:$0xff]
  %654 = vmatprep.subr.mxu0 0.0
  %655 = vmatpush1.msra.mxu0 %v41
  %656 = vmatprep.subr.mxu0 0.0
  %657 = vmatpush1.msra.mxu0 %v42
  %658 = vmatprep.subr.mxu0 0.0
  %659 = vmatpush1.msra.mxu0 %v43
  %660 = vmatprep.subr.mxu0 0.0
  %661 = vmatpush1.msra.mxu0 %v44
  %662 = vmatprep.subr.mxu0 0.0
  %663 = vmatpush1.msra.mxu0 %v45
  %664 = vmatprep.subr.mxu0 0.0
  %665 = vmatpush1.msra.mxu0 %v46
  %666 = vmatprep.subr.mxu0 0.0
  %667 = vmatpush1.msra.mxu0 %v47
  %668 = vmatprep.subr.mxu0 0.0
  %669 = vmatpush1.msra.mxu0 %v48
  %670 = vmatprep.subr.mxu0 0.0
  %671 = vmatpush1.msra.mxu0 %v49
  %672 = vmatprep.subr.mxu0 0.0
  %673 = vmatpush1.msra.mxu0 %v50
  %674 = vmatprep.subr.mxu0 0.0
  %675 = vmatpush1.msra.mxu0 %v51
  %676 = vmatprep.subr.mxu0 0.0
  %677 = vmatpush1.msra.mxu0 %v52
  %678 = vmatprep.subr.mxu0 0.0
  %679 = vmatpush1.msra.mxu0 %v53
  %680 = vmatprep.subr.mxu0 0.0
  %681 = vmatpush1.msra.mxu0 %v54
  %682 = vmatprep.subr.mxu0 0.0
  %683 = vmatpush1.msra.mxu0 %v55
  %684 = vmatprep.subr.mxu0 0.0
  %685 = vmatpush1.msra.mxu0 %v56
  %686 = vmatprep.subr.mxu0 0.0
  %687 = vmatpush1.msra.mxu0 0.0
  %688 = vmatprep.subr.mxu0 0.0
  %689 = vmatpush1.msra.mxu0 0.0
  %690 = vmatprep.subr.mxu0 0.0
  %691 = vmatpush1.msra.mxu0 0.0
  %692 = vmatprep.subr.mxu0 0.0
  %693 = vmatpush1.msra.mxu0 0.0
  %694 = vmatprep.subr.mxu0 0.0
  %695 = vmatpush1.msra.mxu0 0.0
  %696 = vmatprep.subr.mxu0 0.0
  %697 = vmatpush1.msra.mxu0 0.0
  %698 = vmatprep.subr.mxu0 0.0
  %699 = vmatpush1.msra.mxu0 0.0
  %700 = vmatprep.subr.mxu0 0.0
  %701 = vmatpush1.msra.mxu0 0.0
  %702 = vmatprep.subr.mxu0 0.0
  %703 = vmatpush1.msra.mxu0 0.0
  %704 = vmatprep.subr.mxu0 0.0
  %705 = vmatpush1.msra.mxu0 0.0
  %706 = vmatprep.subr.mxu0 0.0
  %707 = vmatpush1.msra.mxu0 0.0
  %708 = vmatprep.subr.mxu0 0.0
  %709 = vmatpush1.msra.mxu0 0.0
  %710 = vmatprep.subr.mxu0 0.0
  %711 = vmatpush1.msra.mxu0 0.0
  %712 = vmatprep.subr.mxu0 0.0
  %713 = vmatpush1.msra.mxu0 0.0
  %714 = vmatprep.subr.mxu0 0.0
  %715 = vmatpush1.msra.mxu0 0.0
  %716 = vmatprep.subr.mxu0 0.0
  %717 = vmatpush1.msra.mxu0 0.0
  %718 = vmatprep.mubr.f32.mxu0 0.0
  %719 = vmatmul.mubr.f32.gmra.mrb[0].mxu0 %v652
  %v720 = vpop.f32.mrb[0].mxu0
  %v721 = vadd.f32 0.0, %v720
  %v722 = vpop.f32.mrb[0].mxu0
  %723 = vmatprep.mubr.f32.mxu0 0.0
  %724 = vmatmul.mubr.f32.gmra.mrb[0].mxu0 %v653
  %v725 = vpop.f32.mrb[0].mxu0
  %v726 = vadd.f32 0.0, %v725
  %v727 = vpop.f32.mrb[0].mxu0
  %728 = vdwg.mxu0
  %v729 = vlaneseq
  %v730 = vshrl.u32 %v729, 7
  %v731 = vsub.s32 0, %v730
  %v732 = vrot.slane %v62, %v731
  %737 = vrot.lane.b32.xlu0 %v33, 96
  %v738 = vpop.permute.xlu0 %737
  %739 = vrot.lane.b32.xlu0 %v34, 96
  %v740 = vpop.permute.xlu0 %739
  %741 = vrot.lane.b32.xlu0 %v35, 96
  %v742 = vpop.permute.xlu0 %741
  %743 = vrot.lane.b32.xlu0 %v36, 96
  %v744 = vpop.permute.xlu0 %743
  %749 = vmatprep.subr.mxu0 0.0
  %750 = vmatpush1.msra.mxu0 %v738
  %751 = vmatprep.subr.mxu0 0.0
  %752 = vmatpush1.msra.mxu0 %v740
  %753 = vmatprep.subr.mxu0 0.0
  %754 = vmatpush1.msra.mxu0 %v742
  %755 = vmatprep.subr.mxu0 0.0
  %756 = vmatpush1.msra.mxu0 %v744
  %757 = vmatprep.subr.mxu0 0.0
  %758 = vmatpush1.msra.mxu0 0.0
  %759 = vmatprep.subr.mxu0 0.0
  %760 = vmatpush1.msra.mxu0 0.0
  %761 = vmatprep.subr.mxu0 0.0
  %762 = vmatpush1.msra.mxu0 0.0
  %763 = vmatprep.subr.mxu0 0.0
  %764 = vmatpush1.msra.mxu0 0.0
  %765 = vmatprep.subr.mxu0 0.0
  %766 = vmatpush1.msra.mxu0 0.0
  %767 = vmatprep.subr.mxu0 0.0
  %768 = vmatpush1.msra.mxu0 0.0
  %769 = vmatprep.subr.mxu0 0.0
  %770 = vmatpush1.msra.mxu0 0.0
  %771 = vmatprep.subr.mxu0 0.0
  %772 = vmatpush1.msra.mxu0 0.0
  %773 = vmatprep.subr.mxu0 0.0
  %774 = vmatpush1.msra.mxu0 0.0
  %775 = vmatprep.subr.mxu0 0.0
  %776 = vmatpush1.msra.mxu0 0.0
  %777 = vmatprep.subr.mxu0 0.0
  %778 = vmatpush1.msra.mxu0 0.0
  %779 = vmatprep.subr.mxu0 0.0
  %780 = vmatpush1.msra.mxu0 0.0
  %781 = vmatprep.subr.mxu0 0.0
  %782 = vmatpush1.msra.mxu0 0.0
  %783 = vmatprep.subr.mxu0 0.0
  %784 = vmatpush1.msra.mxu0 0.0
  %785 = vmatprep.subr.mxu0 0.0
  %786 = vmatpush1.msra.mxu0 0.0
  %787 = vmatprep.subr.mxu0 0.0
  %788 = vmatpush1.msra.mxu0 0.0
  %789 = vmatprep.subr.mxu0 0.0
  %790 = vmatpush1.msra.mxu0 0.0
  %791 = vmatprep.subr.mxu0 0.0
  %792 = vmatpush1.msra.mxu0 0.0
  %793 = vmatprep.subr.mxu0 0.0
  %794 = vmatpush1.msra.mxu0 0.0
  %795 = vmatprep.subr.mxu0 0.0
  %796 = vmatpush1.msra.mxu0 0.0
  %797 = vmatprep.subr.mxu0 0.0
  %798 = vmatpush1.msra.mxu0 0.0
  %799 = vmatprep.subr.mxu0 0.0
  %800 = vmatpush1.msra.mxu0 0.0
  %801 = vmatprep.subr.mxu0 0.0
  %802 = vmatpush1.msra.mxu0 0.0
  %803 = vmatprep.subr.mxu0 0.0
  %804 = vmatpush1.msra.mxu0 0.0
  %805 = vmatprep.subr.mxu0 0.0
  %806 = vmatpush1.msra.mxu0 0.0
  %807 = vmatprep.subr.mxu0 0.0
  %808 = vmatpush1.msra.mxu0 0.0
  %809 = vmatprep.subr.mxu0 0.0
  %810 = vmatpush1.msra.mxu0 0.0
  %811 = vmatprep.subr.mxu0 0.0
  %812 = vmatpush1.msra.mxu0 0.0
  %813 = vmatprep.mubr.f32.mxu0 0.0
  %814 = vmatmul.mubr.f32.gmra.mrb[0].mxu0 %v493
  %v815 = vpop.f32.mrb[0].mxu0
  %v816 = vadd.f32 %v732, %v815
  %v817 = vpop.f32.mrb[0].mxu0
  %818 = vdwg.mxu0
  %v819 = vmax.f32 %v816, 0.0
  %v822 = vunpack.c.l.s4 1966171168
  %v823 = vunpack.c.0.s8 %v822
  %v824 = vlaneseq
  %v825 = vshrl.u32 %v824, 7
  %v826 = vsub.s32 %v823, %v825
  %v827 = vrot.slane %v562, %v826
  %v828 = vcombine.high %v827, %v827
  %v830 = vunpack.c.l.s4 1966171168
  %v831 = vunpack.c.0.s8 %v830
  %v832 = vlaneseq
  %v833 = vshrl.u32 %v832, 7
  %v834 = vsub.s32 %v831, %v833
  %v835 = vrot.slane %v827, %v834
  %v837 = vunpack.c.l.s4 1966171168
  %v838 = vunpack.c.0.s8 %v837
  %v839 = vlaneseq
  %v840 = vshrl.u32 %v839, 7
  %v841 = vsub.s32 %v838, %v840
  %v842 = vrot.slane %v828, %v841
  %v843 = vsel %vm156, %v835, 0
  %845 = vmatprep.subr.mxu0 0.0
  %846 = vmatpush1.xpose.msra.mxu0 %v161
  %847 = vmatprep.subr.mxu0 0.0
  %848 = vmatpush1.xpose.msra.mxu0 0.0
  %849 = vmatprep.subr.mxu0 0.0
  %850 = vmatpush1.xpose.msra.mxu0 0.0
  %851 = vmatprep.subr.mxu0 0.0
  %852 = vmatpush1.xpose.msra.mxu0 0.0
  %853 = vmatprep.subr.mxu0 0.0
  %854 = vmatpush1.xpose.msra.mxu0 0.0
  %855 = vmatprep.subr.mxu0 0.0
  %856 = vmatpush1.xpose.msra.mxu0 0.0
  %857 = vmatprep.subr.mxu0 0.0
  %858 = vmatpush1.xpose.msra.mxu0 0.0
  %859 = vmatprep.subr.mxu0 0.0
  %860 = vmatpush1.xpose.msra.mxu0 0.0
  %861 = vmatprep.subr.mxu0 0.0
  %862 = vmatpush1.xpose.msra.mxu0 0.0
  %863 = vmatprep.subr.mxu0 0.0
  %864 = vmatpush1.xpose.msra.mxu0 0.0
  %865 = vmatprep.subr.mxu0 0.0
  %866 = vmatpush1.xpose.msra.mxu0 0.0
  %867 = vmatprep.subr.mxu0 0.0
  %868 = vmatpush1.xpose.msra.mxu0 0.0
  %869 = vmatprep.subr.mxu0 0.0
  %870 = vmatpush1.xpose.msra.mxu0 0.0
  %871 = vmatprep.subr.mxu0 0.0
  %872 = vmatpush1.xpose.msra.mxu0 0.0
  %873 = vmatprep.subr.mxu0 0.0
  %874 = vmatpush1.xpose.msra.mxu0 0.0
  %875 = vmatprep.subr.mxu0 0.0
  %876 = vmatpush1.xpose.msra.mxu0 0.0
  %877 = vmatprep.subr.mxu0 0.0
  %878 = vmatpush1.xpose.msra.mxu0 0.0
  %879 = vmatprep.subr.mxu0 0.0
  %880 = vmatpush1.xpose.msra.mxu0 0.0
  %881 = vmatprep.subr.mxu0 0.0
  %882 = vmatpush1.xpose.msra.mxu0 0.0
  %883 = vmatprep.subr.mxu0 0.0
  %884 = vmatpush1.xpose.msra.mxu0 0.0
  %885 = vmatprep.subr.mxu0 0.0
  %886 = vmatpush1.xpose.msra.mxu0 0.0
  %887 = vmatprep.subr.mxu0 0.0
  %888 = vmatpush1.xpose.msra.mxu0 0.0
  %889 = vmatprep.subr.mxu0 0.0
  %890 = vmatpush1.xpose.msra.mxu0 0.0
  %891 = vmatprep.subr.mxu0 0.0
  %892 = vmatpush1.xpose.msra.mxu0 0.0
  %893 = vmatprep.subr.mxu0 0.0
  %894 = vmatpush1.xpose.msra.mxu0 0.0
  %895 = vmatprep.subr.mxu0 0.0
  %896 = vmatpush1.xpose.msra.mxu0 0.0
  %897 = vmatprep.subr.mxu0 0.0
  %898 = vmatpush1.xpose.msra.mxu0 0.0
  %899 = vmatprep.subr.mxu0 0.0
  %900 = vmatpush1.xpose.msra.mxu0 0.0
  %901 = vmatprep.subr.mxu0 0.0
  %902 = vmatpush1.xpose.msra.mxu0 0.0
  %903 = vmatprep.subr.mxu0 0.0
  %904 = vmatpush1.xpose.msra.mxu0 0.0
  %905 = vmatprep.subr.mxu0 0.0
  %906 = vmatpush1.xpose.msra.mxu0 0.0
  %907 = vmatprep.subr.mxu0 0.0
  %908 = vmatpush1.xpose.msra.mxu0 0.0
  %909 = vmatprep.mubr.f32.mxu0 0.0
  %910 = vmatmul.mubr.f32.gmra.mrb[0].mxu0 %v843
  %v911 = vpop.f32.mrb[0].mxu0
  %v912 = vadd.f32 0.0, %v911
  %v913 = vpop.f32.mrb[0].mxu0
  %914 = vdwg.mxu0
  %v915 = vsel %vm156, %v842, 0
  %917 = vmatprep.subr.mxu0 0.0
  %918 = vmatpush1.xpose.msra.mxu0 %v234
  %919 = vmatprep.subr.mxu0 0.0
  %920 = vmatpush1.xpose.msra.mxu0 0.0
  %921 = vmatprep.subr.mxu0 0.0
  %922 = vmatpush1.xpose.msra.mxu0 0.0
  %923 = vmatprep.subr.mxu0 0.0
  %924 = vmatpush1.xpose.msra.mxu0 0.0
  %925 = vmatprep.subr.mxu0 0.0
  %926 = vmatpush1.xpose.msra.mxu0 0.0
  %927 = vmatprep.subr.mxu0 0.0
  %928 = vmatpush1.xpose.msra.mxu0 0.0
  %929 = vmatprep.subr.mxu0 0.0
  %930 = vmatpush1.xpose.msra.mxu0 0.0
  %931 = vmatprep.subr.mxu0 0.0
  %932 = vmatpush1.xpose.msra.mxu0 0.0
  %933 = vmatprep.subr.mxu0 0.0
  %934 = vmatpush1.xpose.msra.mxu0 0.0
  %935 = vmatprep.subr.mxu0 0.0
  %936 = vmatpush1.xpose.msra.mxu0 0.0
  %937 = vmatprep.subr.mxu0 0.0
  %938 = vmatpush1.xpose.msra.mxu0 0.0
  %939 = vmatprep.subr.mxu0 0.0
  %940 = vmatpush1.xpose.msra.mxu0 0.0
  %941 = vmatprep.subr.mxu0 0.0
  %942 = vmatpush1.xpose.msra.mxu0 0.0
  %943 = vmatprep.subr.mxu0 0.0
  %944 = vmatpush1.xpose.msra.mxu0 0.0
  %945 = vmatprep.subr.mxu0 0.0
  %946 = vmatpush1.xpose.msra.mxu0 0.0
  %947 = vmatprep.subr.mxu0 0.0
  %948 = vmatpush1.xpose.msra.mxu0 0.0
  %949 = vmatprep.subr.mxu0 0.0
  %950 = vmatpush1.xpose.msra.mxu0 0.0
  %951 = vmatprep.subr.mxu0 0.0
  %952 = vmatpush1.xpose.msra.mxu0 0.0
  %953 = vmatprep.subr.mxu0 0.0
  %954 = vmatpush1.xpose.msra.mxu0 0.0
  %955 = vmatprep.subr.mxu0 0.0
  %956 = vmatpush1.xpose.msra.mxu0 0.0
  %957 = vmatprep.subr.mxu0 0.0
  %958 = vmatpush1.xpose.msra.mxu0 0.0
  %959 = vmatprep.subr.mxu0 0.0
  %960 = vmatpush1.xpose.msra.mxu0 0.0
  %961 = vmatprep.subr.mxu0 0.0
  %962 = vmatpush1.xpose.msra.mxu0 0.0
  %963 = vmatprep.subr.mxu0 0.0
  %964 = vmatpush1.xpose.msra.mxu0 0.0
  %965 = vmatprep.subr.mxu0 0.0
  %966 = vmatpush1.xpose.msra.mxu0 0.0
  %967 = vmatprep.subr.mxu0 0.0
  %968 = vmatpush1.xpose.msra.mxu0 0.0
  %969 = vmatprep.subr.mxu0 0.0
  %970 = vmatpush1.xpose.msra.mxu0 0.0
  %971 = vmatprep.subr.mxu0 0.0
  %972 = vmatpush1.xpose.msra.mxu0 0.0
  %973 = vmatprep.subr.mxu0 0.0
  %974 = vmatpush1.xpose.msra.mxu0 0.0
  %975 = vmatprep.subr.mxu0 0.0
  %976 = vmatpush1.xpose.msra.mxu0 0.0
  %977 = vmatprep.subr.mxu0 0.0
  %978 = vmatpush1.xpose.msra.mxu0 0.0
  %979 = vmatprep.subr.mxu0 0.0
  %980 = vmatpush1.xpose.msra.mxu0 0.0
  %981 = vmatprep.mubr.f32.mxu0 0.0
  %982 = vmatmul.mubr.f32.gmra.mrb[0].mxu0 %v915
  %v983 = vpop.f32.mrb[0].mxu0
  %v984 = vadd.f32 0.0, %v983
  %v985 = vpop.f32.mrb[0].mxu0
  %986 = vdwg.mxu0
  %v987 = vmul.f32 %v912, 0.17677669
  %v988 = vmul.f32 %v984, 0.17677669
  %v989 = vsel %vm308, %v987, -1e+30
  %v990 = vsel %vm309, %v988, -1e+30
  %v991 = vsel %vm312, %v989, -inf
  %992 = vmax.xlane.f32.xlu0 %v991
  %v993 = vpop.xlane.xlu0 %992
  %v994 = vsel %vm312, %v990, -inf
  %995 = vmax.xlane.f32.xlu0 %v994
  %v996 = vpop.xlane.xlu0 %995
  %v997 = vsub.f32 %v989, %v993
  %v998 = vsub.f32 %v990, %v996
  %v999 = vmul.f32 %v997, 1.442695
  %v1000 = vpow.pop %v999
  %v1001 = vmul.f32 %v998, 1.442695
  %v1002 = vpow.pop %v1001
  %v1003 = vsel %vm312, %v1000, 0.0
  %1004 = vadd.xlane.f32.xlu0 %v1003
  %v1005 = vpop.xlane.xlu0 %1004
  %v1006 = vsel %vm312, %v1002, 0.0
  %1007 = vadd.xlane.f32.xlu0 %v1006
  %v1008 = vpop.xlane.xlu0 %1007
  %v1009 = vadd.f32 %v1005, 1e-09
  %v1010 = vadd.f32 %v1008, 1e-09
  %v1011 = vrcp.pop %v1009
  %v1012 = vmul.f32 %v1000, %v1011
  %v1013 = vrcp.pop %v1010
  %v1014 = vmul.f32 %v1002, %v1013
  %v1016 = vsel %vm337, %v1012, 0
  %1018 = vmatprep.subr.mxu0 0.0
  %1019 = vmatpush1.msra.mxu0 %v154
  %1020 = vmatprep.subr.mxu0 0.0
  %1021 = vmatpush1.msra.mxu0 0.0
  %1022 = vmatprep.subr.mxu0 0.0
  %1023 = vmatpush1.msra.mxu0 0.0
  %1024 = vmatprep.subr.mxu0 0.0
  %1025 = vmatpush1.msra.mxu0 0.0
  %1026 = vmatprep.subr.mxu0 0.0
  %1027 = vmatpush1.msra.mxu0 0.0
  %1028 = vmatprep.subr.mxu0 0.0
  %1029 = vmatpush1.msra.mxu0 0.0
  %1030 = vmatprep.subr.mxu0 0.0
  %1031 = vmatpush1.msra.mxu0 0.0
  %1032 = vmatprep.subr.mxu0 0.0
  %1033 = vmatpush1.msra.mxu0 0.0
  %1034 = vmatprep.subr.mxu0 0.0
  %1035 = vmatpush1.msra.mxu0 0.0
  %1036 = vmatprep.subr.mxu0 0.0
  %1037 = vmatpush1.msra.mxu0 0.0
  %1038 = vmatprep.subr.mxu0 0.0
  %1039 = vmatpush1.msra.mxu0 0.0
  %1040 = vmatprep.subr.mxu0 0.0
  %1041 = vmatpush1.msra.mxu0 0.0
  %1042 = vmatprep.subr.mxu0 0.0
  %1043 = vmatpush1.msra.mxu0 0.0
  %1044 = vmatprep.subr.mxu0 0.0
  %1045 = vmatpush1.msra.mxu0 0.0
  %1046 = vmatprep.subr.mxu0 0.0
  %1047 = vmatpush1.msra.mxu0 0.0
  %1048 = vmatprep.subr.mxu0 0.0
  %1049 = vmatpush1.msra.mxu0 0.0
  %1050 = vmatprep.subr.mxu0 0.0
  %1051 = vmatpush1.msra.mxu0 0.0
  %1052 = vmatprep.subr.mxu0 0.0
  %1053 = vmatpush1.msra.mxu0 0.0
  %1054 = vmatprep.subr.mxu0 0.0
  %1055 = vmatpush1.msra.mxu0 0.0
  %1056 = vmatprep.subr.mxu0 0.0
  %1057 = vmatpush1.msra.mxu0 0.0
  %1058 = vmatprep.subr.mxu0 0.0
  %1059 = vmatpush1.msra.mxu0 0.0
  %1060 = vmatprep.subr.mxu0 0.0
  %1061 = vmatpush1.msra.mxu0 0.0
  %1062 = vmatprep.subr.mxu0 0.0
  %1063 = vmatpush1.msra.mxu0 0.0
  %1064 = vmatprep.subr.mxu0 0.0
  %1065 = vmatpush1.msra.mxu0 0.0
  %1066 = vmatprep.subr.mxu0 0.0
  %1067 = vmatpush1.msra.mxu0 0.0
  %1068 = vmatprep.subr.mxu0 0.0
  %1069 = vmatpush1.msra.mxu0 0.0
  %1070 = vmatprep.subr.mxu0 0.0
  %1071 = vmatpush1.msra.mxu0 0.0
  %1072 = vmatprep.subr.mxu0 0.0
  %1073 = vmatpush1.msra.mxu0 0.0
  %1074 = vmatprep.subr.mxu0 0.0
  %1075 = vmatpush1.msra.mxu0 0.0
  %1076 = vmatprep.subr.mxu0 0.0
  %1077 = vmatpush1.msra.mxu0 0.0
  %1078 = vmatprep.subr.mxu0 0.0
  %1079 = vmatpush1.msra.mxu0 0.0
  %1080 = vmatprep.subr.mxu0 0.0
  %1081 = vmatpush1.msra.mxu0 0.0
  %1082 = vmatprep.mubr.f32.mxu0 0.0
  %1083 = vmatmul.mubr.f32.gmra.mrb[0].mxu0 %v1016
  %v1084 = vpop.f32.mrb[0].mxu0
  %v1085 = vadd.f32 0.0, %v1084
  %v1086 = vpop.f32.mrb[0].mxu0
  %1087 = vdwg.mxu0
  %v1089 = vsel %vm337, %v1014, 0
  %1091 = vmatprep.subr.mxu0 0.0
  %1092 = vmatpush1.msra.mxu0 %v155
  %1093 = vmatprep.subr.mxu0 0.0
  %1094 = vmatpush1.msra.mxu0 0.0
  %1095 = vmatprep.subr.mxu0 0.0
  %1096 = vmatpush1.msra.mxu0 0.0
  %1097 = vmatprep.subr.mxu0 0.0
  %1098 = vmatpush1.msra.mxu0 0.0
  %1099 = vmatprep.subr.mxu0 0.0
  %1100 = vmatpush1.msra.mxu0 0.0
  %1101 = vmatprep.subr.mxu0 0.0
  %1102 = vmatpush1.msra.mxu0 0.0
  %1103 = vmatprep.subr.mxu0 0.0
  %1104 = vmatpush1.msra.mxu0 0.0
  %1105 = vmatprep.subr.mxu0 0.0
  %1106 = vmatpush1.msra.mxu0 0.0
  %1107 = vmatprep.subr.mxu0 0.0
  %1108 = vmatpush1.msra.mxu0 0.0
  %1109 = vmatprep.subr.mxu0 0.0
  %1110 = vmatpush1.msra.mxu0 0.0
  %1111 = vmatprep.subr.mxu0 0.0
  %1112 = vmatpush1.msra.mxu0 0.0
  %1113 = vmatprep.subr.mxu0 0.0
  %1114 = vmatpush1.msra.mxu0 0.0
  %1115 = vmatprep.subr.mxu0 0.0
  %1116 = vmatpush1.msra.mxu0 0.0
  %1117 = vmatprep.subr.mxu0 0.0
  %1118 = vmatpush1.msra.mxu0 0.0
  %1119 = vmatprep.subr.mxu0 0.0
  %1120 = vmatpush1.msra.mxu0 0.0
  %1121 = vmatprep.subr.mxu0 0.0
  %1122 = vmatpush1.msra.mxu0 0.0
  %1123 = vmatprep.subr.mxu0 0.0
  %1124 = vmatpush1.msra.mxu0 0.0
  %1125 = vmatprep.subr.mxu0 0.0
  %1126 = vmatpush1.msra.mxu0 0.0
  %1127 = vmatprep.subr.mxu0 0.0
  %1128 = vmatpush1.msra.mxu0 0.0
  %1129 = vmatprep.subr.mxu0 0.0
  %1130 = vmatpush1.msra.mxu0 0.0
  %1131 = vmatprep.subr.mxu0 0.0
  %1132 = vmatpush1.msra.mxu0 0.0
  %1133 = vmatprep.subr.mxu0 0.0
  %1134 = vmatpush1.msra.mxu0 0.0
  %1135 = vmatprep.subr.mxu0 0.0
  %1136 = vmatpush1.msra.mxu0 0.0
  %1137 = vmatprep.subr.mxu0 0.0
  %1138 = vmatpush1.msra.mxu0 0.0
  %1139 = vmatprep.subr.mxu0 0.0
  %1140 = vmatpush1.msra.mxu0 0.0
  %1141 = vmatprep.subr.mxu0 0.0
  %1142 = vmatpush1.msra.mxu0 0.0
  %1143 = vmatprep.subr.mxu0 0.0
  %1144 = vmatpush1.msra.mxu0 0.0
  %1145 = vmatprep.subr.mxu0 0.0
  %1146 = vmatpush1.msra.mxu0 0.0
  %1147 = vmatprep.subr.mxu0 0.0
  %1148 = vmatpush1.msra.mxu0 0.0
  %1149 = vmatprep.subr.mxu0 0.0
  %1150 = vmatpush1.msra.mxu0 0.0
  %1151 = vmatprep.subr.mxu0 0.0
  %1152 = vmatpush1.msra.mxu0 0.0
  %1153 = vmatprep.subr.mxu0 0.0
  %1154 = vmatpush1.msra.mxu0 0.0
  %1155 = vmatprep.mubr.f32.mxu0 0.0
  %1156 = vmatmul.mubr.f32.gmra.mrb[0].mxu0 %v1089
  %v1157 = vpop.f32.mrb[0].mxu0
  %v1158 = vadd.f32 0.0, %v1157
  %v1159 = vpop.f32.mrb[0].mxu0
  %1160 = vdwg.mxu0
  %v1161 = vlaneseq
  %v1162 = vshrl.u32 %v1161, 7
  %v1163 = vsub.s32 0, %v1162
  %v1164 = vrot.slane %v1085, %v1163
  %v1165 = vlaneseq
  %v1166 = vshrl.u32 %v1165, 7
  %v1167 = vsub.s32 0, %v1166
  %v1168 = vrot.slane %v1158, %v1167
  %v1169 = vmul.f32 %v644, %v1164
  %v1170 = vmul.f32 %v649, %v1168
  %1172 = vrot.lane.b32.xlu0 %v644, 96
  %v1173 = vpop.permute.xlu0 %1172
  %v1175 = vsel %vm156, %v1169, 0
  %v1177 = vsel %vm156, %v1173, 0
  %1179 = vmatprep.subr.mxu0 0.0
  %1180 = vmatpush1.xpose.msra.mxu0 %v1177
  %1181 = vmatprep.subr.mxu0 0.0
  %1182 = vmatpush1.xpose.msra.mxu0 0.0
  %1183 = vmatprep.subr.mxu0 0.0
  %1184 = vmatpush1.xpose.msra.mxu0 0.0
  %1185 = vmatprep.subr.mxu0 0.0
  %1186 = vmatpush1.xpose.msra.mxu0 0.0
  %1187 = vmatprep.subr.mxu0 0.0
  %1188 = vmatpush1.xpose.msra.mxu0 0.0
  %1189 = vmatprep.subr.mxu0 0.0
  %1190 = vmatpush1.xpose.msra.mxu0 0.0
  %1191 = vmatprep.subr.mxu0 0.0
  %1192 = vmatpush1.xpose.msra.mxu0 0.0
  %1193 = vmatprep.subr.mxu0 0.0
  %1194 = vmatpush1.xpose.msra.mxu0 0.0
  %1195 = vmatprep.subr.mxu0 0.0
  %1196 = vmatpush1.xpose.msra.mxu0 0.0
  %1197 = vmatprep.subr.mxu0 0.0
  %1198 = vmatpush1.xpose.msra.mxu0 0.0
  %1199 = vmatprep.subr.mxu0 0.0
  %1200 = vmatpush1.xpose.msra.mxu0 0.0
  %1201 = vmatprep.subr.mxu0 0.0
  %1202 = vmatpush1.xpose.msra.mxu0 0.0
  %1203 = vmatprep.subr.mxu0 0.0
  %1204 = vmatpush1.xpose.msra.mxu0 0.0
  %1205 = vmatprep.subr.mxu0 0.0
  %1206 = vmatpush1.xpose.msra.mxu0 0.0
  %1207 = vmatprep.subr.mxu0 0.0
  %1208 = vmatpush1.xpose.msra.mxu0 0.0
  %1209 = vmatprep.subr.mxu0 0.0
  %1210 = vmatpush1.xpose.msra.mxu0 0.0
  %1211 = vmatprep.subr.mxu0 0.0
  %1212 = vmatpush1.xpose.msra.mxu0 0.0
  %1213 = vmatprep.subr.mxu0 0.0
  %1214 = vmatpush1.xpose.msra.mxu0 0.0
  %1215 = vmatprep.subr.mxu0 0.0
  %1216 = vmatpush1.xpose.msra.mxu0 0.0
  %1217 = vmatprep.subr.mxu0 0.0
  %1218 = vmatpush1.xpose.msra.mxu0 0.0
  %1219 = vmatprep.subr.mxu0 0.0
  %1220 = vmatpush1.xpose.msra.mxu0 0.0
  %1221 = vmatprep.subr.mxu0 0.0
  %1222 = vmatpush1.xpose.msra.mxu0 0.0
  %1223 = vmatprep.subr.mxu0 0.0
  %1224 = vmatpush1.xpose.msra.mxu0 0.0
  %1225 = vmatprep.subr.mxu0 0.0
  %1226 = vmatpush1.xpose.msra.mxu0 0.0
  %1227 = vmatprep.subr.mxu0 0.0
  %1228 = vmatpush1.xpose.msra.mxu0 0.0
  %1229 = vmatprep.subr.mxu0 0.0
  %1230 = vmatpush1.xpose.msra.mxu0 0.0
  %1231 = vmatprep.subr.mxu0 0.0
  %1232 = vmatpush1.xpose.msra.mxu0 0.0
  %1233 = vmatprep.subr.mxu0 0.0
  %1234 = vmatpush1.xpose.msra.mxu0 0.0
  %1235 = vmatprep.subr.mxu0 0.0
  %1236 = vmatpush1.xpose.msra.mxu0 0.0
  %1237 = vmatprep.subr.mxu0 0.0
  %1238 = vmatpush1.xpose.msra.mxu0 0.0
  %1239 = vmatprep.subr.mxu0 0.0
  %1240 = vmatpush1.xpose.msra.mxu0 0.0
  %1241 = vmatprep.subr.mxu0 0.0
  %1242 = vmatpush1.xpose.msra.mxu0 0.0
  %1243 = vmatprep.mubr.f32.mxu0 0.0
  %1244 = vmatmul.mubr.f32.gmra.mrb[0].mxu0 %v1175
  %v1245 = vpop.f32.mrb[0].mxu0
  %v1246 = vadd.f32 0.0, %v1245
  %v1247 = vpop.f32.mrb[0].mxu0
  %1248 = vdwg.mxu0
  %1250 = vrot.lane.b32.xlu0 %v649, 96
  %v1251 = vpop.permute.xlu0 %1250
  %v1253 = vsel %vm156, %v1170, 0
  %v1255 = vsel %vm156, %v1251, 0
  %1257 = vmatprep.subr.mxu0 0.0
  %1258 = vmatpush1.xpose.msra.mxu0 %v1255
  %1259 = vmatprep.subr.mxu0 0.0
  %1260 = vmatpush1.xpose.msra.mxu0 0.0
  %1261 = vmatprep.subr.mxu0 0.0
  %1262 = vmatpush1.xpose.msra.mxu0 0.0
  %1263 = vmatprep.subr.mxu0 0.0
  %1264 = vmatpush1.xpose.msra.mxu0 0.0
  %1265 = vmatprep.subr.mxu0 0.0
  %1266 = vmatpush1.xpose.msra.mxu0 0.0
  %1267 = vmatprep.subr.mxu0 0.0
  %1268 = vmatpush1.xpose.msra.mxu0 0.0
  %1269 = vmatprep.subr.mxu0 0.0
  %1270 = vmatpush1.xpose.msra.mxu0 0.0
  %1271 = vmatprep.subr.mxu0 0.0
  %1272 = vmatpush1.xpose.msra.mxu0 0.0
  %1273 = vmatprep.subr.mxu0 0.0
  %1274 = vmatpush1.xpose.msra.mxu0 0.0
  %1275 = vmatprep.subr.mxu0 0.0
  %1276 = vmatpush1.xpose.msra.mxu0 0.0
  %1277 = vmatprep.subr.mxu0 0.0
  %1278 = vmatpush1.xpose.msra.mxu0 0.0
  %1279 = vmatprep.subr.mxu0 0.0
  %1280 = vmatpush1.xpose.msra.mxu0 0.0
  %1281 = vmatprep.subr.mxu0 0.0
  %1282 = vmatpush1.xpose.msra.mxu0 0.0
  %1283 = vmatprep.subr.mxu0 0.0
  %1284 = vmatpush1.xpose.msra.mxu0 0.0
  %1285 = vmatprep.subr.mxu0 0.0
  %1286 = vmatpush1.xpose.msra.mxu0 0.0
  %1287 = vmatprep.subr.mxu0 0.0
  %1288 = vmatpush1.xpose.msra.mxu0 0.0
  %1289 = vmatprep.subr.mxu0 0.0
  %1290 = vmatpush1.xpose.msra.mxu0 0.0
  %1291 = vmatprep.subr.mxu0 0.0
  %1292 = vmatpush1.xpose.msra.mxu0 0.0
  %1293 = vmatprep.subr.mxu0 0.0
  %1294 = vmatpush1.xpose.msra.mxu0 0.0
  %1295 = vmatprep.subr.mxu0 0.0
  %1296 = vmatpush1.xpose.msra.mxu0 0.0
  %1297 = vmatprep.subr.mxu0 0.0
  %1298 = vmatpush1.xpose.msra.mxu0 0.0
  %1299 = vmatprep.subr.mxu0 0.0
  %1300 = vmatpush1.xpose.msra.mxu0 0.0
  %1301 = vmatprep.subr.mxu0 0.0
  %1302 = vmatpush1.xpose.msra.mxu0 0.0
  %1303 = vmatprep.subr.mxu0 0.0
  %1304 = vmatpush1.xpose.msra.mxu0 0.0
  %1305 = vmatprep.subr.mxu0 0.0
  %1306 = vmatpush1.xpose.msra.mxu0 0.0
  %1307 = vmatprep.subr.mxu0 0.0
  %1308 = vmatpush1.xpose.msra.mxu0 0.0
  %1309 = vmatprep.subr.mxu0 0.0
  %1310 = vmatpush1.xpose.msra.mxu0 0.0
  %1311 = vmatprep.subr.mxu0 0.0
  %1312 = vmatpush1.xpose.msra.mxu0 0.0
  %1313 = vmatprep.subr.mxu0 0.0
  %1314 = vmatpush1.xpose.msra.mxu0 0.0
  %1315 = vmatprep.subr.mxu0 0.0
  %1316 = vmatpush1.xpose.msra.mxu0 0.0
  %1317 = vmatprep.subr.mxu0 0.0
  %1318 = vmatpush1.xpose.msra.mxu0 0.0
  %1319 = vmatprep.subr.mxu0 0.0
  %1320 = vmatpush1.xpose.msra.mxu0 0.0
  %1321 = vmatprep.mubr.f32.mxu0 0.0
  %1322 = vmatmul.mubr.f32.gmra.mrb[0].mxu0 %v1253
  %v1323 = vpop.f32.mrb[0].mxu0
  %v1324 = vadd.f32 0.0, %v1323
  %v1325 = vpop.f32.mrb[0].mxu0
  %1326 = vdwg.mxu0
  %v1327 = vmul.f32 %v1246, 0.17677669
  %v1328 = vmul.f32 %v1324, 0.17677669
  %v1329 = vadd.f32 %v1327, %v721
  %v1330 = vadd.f32 %v1328, %v726
  %v1331 = vsel %vm337, %v1329, -inf
  %1332 = vmax.xlane.f32.xlu0 %v1331
  %v1333 = vpop.xlane.xlu0 %1332
  %v1334 = vsel %vm337, %v1330, -inf
  %1335 = vmax.xlane.f32.xlu0 %v1334
  %v1336 = vpop.xlane.xlu0 %1335
  %v1337 = vsub.f32 %v1329, %v1333
  %v1338 = vsub.f32 %v1330, %v1336
  %v1339 = vmul.f32 %v1337, 1.442695
  %v1340 = vpow.pop %v1339
  %v1341 = vmul.f32 %v1338, 1.442695
  %v1342 = vpow.pop %v1341
  %v1343 = vsel %vm337, %v1340, 0.0
  %1344 = vadd.xlane.f32.xlu0 %v1343
  %v1345 = vpop.xlane.xlu0 %1344
  %v1346 = vsel %vm337, %v1342, 0.0
  %1347 = vadd.xlane.f32.xlu0 %v1346
  %v1348 = vpop.xlane.xlu0 %1347
  %v1349 = vadd.f32 %v1345, 1e-09
  %v1350 = vadd.f32 %v1348, 1e-09
  %v1351 = vrcp.pop %v1349
  %v1352 = vmul.f32 %v1340, %v1351
  %v1353 = vrcp.pop %v1350
  %v1354 = vmul.f32 %v1342, %v1353
  %1355 = vrot.lane.b32.xlu0 %v644, 64
  %v1356 = vpop.permute.xlu0 %1355
  %v1359 = vsel %vm337, %v1352, 0
  %1361 = vmatprep.subr.mxu0 0.0
  %1362 = vmatpush1.msra.mxu0 %v1356
  %1363 = vmatprep.subr.mxu0 0.0
  %1364 = vmatpush1.msra.mxu0 0.0
  %1365 = vmatprep.subr.mxu0 0.0
  %1366 = vmatpush1.msra.mxu0 0.0
  %1367 = vmatprep.subr.mxu0 0.0
  %1368 = vmatpush1.msra.mxu0 0.0
  %1369 = vmatprep.subr.mxu0 0.0
  %1370 = vmatpush1.msra.mxu0 0.0
  %1371 = vmatprep.subr.mxu0 0.0
  %1372 = vmatpush1.msra.mxu0 0.0
  %1373 = vmatprep.subr.mxu0 0.0
  %1374 = vmatpush1.msra.mxu0 0.0
  %1375 = vmatprep.subr.mxu0 0.0
  %1376 = vmatpush1.msra.mxu0 0.0
  %1377 = vmatprep.subr.mxu0 0.0
  %1378 = vmatpush1.msra.mxu0 0.0
  %1379 = vmatprep.subr.mxu0 0.0
  %1380 = vmatpush1.msra.mxu0 0.0
  %1381 = vmatprep.subr.mxu0 0.0
  %1382 = vmatpush1.msra.mxu0 0.0
  %1383 = vmatprep.subr.mxu0 0.0
  %1384 = vmatpush1.msra.mxu0 0.0
  %1385 = vmatprep.subr.mxu0 0.0
  %1386 = vmatpush1.msra.mxu0 0.0
  %1387 = vmatprep.subr.mxu0 0.0
  %1388 = vmatpush1.msra.mxu0 0.0
  %1389 = vmatprep.subr.mxu0 0.0
  %1390 = vmatpush1.msra.mxu0 0.0
  %1391 = vmatprep.subr.mxu0 0.0
  %1392 = vmatpush1.msra.mxu0 0.0
  %1393 = vmatprep.subr.mxu0 0.0
  %1394 = vmatpush1.msra.mxu0 0.0
  %1395 = vmatprep.subr.mxu0 0.0
  %1396 = vmatpush1.msra.mxu0 0.0
  %1397 = vmatprep.subr.mxu0 0.0
  %1398 = vmatpush1.msra.mxu0 0.0
  %1399 = vmatprep.subr.mxu0 0.0
  %1400 = vmatpush1.msra.mxu0 0.0
  %1401 = vmatprep.subr.mxu0 0.0
  %1402 = vmatpush1.msra.mxu0 0.0
  %1403 = vmatprep.subr.mxu0 0.0
  %1404 = vmatpush1.msra.mxu0 0.0
  %1405 = vmatprep.subr.mxu0 0.0
  %1406 = vmatpush1.msra.mxu0 0.0
  %1407 = vmatprep.subr.mxu0 0.0
  %1408 = vmatpush1.msra.mxu0 0.0
  %1409 = vmatprep.subr.mxu0 0.0
  %1410 = vmatpush1.msra.mxu0 0.0
  %1411 = vmatprep.subr.mxu0 0.0
  %1412 = vmatpush1.msra.mxu0 0.0
  %1413 = vmatprep.subr.mxu0 0.0
  %1414 = vmatpush1.msra.mxu0 0.0
  %1415 = vmatprep.subr.mxu0 0.0
  %1416 = vmatpush1.msra.mxu0 0.0
  %1417 = vmatprep.subr.mxu0 0.0
  %1418 = vmatpush1.msra.mxu0 0.0
  %1419 = vmatprep.subr.mxu0 0.0
  %1420 = vmatpush1.msra.mxu0 0.0
  %1421 = vmatprep.subr.mxu0 0.0
  %1422 = vmatpush1.msra.mxu0 0.0
  %1423 = vmatprep.subr.mxu0 0.0
  %1424 = vmatpush1.msra.mxu0 0.0
  %1425 = vmatprep.mubr.f32.mxu0 0.0
  %1426 = vmatmul.mubr.f32.gmra.mrb[0].mxu0 %v1359
  %v1427 = vpop.f32.mrb[0].mxu0
  %v1428 = vadd.f32 %v1356, %v1427
  %v1429 = vpop.f32.mrb[0].mxu0
  %1430 = vdwg.mxu0
  %1431 = vrot.lane.b32.xlu0 %v649, 64
  %v1432 = vpop.permute.xlu0 %1431
  %v1435 = vsel %vm337, %v1354, 0
  %1437 = vmatprep.subr.mxu0 0.0
  %1438 = vmatpush1.msra.mxu0 %v1432
  %1439 = vmatprep.subr.mxu0 0.0
  %1440 = vmatpush1.msra.mxu0 0.0
  %1441 = vmatprep.subr.mxu0 0.0
  %1442 = vmatpush1.msra.mxu0 0.0
  %1443 = vmatprep.subr.mxu0 0.0
  %1444 = vmatpush1.msra.mxu0 0.0
  %1445 = vmatprep.subr.mxu0 0.0
  %1446 = vmatpush1.msra.mxu0 0.0
  %1447 = vmatprep.subr.mxu0 0.0
  %1448 = vmatpush1.msra.mxu0 0.0
  %1449 = vmatprep.subr.mxu0 0.0
  %1450 = vmatpush1.msra.mxu0 0.0
  %1451 = vmatprep.subr.mxu0 0.0
  %1452 = vmatpush1.msra.mxu0 0.0
  %1453 = vmatprep.subr.mxu0 0.0
  %1454 = vmatpush1.msra.mxu0 0.0
  %1455 = vmatprep.subr.mxu0 0.0
  %1456 = vmatpush1.msra.mxu0 0.0
  %1457 = vmatprep.subr.mxu0 0.0
  %1458 = vmatpush1.msra.mxu0 0.0
  %1459 = vmatprep.subr.mxu0 0.0
  %1460 = vmatpush1.msra.mxu0 0.0
  %1461 = vmatprep.subr.mxu0 0.0
  %1462 = vmatpush1.msra.mxu0 0.0
  %1463 = vmatprep.subr.mxu0 0.0
  %1464 = vmatpush1.msra.mxu0 0.0
  %1465 = vmatprep.subr.mxu0 0.0
  %1466 = vmatpush1.msra.mxu0 0.0
  %1467 = vmatprep.subr.mxu0 0.0
  %1468 = vmatpush1.msra.mxu0 0.0
  %1469 = vmatprep.subr.mxu0 0.0
  %1470 = vmatpush1.msra.mxu0 0.0
  %1471 = vmatprep.subr.mxu0 0.0
  %1472 = vmatpush1.msra.mxu0 0.0
  %1473 = vmatprep.subr.mxu0 0.0
  %1474 = vmatpush1.msra.mxu0 0.0
  %1475 = vmatprep.subr.mxu0 0.0
  %1476 = vmatpush1.msra.mxu0 0.0
  %1477 = vmatprep.subr.mxu0 0.0
  %1478 = vmatpush1.msra.mxu0 0.0
  %1479 = vmatprep.subr.mxu0 0.0
  %1480 = vmatpush1.msra.mxu0 0.0
  %1481 = vmatprep.subr.mxu0 0.0
  %1482 = vmatpush1.msra.mxu0 0.0
  %1483 = vmatprep.subr.mxu0 0.0
  %1484 = vmatpush1.msra.mxu0 0.0
  %1485 = vmatprep.subr.mxu0 0.0
  %1486 = vmatpush1.msra.mxu0 0.0
  %1487 = vmatprep.subr.mxu0 0.0
  %1488 = vmatpush1.msra.mxu0 0.0
  %1489 = vmatprep.subr.mxu0 0.0
  %1490 = vmatpush1.msra.mxu0 0.0
  %1491 = vmatprep.subr.mxu0 0.0
  %1492 = vmatpush1.msra.mxu0 0.0
  %1493 = vmatprep.subr.mxu0 0.0
  %1494 = vmatpush1.msra.mxu0 0.0
  %1495 = vmatprep.subr.mxu0 0.0
  %1496 = vmatpush1.msra.mxu0 0.0
  %1497 = vmatprep.subr.mxu0 0.0
  %1498 = vmatpush1.msra.mxu0 0.0
  %1499 = vmatprep.subr.mxu0 0.0
  %1500 = vmatpush1.msra.mxu0 0.0
  %1501 = vmatprep.mubr.f32.mxu0 0.0
  %1502 = vmatmul.mubr.f32.gmra.mrb[0].mxu0 %v1435
  %v1503 = vpop.f32.mrb[0].mxu0
  %v1504 = vadd.f32 %v1432, %v1503
  %v1505 = vpop.f32.mrb[0].mxu0
  %1506 = vdwg.mxu0
  %v1507 = vmax.f32 %v1428, 0.0
  %v1508 = vmax.f32 %v1504, 0.0
  %v1509 = vsel %vm156, %v408, 0
  %v1512 = vsel %vm156, %v1507, 0
  %1514 = vmatprep.subr.mxu0 0.0
  %1515 = vmatpush1.xpose.msra.mxu0 %v1512
  %1516 = vmatprep.subr.mxu0 0.0
  %1517 = vmatpush1.xpose.msra.mxu0 0.0
  %1518 = vmatprep.subr.mxu0 0.0
  %1519 = vmatpush1.xpose.msra.mxu0 0.0
  %1520 = vmatprep.subr.mxu0 0.0
  %1521 = vmatpush1.xpose.msra.mxu0 0.0
  %1522 = vmatprep.subr.mxu0 0.0
  %1523 = vmatpush1.xpose.msra.mxu0 0.0
  %1524 = vmatprep.subr.mxu0 0.0
  %1525 = vmatpush1.xpose.msra.mxu0 0.0
  %1526 = vmatprep.subr.mxu0 0.0
  %1527 = vmatpush1.xpose.msra.mxu0 0.0
  %1528 = vmatprep.subr.mxu0 0.0
  %1529 = vmatpush1.xpose.msra.mxu0 0.0
  %1530 = vmatprep.subr.mxu0 0.0
  %1531 = vmatpush1.xpose.msra.mxu0 0.0
  %1532 = vmatprep.subr.mxu0 0.0
  %1533 = vmatpush1.xpose.msra.mxu0 0.0
  %1534 = vmatprep.subr.mxu0 0.0
  %1535 = vmatpush1.xpose.msra.mxu0 0.0
  %1536 = vmatprep.subr.mxu0 0.0
  %1537 = vmatpush1.xpose.msra.mxu0 0.0
  %1538 = vmatprep.subr.mxu0 0.0
  %1539 = vmatpush1.xpose.msra.mxu0 0.0
  %1540 = vmatprep.subr.mxu0 0.0
  %1541 = vmatpush1.xpose.msra.mxu0 0.0
  %1542 = vmatprep.subr.mxu0 0.0
  %1543 = vmatpush1.xpose.msra.mxu0 0.0
  %1544 = vmatprep.subr.mxu0 0.0
  %1545 = vmatpush1.xpose.msra.mxu0 0.0
  %1546 = vmatprep.subr.mxu0 0.0
  %1547 = vmatpush1.xpose.msra.mxu0 0.0
  %1548 = vmatprep.subr.mxu0 0.0
  %1549 = vmatpush1.xpose.msra.mxu0 0.0
  %1550 = vmatprep.subr.mxu0 0.0
  %1551 = vmatpush1.xpose.msra.mxu0 0.0
  %1552 = vmatprep.subr.mxu0 0.0
  %1553 = vmatpush1.xpose.msra.mxu0 0.0
  %1554 = vmatprep.subr.mxu0 0.0
  %1555 = vmatpush1.xpose.msra.mxu0 0.0
  %1556 = vmatprep.subr.mxu0 0.0
  %1557 = vmatpush1.xpose.msra.mxu0 0.0
  %1558 = vmatprep.subr.mxu0 0.0
  %1559 = vmatpush1.xpose.msra.mxu0 0.0
  %1560 = vmatprep.subr.mxu0 0.0
  %1561 = vmatpush1.xpose.msra.mxu0 0.0
  %1562 = vmatprep.subr.mxu0 0.0
  %1563 = vmatpush1.xpose.msra.mxu0 0.0
  %1564 = vmatprep.subr.mxu0 0.0
  %1565 = vmatpush1.xpose.msra.mxu0 0.0
  %1566 = vmatprep.subr.mxu0 0.0
  %1567 = vmatpush1.xpose.msra.mxu0 0.0
  %1568 = vmatprep.subr.mxu0 0.0
  %1569 = vmatpush1.xpose.msra.mxu0 0.0
  %1570 = vmatprep.subr.mxu0 0.0
  %1571 = vmatpush1.xpose.msra.mxu0 0.0
  %1572 = vmatprep.subr.mxu0 0.0
  %1573 = vmatpush1.xpose.msra.mxu0 0.0
  %1574 = vmatprep.subr.mxu0 0.0
  %1575 = vmatpush1.xpose.msra.mxu0 0.0
  %1576 = vmatprep.subr.mxu0 0.0
  %1577 = vmatpush1.xpose.msra.mxu0 0.0
  %1578 = vmatprep.mubr.f32.mxu0 0.0
  %1579 = vmatmul.mubr.f32.gmra.mrb[0].mxu0 %v1509
  %v1580 = vpop.f32.mrb[0].mxu0
  %v1581 = vadd.f32 0.0, %v1580
  %v1582 = vpop.f32.mrb[0].mxu0
  %1583 = vdwg.mxu0
  %v1584 = vsel %vm156, %v481, 0
  %v1587 = vsel %vm156, %v1508, 0
  %1589 = vmatprep.subr.mxu0 0.0
  %1590 = vmatpush1.xpose.msra.mxu0 %v1587
  %1591 = vmatprep.subr.mxu0 0.0
  %1592 = vmatpush1.xpose.msra.mxu0 0.0
  %1593 = vmatprep.subr.mxu0 0.0
  %1594 = vmatpush1.xpose.msra.mxu0 0.0
  %1595 = vmatprep.subr.mxu0 0.0
  %1596 = vmatpush1.xpose.msra.mxu0 0.0
  %1597 = vmatprep.subr.mxu0 0.0
  %1598 = vmatpush1.xpose.msra.mxu0 0.0
  %1599 = vmatprep.subr.mxu0 0.0
  %1600 = vmatpush1.xpose.msra.mxu0 0.0
  %1601 = vmatprep.subr.mxu0 0.0
  %1602 = vmatpush1.xpose.msra.mxu0 0.0
  %1603 = vmatprep.subr.mxu0 0.0
  %1604 = vmatpush1.xpose.msra.mxu0 0.0
  %1605 = vmatprep.subr.mxu0 0.0
  %1606 = vmatpush1.xpose.msra.mxu0 0.0
  %1607 = vmatprep.subr.mxu0 0.0
  %1608 = vmatpush1.xpose.msra.mxu0 0.0
  %1609 = vmatprep.subr.mxu0 0.0
  %1610 = vmatpush1.xpose.msra.mxu0 0.0
  %1611 = vmatprep.subr.mxu0 0.0
  %1612 = vmatpush1.xpose.msra.mxu0 0.0
  %1613 = vmatprep.subr.mxu0 0.0
  %1614 = vmatpush1.xpose.msra.mxu0 0.0
  %1615 = vmatprep.subr.mxu0 0.0
  %1616 = vmatpush1.xpose.msra.mxu0 0.0
  %1617 = vmatprep.subr.mxu0 0.0
  %1618 = vmatpush1.xpose.msra.mxu0 0.0
  %1619 = vmatprep.subr.mxu0 0.0
  %1620 = vmatpush1.xpose.msra.mxu0 0.0
  %1621 = vmatprep.subr.mxu0 0.0
  %1622 = vmatpush1.xpose.msra.mxu0 0.0
  %1623 = vmatprep.subr.mxu0 0.0
  %1624 = vmatpush1.xpose.msra.mxu0 0.0
  %1625 = vmatprep.subr.mxu0 0.0
  %1626 = vmatpush1.xpose.msra.mxu0 0.0
  %1627 = vmatprep.subr.mxu0 0.0
  %1628 = vmatpush1.xpose.msra.mxu0 0.0
  %1629 = vmatprep.subr.mxu0 0.0
  %1630 = vmatpush1.xpose.msra.mxu0 0.0
  %1631 = vmatprep.subr.mxu0 0.0
  %1632 = vmatpush1.xpose.msra.mxu0 0.0
  %1633 = vmatprep.subr.mxu0 0.0
  %1634 = vmatpush1.xpose.msra.mxu0 0.0
  %1635 = vmatprep.subr.mxu0 0.0
  %1636 = vmatpush1.xpose.msra.mxu0 0.0
  %1637 = vmatprep.subr.mxu0 0.0
  %1638 = vmatpush1.xpose.msra.mxu0 0.0
  %1639 = vmatprep.subr.mxu0 0.0
  %1640 = vmatpush1.xpose.msra.mxu0 0.0
  %1641 = vmatprep.subr.mxu0 0.0
  %1642 = vmatpush1.xpose.msra.mxu0 0.0
  %1643 = vmatprep.subr.mxu0 0.0
  %1644 = vmatpush1.xpose.msra.mxu0 0.0
  %1645 = vmatprep.subr.mxu0 0.0
  %1646 = vmatpush1.xpose.msra.mxu0 0.0
  %1647 = vmatprep.subr.mxu0 0.0
  %1648 = vmatpush1.xpose.msra.mxu0 0.0
  %1649 = vmatprep.subr.mxu0 0.0
  %1650 = vmatpush1.xpose.msra.mxu0 0.0
  %1651 = vmatprep.subr.mxu0 0.0
  %1652 = vmatpush1.xpose.msra.mxu0 0.0
  %1653 = vmatprep.mubr.f32.mxu0 0.0
  %1654 = vmatmul.mubr.f32.gmra.mrb[0].mxu0 %v1584
  %v1655 = vpop.f32.mrb[0].mxu0
  %v1656 = vadd.f32 0.0, %v1655
  %v1657 = vpop.f32.mrb[0].mxu0
  %1658 = vdwg.mxu0
  %v1659 = vmul.f32 %v1581, 0.17677669
  %v1660 = vmul.f32 %v1656, 0.17677669
  %v1661 = vsel %vm312, %v1659, -inf
  %1662 = vmax.xlane.f32.xlu0 %v1661
  %v1663 = vpop.xlane.xlu0 %1662
  %v1664 = vsel %vm312, %v1660, -inf
  %1665 = vmax.xlane.f32.xlu0 %v1664
  %v1666 = vpop.xlane.xlu0 %1665
  %v1667 = vsub.f32 %v1659, %v1663
  %v1668 = vsub.f32 %v1660, %v1666
  %v1669 = vmul.f32 %v1667, 1.442695
  %v1670 = vpow.pop %v1669
  %v1671 = vmul.f32 %v1668, 1.442695
  %v1672 = vpow.pop %v1671
  %v1673 = vsel %vm312, %v1670, 0.0
  %1674 = vadd.xlane.f32.xlu0 %v1673
  %v1675 = vpop.xlane.xlu0 %1674
  %v1676 = vsel %vm312, %v1672, 0.0
  %1677 = vadd.xlane.f32.xlu0 %v1676
  %v1678 = vpop.xlane.xlu0 %1677
  %v1679 = vadd.f32 %v1675, 1e-09
  %v1680 = vadd.f32 %v1678, 1e-09
  %v1681 = vrcp.pop %v1679
  %v1682 = vmul.f32 %v1670, %v1681
  %v1683 = vrcp.pop %v1680
  %v1684 = vmul.f32 %v1672, %v1683
  %v1686 = vsel %vm337, %v1682, 0
  %1688 = vmatprep.subr.mxu0 0.0
  %1689 = vmatpush1.msra.mxu0 %v1507
  %1690 = vmatprep.subr.mxu0 0.0
  %1691 = vmatpush1.msra.mxu0 0.0
  %1692 = vmatprep.subr.mxu0 0.0
  %1693 = vmatpush1.msra.mxu0 0.0
  %1694 = vmatprep.subr.mxu0 0.0
  %1695 = vmatpush1.msra.mxu0 0.0
  %1696 = vmatprep.subr.mxu0 0.0
  %1697 = vmatpush1.msra.mxu0 0.0
  %1698 = vmatprep.subr.mxu0 0.0
  %1699 = vmatpush1.msra.mxu0 0.0
  %1700 = vmatprep.subr.mxu0 0.0
  %1701 = vmatpush1.msra.mxu0 0.0
  %1702 = vmatprep.subr.mxu0 0.0
  %1703 = vmatpush1.msra.mxu0 0.0
  %1704 = vmatprep.subr.mxu0 0.0
  %1705 = vmatpush1.msra.mxu0 0.0
  %1706 = vmatprep.subr.mxu0 0.0
  %1707 = vmatpush1.msra.mxu0 0.0
  %1708 = vmatprep.subr.mxu0 0.0
  %1709 = vmatpush1.msra.mxu0 0.0
  %1710 = vmatprep.subr.mxu0 0.0
  %1711 = vmatpush1.msra.mxu0 0.0
  %1712 = vmatprep.subr.mxu0 0.0
  %1713 = vmatpush1.msra.mxu0 0.0
  %1714 = vmatprep.subr.mxu0 0.0
  %1715 = vmatpush1.msra.mxu0 0.0
  %1716 = vmatprep.subr.mxu0 0.0
  %1717 = vmatpush1.msra.mxu0 0.0
  %1718 = vmatprep.subr.mxu0 0.0
  %1719 = vmatpush1.msra.mxu0 0.0
  %1720 = vmatprep.subr.mxu0 0.0
  %1721 = vmatpush1.msra.mxu0 0.0
  %1722 = vmatprep.subr.mxu0 0.0
  %1723 = vmatpush1.msra.mxu0 0.0
  %1724 = vmatprep.subr.mxu0 0.0
  %1725 = vmatpush1.msra.mxu0 0.0
  %1726 = vmatprep.subr.mxu0 0.0
  %1727 = vmatpush1.msra.mxu0 0.0
  %1728 = vmatprep.subr.mxu0 0.0
  %1729 = vmatpush1.msra.mxu0 0.0
  %1730 = vmatprep.subr.mxu0 0.0
  %1731 = vmatpush1.msra.mxu0 0.0
  %1732 = vmatprep.subr.mxu0 0.0
  %1733 = vmatpush1.msra.mxu0 0.0
  %1734 = vmatprep.subr.mxu0 0.0
  %1735 = vmatpush1.msra.mxu0 0.0
  %1736 = vmatprep.subr.mxu0 0.0
  %1737 = vmatpush1.msra.mxu0 0.0
  %1738 = vmatprep.subr.mxu0 0.0
  %1739 = vmatpush1.msra.mxu0 0.0
  %1740 = vmatprep.subr.mxu0 0.0
  %1741 = vmatpush1.msra.mxu0 0.0
  %1742 = vmatprep.subr.mxu0 0.0
  %1743 = vmatpush1.msra.mxu0 0.0
  %1744 = vmatprep.subr.mxu0 0.0
  %1745 = vmatpush1.msra.mxu0 0.0
  %1746 = vmatprep.subr.mxu0 0.0
  %1747 = vmatpush1.msra.mxu0 0.0
  %1748 = vmatprep.subr.mxu0 0.0
  %1749 = vmatpush1.msra.mxu0 0.0
  %1750 = vmatprep.subr.mxu0 0.0
  %1751 = vmatpush1.msra.mxu0 0.0
  %1752 = vmatprep.mubr.f32.mxu0 0.0
  %1753 = vmatmul.mubr.f32.gmra.mrb[0].mxu0 %v1686
  %v1754 = vpop.f32.mrb[0].mxu0
  %v1755 = vadd.f32 0.0, %v1754
  %v1756 = vpop.f32.mrb[0].mxu0
  %1757 = vdwg.mxu0
  %v1759 = vsel %vm337, %v1684, 0
  %1761 = vmatprep.subr.mxu0 0.0
  %1762 = vmatpush1.msra.mxu0 %v1508
  %1763 = vmatprep.subr.mxu0 0.0
  %1764 = vmatpush1.msra.mxu0 0.0
  %1765 = vmatprep.subr.mxu0 0.0
  %1766 = vmatpush1.msra.mxu0 0.0
  %1767 = vmatprep.subr.mxu0 0.0
  %1768 = vmatpush1.msra.mxu0 0.0
  %1769 = vmatprep.subr.mxu0 0.0
  %1770 = vmatpush1.msra.mxu0 0.0
  %1771 = vmatprep.subr.mxu0 0.0
  %1772 = vmatpush1.msra.mxu0 0.0
  %1773 = vmatprep.subr.mxu0 0.0
  %1774 = vmatpush1.msra.mxu0 0.0
  %1775 = vmatprep.subr.mxu0 0.0
  %1776 = vmatpush1.msra.mxu0 0.0
  %1777 = vmatprep.subr.mxu0 0.0
  %1778 = vmatpush1.msra.mxu0 0.0
  %1779 = vmatprep.subr.mxu0 0.0
  %1780 = vmatpush1.msra.mxu0 0.0
  %1781 = vmatprep.subr.mxu0 0.0
  %1782 = vmatpush1.msra.mxu0 0.0
  %1783 = vmatprep.subr.mxu0 0.0
  %1784 = vmatpush1.msra.mxu0 0.0
  %1785 = vmatprep.subr.mxu0 0.0
  %1786 = vmatpush1.msra.mxu0 0.0
  %1787 = vmatprep.subr.mxu0 0.0
  %1788 = vmatpush1.msra.mxu0 0.0
  %1789 = vmatprep.subr.mxu0 0.0
  %1790 = vmatpush1.msra.mxu0 0.0
  %1791 = vmatprep.subr.mxu0 0.0
  %1792 = vmatpush1.msra.mxu0 0.0
  %1793 = vmatprep.subr.mxu0 0.0
  %1794 = vmatpush1.msra.mxu0 0.0
  %1795 = vmatprep.subr.mxu0 0.0
  %1796 = vmatpush1.msra.mxu0 0.0
  %1797 = vmatprep.subr.mxu0 0.0
  %1798 = vmatpush1.msra.mxu0 0.0
  %1799 = vmatprep.subr.mxu0 0.0
  %1800 = vmatpush1.msra.mxu0 0.0
  %1801 = vmatprep.subr.mxu0 0.0
  %1802 = vmatpush1.msra.mxu0 0.0
  %1803 = vmatprep.subr.mxu0 0.0
  %1804 = vmatpush1.msra.mxu0 0.0
  %1805 = vmatprep.subr.mxu0 0.0
  %1806 = vmatpush1.msra.mxu0 0.0
  %1807 = vmatprep.subr.mxu0 0.0
  %1808 = vmatpush1.msra.mxu0 0.0
  %1809 = vmatprep.subr.mxu0 0.0
  %1810 = vmatpush1.msra.mxu0 0.0
  %1811 = vmatprep.subr.mxu0 0.0
  %1812 = vmatpush1.msra.mxu0 0.0
  %1813 = vmatprep.subr.mxu0 0.0
  %1814 = vmatpush1.msra.mxu0 0.0
  %1815 = vmatprep.subr.mxu0 0.0
  %1816 = vmatpush1.msra.mxu0 0.0
  %1817 = vmatprep.subr.mxu0 0.0
  %1818 = vmatpush1.msra.mxu0 0.0
  %1819 = vmatprep.subr.mxu0 0.0
  %1820 = vmatpush1.msra.mxu0 0.0
  %1821 = vmatprep.subr.mxu0 0.0
  %1822 = vmatpush1.msra.mxu0 0.0
  %1823 = vmatprep.subr.mxu0 0.0
  %1824 = vmatpush1.msra.mxu0 0.0
  %1825 = vmatprep.mubr.f32.mxu0 0.0
  %1826 = vmatmul.mubr.f32.gmra.mrb[0].mxu0 %v1759
  %v1827 = vpop.f32.mrb[0].mxu0
  %v1828 = vadd.f32 0.0, %v1827
  %v1829 = vpop.f32.mrb[0].mxu0
  %1830 = vdwg.mxu0
  %v1831 = vlaneseq
  %v1832 = vshrl.u32 %v1831, 7
  %v1833 = vsub.s32 0, %v1832
  %v1834 = vrot.slane %v61, %v1833
  %v1837 = vrot.slane %v1828, 7
  %v1838 = vsel %vm491, %v1837, %v1755
  %v1839 = vsel %vm156, %v1838, 0
  %1841 = vmatprep.subr.mxu0 0.0
  %1842 = vmatpush1.msra.mxu0 %v33
  %1843 = vmatprep.subr.mxu0 0.0
  %1844 = vmatpush1.msra.mxu0 %v34
  %1845 = vmatprep.subr.mxu0 0.0
  %1846 = vmatpush1.msra.mxu0 %v35
  %1847 = vmatprep.subr.mxu0 0.0
  %1848 = vmatpush1.msra.mxu0 %v36
  %1849 = vmatprep.subr.mxu0 0.0
  %1850 = vmatpush1.msra.mxu0 0.0
  %1851 = vmatprep.subr.mxu0 0.0
  %1852 = vmatpush1.msra.mxu0 0.0
  %1853 = vmatprep.subr.mxu0 0.0
  %1854 = vmatpush1.msra.mxu0 0.0
  %1855 = vmatprep.subr.mxu0 0.0
  %1856 = vmatpush1.msra.mxu0 0.0
  %1857 = vmatprep.subr.mxu0 0.0
  %1858 = vmatpush1.msra.mxu0 0.0
  %1859 = vmatprep.subr.mxu0 0.0
  %1860 = vmatpush1.msra.mxu0 0.0
  %1861 = vmatprep.subr.mxu0 0.0
  %1862 = vmatpush1.msra.mxu0 0.0
  %1863 = vmatprep.subr.mxu0 0.0
  %1864 = vmatpush1.msra.mxu0 0.0
  %1865 = vmatprep.subr.mxu0 0.0
  %1866 = vmatpush1.msra.mxu0 0.0
  %1867 = vmatprep.subr.mxu0 0.0
  %1868 = vmatpush1.msra.mxu0 0.0
  %1869 = vmatprep.subr.mxu0 0.0
  %1870 = vmatpush1.msra.mxu0 0.0
  %1871 = vmatprep.subr.mxu0 0.0
  %1872 = vmatpush1.msra.mxu0 0.0
  %1873 = vmatprep.subr.mxu0 0.0
  %1874 = vmatpush1.msra.mxu0 0.0
  %1875 = vmatprep.subr.mxu0 0.0
  %1876 = vmatpush1.msra.mxu0 0.0
  %1877 = vmatprep.subr.mxu0 0.0
  %1878 = vmatpush1.msra.mxu0 0.0
  %1879 = vmatprep.subr.mxu0 0.0
  %1880 = vmatpush1.msra.mxu0 0.0
  %1881 = vmatprep.subr.mxu0 0.0
  %1882 = vmatpush1.msra.mxu0 0.0
  %1883 = vmatprep.subr.mxu0 0.0
  %1884 = vmatpush1.msra.mxu0 0.0
  %1885 = vmatprep.subr.mxu0 0.0
  %1886 = vmatpush1.msra.mxu0 0.0
  %1887 = vmatprep.subr.mxu0 0.0
  %1888 = vmatpush1.msra.mxu0 0.0
  %1889 = vmatprep.subr.mxu0 0.0
  %1890 = vmatpush1.msra.mxu0 0.0
  %1891 = vmatprep.subr.mxu0 0.0
  %1892 = vmatpush1.msra.mxu0 0.0
  %1893 = vmatprep.subr.mxu0 0.0
  %1894 = vmatpush1.msra.mxu0 0.0
  %1895 = vmatprep.subr.mxu0 0.0
  %1896 = vmatpush1.msra.mxu0 0.0
  %1897 = vmatprep.subr.mxu0 0.0
  %1898 = vmatpush1.msra.mxu0 0.0
  %1899 = vmatprep.subr.mxu0 0.0
  %1900 = vmatpush1.msra.mxu0 0.0
  %1901 = vmatprep.subr.mxu0 0.0
  %1902 = vmatpush1.msra.mxu0 0.0
  %1903 = vmatprep.subr.mxu0 0.0
  %1904 = vmatpush1.msra.mxu0 0.0
  %1905 = vmatprep.mubr.f32.mxu0 0.0
  %1906 = vmatmul.mubr.f32.gmra.mrb[0].mxu0 %v1839
  %v1907 = vpop.f32.mrb[0].mxu0
  %v1908 = vadd.f32 %v1834, %v1907
  %v1909 = vpop.f32.mrb[0].mxu0
  %1910 = vdwg.mxu0
  %v1911 = vmax.f32 %v1908, 0.0
  %v1912 = vadd.f32 %v1911, 0.0
  %v1913 = vlaneseq
  %v1914 = vshrl.u32 %v1913, 7
  %v1915 = vsub.s32 0, %v1914
  %v1916 = vrot.slane %v835, %v1915
  %1917 = vrot.lane.b32.xlu0 %v1916, 96
  %v1918 = vpop.permute.xlu0 %1917
  %v1919 = vsel %vm156, %v1918, 0
  %1921 = vmatprep.subr.mxu0 0.0
  %1922 = vmatpush1.xpose.msra.mxu0 %v161
  %1923 = vmatprep.subr.mxu0 0.0
  %1924 = vmatpush1.xpose.msra.mxu0 0.0
  %1925 = vmatprep.subr.mxu0 0.0
  %1926 = vmatpush1.xpose.msra.mxu0 0.0
  %1927 = vmatprep.subr.mxu0 0.0
  %1928 = vmatpush1.xpose.msra.mxu0 0.0
  %1929 = vmatprep.subr.mxu0 0.0
  %1930 = vmatpush1.xpose.msra.mxu0 0.0
  %1931 = vmatprep.subr.mxu0 0.0
  %1932 = vmatpush1.xpose.msra.mxu0 0.0
  %1933 = vmatprep.subr.mxu0 0.0
  %1934 = vmatpush1.xpose.msra.mxu0 0.0
  %1935 = vmatprep.subr.mxu0 0.0
  %1936 = vmatpush1.xpose.msra.mxu0 0.0
  %1937 = vmatprep.subr.mxu0 0.0
  %1938 = vmatpush1.xpose.msra.mxu0 0.0
  %1939 = vmatprep.subr.mxu0 0.0
  %1940 = vmatpush1.xpose.msra.mxu0 0.0
  %1941 = vmatprep.subr.mxu0 0.0
  %1942 = vmatpush1.xpose.msra.mxu0 0.0
  %1943 = vmatprep.subr.mxu0 0.0
  %1944 = vmatpush1.xpose.msra.mxu0 0.0
  %1945 = vmatprep.subr.mxu0 0.0
  %1946 = vmatpush1.xpose.msra.mxu0 0.0
  %1947 = vmatprep.subr.mxu0 0.0
  %1948 = vmatpush1.xpose.msra.mxu0 0.0
  %1949 = vmatprep.subr.mxu0 0.0
  %1950 = vmatpush1.xpose.msra.mxu0 0.0
  %1951 = vmatprep.subr.mxu0 0.0
  %1952 = vmatpush1.xpose.msra.mxu0 0.0
  %1953 = vmatprep.subr.mxu0 0.0
  %1954 = vmatpush1.xpose.msra.mxu0 0.0
  %1955 = vmatprep.subr.mxu0 0.0
  %1956 = vmatpush1.xpose.msra.mxu0 0.0
  %1957 = vmatprep.subr.mxu0 0.0
  %1958 = vmatpush1.xpose.msra.mxu0 0.0
  %1959 = vmatprep.subr.mxu0 0.0
  %1960 = vmatpush1.xpose.msra.mxu0 0.0
  %1961 = vmatprep.subr.mxu0 0.0
  %1962 = vmatpush1.xpose.msra.mxu0 0.0
  %1963 = vmatprep.subr.mxu0 0.0
  %1964 = vmatpush1.xpose.msra.mxu0 0.0
  %1965 = vmatprep.subr.mxu0 0.0
  %1966 = vmatpush1.xpose.msra.mxu0 0.0
  %1967 = vmatprep.subr.mxu0 0.0
  %1968 = vmatpush1.xpose.msra.mxu0 0.0
  %1969 = vmatprep.subr.mxu0 0.0
  %1970 = vmatpush1.xpose.msra.mxu0 0.0
  %1971 = vmatprep.subr.mxu0 0.0
  %1972 = vmatpush1.xpose.msra.mxu0 0.0
  %1973 = vmatprep.subr.mxu0 0.0
  %1974 = vmatpush1.xpose.msra.mxu0 0.0
  %1975 = vmatprep.subr.mxu0 0.0
  %1976 = vmatpush1.xpose.msra.mxu0 0.0
  %1977 = vmatprep.subr.mxu0 0.0
  %1978 = vmatpush1.xpose.msra.mxu0 0.0
  %1979 = vmatprep.subr.mxu0 0.0
  %1980 = vmatpush1.xpose.msra.mxu0 0.0
  %1981 = vmatprep.subr.mxu0 0.0
  %1982 = vmatpush1.xpose.msra.mxu0 0.0
  %1983 = vmatprep.subr.mxu0 0.0
  %1984 = vmatpush1.xpose.msra.mxu0 0.0
  %1985 = vmatprep.mubr.f32.mxu0 0.0
  %1986 = vmatmul.mubr.f32.gmra.mrb[0].mxu0 %v1919
  %v1987 = vpop.f32.mrb[0].mxu0
  %v1988 = vadd.f32 0.0, %v1987
  %v1989 = vpop.f32.mrb[0].mxu0
  %1990 = vdwg.mxu0
  %v1991 = vlaneseq
  %v1992 = vshrl.u32 %v1991, 7
  %v1993 = vsub.s32 0, %v1992
  %v1994 = vrot.slane %v842, %v1993
  %1995 = vrot.lane.b32.xlu0 %v1994, 96
  %v1996 = vpop.permute.xlu0 %1995
  %v1997 = vsel %vm156, %v1996, 0
  %1999 = vmatprep.subr.mxu0 0.0
  %2000 = vmatpush1.xpose.msra.mxu0 %v234
  %2001 = vmatprep.subr.mxu0 0.0
  %2002 = vmatpush1.xpose.msra.mxu0 0.0
  %2003 = vmatprep.subr.mxu0 0.0
  %2004 = vmatpush1.xpose.msra.mxu0 0.0
  %2005 = vmatprep.subr.mxu0 0.0
  %2006 = vmatpush1.xpose.msra.mxu0 0.0
  %2007 = vmatprep.subr.mxu0 0.0
  %2008 = vmatpush1.xpose.msra.mxu0 0.0
  %2009 = vmatprep.subr.mxu0 0.0
  %2010 = vmatpush1.xpose.msra.mxu0 0.0
  %2011 = vmatprep.subr.mxu0 0.0
  %2012 = vmatpush1.xpose.msra.mxu0 0.0
  %2013 = vmatprep.subr.mxu0 0.0
  %2014 = vmatpush1.xpose.msra.mxu0 0.0
  %2015 = vmatprep.subr.mxu0 0.0
  %2016 = vmatpush1.xpose.msra.mxu0 0.0
  %2017 = vmatprep.subr.mxu0 0.0
  %2018 = vmatpush1.xpose.msra.mxu0 0.0
  %2019 = vmatprep.subr.mxu0 0.0
  %2020 = vmatpush1.xpose.msra.mxu0 0.0
  %2021 = vmatprep.subr.mxu0 0.0
  %2022 = vmatpush1.xpose.msra.mxu0 0.0
  %2023 = vmatprep.subr.mxu0 0.0
  %2024 = vmatpush1.xpose.msra.mxu0 0.0
  %2025 = vmatprep.subr.mxu0 0.0
  %2026 = vmatpush1.xpose.msra.mxu0 0.0
  %2027 = vmatprep.subr.mxu0 0.0
  %2028 = vmatpush1.xpose.msra.mxu0 0.0
  %2029 = vmatprep.subr.mxu0 0.0
  %2030 = vmatpush1.xpose.msra.mxu0 0.0
  %2031 = vmatprep.subr.mxu0 0.0
  %2032 = vmatpush1.xpose.msra.mxu0 0.0
  %2033 = vmatprep.subr.mxu0 0.0
  %2034 = vmatpush1.xpose.msra.mxu0 0.0
  %2035 = vmatprep.subr.mxu0 0.0
  %2036 = vmatpush1.xpose.msra.mxu0 0.0
  %2037 = vmatprep.subr.mxu0 0.0
  %2038 = vmatpush1.xpose.msra.mxu0 0.0
  %2039 = vmatprep.subr.mxu0 0.0
  %2040 = vmatpush1.xpose.msra.mxu0 0.0
  %2041 = vmatprep.subr.mxu0 0.0
  %2042 = vmatpush1.xpose.msra.mxu0 0.0
  %2043 = vmatprep.subr.mxu0 0.0
  %2044 = vmatpush1.xpose.msra.mxu0 0.0
  %2045 = vmatprep.subr.mxu0 0.0
  %2046 = vmatpush1.xpose.msra.mxu0 0.0
  %2047 = vmatprep.subr.mxu0 0.0
  %2048 = vmatpush1.xpose.msra.mxu0 0.0
  %2049 = vmatprep.subr.mxu0 0.0
  %2050 = vmatpush1.xpose.msra.mxu0 0.0
  %2051 = vmatprep.subr.mxu0 0.0
  %2052 = vmatpush1.xpose.msra.mxu0 0.0
  %2053 = vmatprep.subr.mxu0 0.0
  %2054 = vmatpush1.xpose.msra.mxu0 0.0
  %2055 = vmatprep.subr.mxu0 0.0
  %2056 = vmatpush1.xpose.msra.mxu0 0.0
  %2057 = vmatprep.subr.mxu0 0.0
  %2058 = vmatpush1.xpose.msra.mxu0 0.0
  %2059 = vmatprep.subr.mxu0 0.0
  %2060 = vmatpush1.xpose.msra.mxu0 0.0
  %2061 = vmatprep.subr.mxu0 0.0
  %2062 = vmatpush1.xpose.msra.mxu0 0.0
  %2063 = vmatprep.mubr.f32.mxu0 0.0
  %2064 = vmatmul.mubr.f32.gmra.mrb[0].mxu0 %v1997
  %v2065 = vpop.f32.mrb[0].mxu0
  %v2066 = vadd.f32 0.0, %v2065
  %v2067 = vpop.f32.mrb[0].mxu0
  %2068 = vdwg.mxu0
  %v2069 = vmul.f32 %v1988, 0.17677669
  %v2070 = vmul.f32 %v2066, 0.17677669
  %v2071 = vsel %vm308, %v2069, -1e+30
  %v2072 = vsel %vm309, %v2070, -1e+30
  %v2073 = vsel %vm312, %v2071, -inf
  %2074 = vmax.xlane.f32.xlu0 %v2073
  %v2075 = vpop.xlane.xlu0 %2074
  %v2076 = vsel %vm312, %v2072, -inf
  %2077 = vmax.xlane.f32.xlu0 %v2076
  %v2078 = vpop.xlane.xlu0 %2077
  %v2079 = vsub.f32 %v2071, %v2075
  %v2080 = vsub.f32 %v2072, %v2078
  %v2081 = vmul.f32 %v2079, 1.442695
  %v2082 = vpow.pop %v2081
  %v2083 = vmul.f32 %v2080, 1.442695
  %v2084 = vpow.pop %v2083
  %v2085 = vsel %vm312, %v2082, 0.0
  %2086 = vadd.xlane.f32.xlu0 %v2085
  %v2087 = vpop.xlane.xlu0 %2086
  %v2088 = vsel %vm312, %v2084, 0.0
  %2089 = vadd.xlane.f32.xlu0 %v2088
  %v2090 = vpop.xlane.xlu0 %2089
  %v2091 = vadd.f32 %v2087, 1e-09
  %v2092 = vadd.f32 %v2090, 1e-09
  %v2093 = vrcp.pop %v2091
  %v2094 = vmul.f32 %v2082, %v2093
  %v2095 = vrcp.pop %v2092
  %v2096 = vmul.f32 %v2084, %v2095
  %v2098 = vsel %vm337, %v2094, 0
  %2100 = vmatprep.subr.mxu0 0.0
  %2101 = vmatpush1.msra.mxu0 %v154
  %2102 = vmatprep.subr.mxu0 0.0
  %2103 = vmatpush1.msra.mxu0 0.0
  %2104 = vmatprep.subr.mxu0 0.0
  %2105 = vmatpush1.msra.mxu0 0.0
  %2106 = vmatprep.subr.mxu0 0.0
  %2107 = vmatpush1.msra.mxu0 0.0
  %2108 = vmatprep.subr.mxu0 0.0
  %2109 = vmatpush1.msra.mxu0 0.0
  %2110 = vmatprep.subr.mxu0 0.0
  %2111 = vmatpush1.msra.mxu0 0.0
  %2112 = vmatprep.subr.mxu0 0.0
  %2113 = vmatpush1.msra.mxu0 0.0
  %2114 = vmatprep.subr.mxu0 0.0
  %2115 = vmatpush1.msra.mxu0 0.0
  %2116 = vmatprep.subr.mxu0 0.0
  %2117 = vmatpush1.msra.mxu0 0.0
  %2118 = vmatprep.subr.mxu0 0.0
  %2119 = vmatpush1.msra.mxu0 0.0
  %2120 = vmatprep.subr.mxu0 0.0
  %2121 = vmatpush1.msra.mxu0 0.0
  %2122 = vmatprep.subr.mxu0 0.0
  %2123 = vmatpush1.msra.mxu0 0.0
  %2124 = vmatprep.subr.mxu0 0.0
  %2125 = vmatpush1.msra.mxu0 0.0
  %2126 = vmatprep.subr.mxu0 0.0
  %2127 = vmatpush1.msra.mxu0 0.0
  %2128 = vmatprep.subr.mxu0 0.0
  %2129 = vmatpush1.msra.mxu0 0.0
  %2130 = vmatprep.subr.mxu0 0.0
  %2131 = vmatpush1.msra.mxu0 0.0
  %2132 = vmatprep.subr.mxu0 0.0
  %2133 = vmatpush1.msra.mxu0 0.0
  %2134 = vmatprep.subr.mxu0 0.0
  %2135 = vmatpush1.msra.mxu0 0.0
  %2136 = vmatprep.subr.mxu0 0.0
  %2137 = vmatpush1.msra.mxu0 0.0
  %2138 = vmatprep.subr.mxu0 0.0
  %2139 = vmatpush1.msra.mxu0 0.0
  %2140 = vmatprep.subr.mxu0 0.0
  %2141 = vmatpush1.msra.mxu0 0.0
  %2142 = vmatprep.subr.mxu0 0.0
  %2143 = vmatpush1.msra.mxu0 0.0
  %2144 = vmatprep.subr.mxu0 0.0
  %2145 = vmatpush1.msra.mxu0 0.0
  %2146 = vmatprep.subr.mxu0 0.0
  %2147 = vmatpush1.msra.mxu0 0.0
  %2148 = vmatprep.subr.mxu0 0.0
  %2149 = vmatpush1.msra.mxu0 0.0
  %2150 = vmatprep.subr.mxu0 0.0
  %2151 = vmatpush1.msra.mxu0 0.0
  %2152 = vmatprep.subr.mxu0 0.0
  %2153 = vmatpush1.msra.mxu0 0.0
  %2154 = vmatprep.subr.mxu0 0.0
  %2155 = vmatpush1.msra.mxu0 0.0
  %2156 = vmatprep.subr.mxu0 0.0
  %2157 = vmatpush1.msra.mxu0 0.0
  %2158 = vmatprep.subr.mxu0 0.0
  %2159 = vmatpush1.msra.mxu0 0.0
  %2160 = vmatprep.subr.mxu0 0.0
  %2161 = vmatpush1.msra.mxu0 0.0
  %2162 = vmatprep.subr.mxu0 0.0
  %2163 = vmatpush1.msra.mxu0 0.0
  %2164 = vmatprep.mubr.f32.mxu0 0.0
  %2165 = vmatmul.mubr.f32.gmra.mrb[0].mxu0 %v2098
  %v2166 = vpop.f32.mrb[0].mxu0
  %v2167 = vadd.f32 0.0, %v2166
  %v2168 = vpop.f32.mrb[0].mxu0
  %2169 = vdwg.mxu0
  %v2171 = vsel %vm337, %v2096, 0
  %2173 = vmatprep.subr.mxu0 0.0
  %2174 = vmatpush1.msra.mxu0 %v155
  %2175 = vmatprep.subr.mxu0 0.0
  %2176 = vmatpush1.msra.mxu0 0.0
  %2177 = vmatprep.subr.mxu0 0.0
  %2178 = vmatpush1.msra.mxu0 0.0
  %2179 = vmatprep.subr.mxu0 0.0
  %2180 = vmatpush1.msra.mxu0 0.0
  %2181 = vmatprep.subr.mxu0 0.0
  %2182 = vmatpush1.msra.mxu0 0.0
  %2183 = vmatprep.subr.mxu0 0.0
  %2184 = vmatpush1.msra.mxu0 0.0
  %2185 = vmatprep.subr.mxu0 0.0
  %2186 = vmatpush1.msra.mxu0 0.0
  %2187 = vmatprep.subr.mxu0 0.0
  %2188 = vmatpush1.msra.mxu0 0.0
  %2189 = vmatprep.subr.mxu0 0.0
  %2190 = vmatpush1.msra.mxu0 0.0
  %2191 = vmatprep.subr.mxu0 0.0
  %2192 = vmatpush1.msra.mxu0 0.0
  %2193 = vmatprep.subr.mxu0 0.0
  %2194 = vmatpush1.msra.mxu0 0.0
  %2195 = vmatprep.subr.mxu0 0.0
  %2196 = vmatpush1.msra.mxu0 0.0
  %2197 = vmatprep.subr.mxu0 0.0
  %2198 = vmatpush1.msra.mxu0 0.0
  %2199 = vmatprep.subr.mxu0 0.0
  %2200 = vmatpush1.msra.mxu0 0.0
  %2201 = vmatprep.subr.mxu0 0.0
  %2202 = vmatpush1.msra.mxu0 0.0
  %2203 = vmatprep.subr.mxu0 0.0
  %2204 = vmatpush1.msra.mxu0 0.0
  %2205 = vmatprep.subr.mxu0 0.0
  %2206 = vmatpush1.msra.mxu0 0.0
  %2207 = vmatprep.subr.mxu0 0.0
  %2208 = vmatpush1.msra.mxu0 0.0
  %2209 = vmatprep.subr.mxu0 0.0
  %2210 = vmatpush1.msra.mxu0 0.0
  %2211 = vmatprep.subr.mxu0 0.0
  %2212 = vmatpush1.msra.mxu0 0.0
  %2213 = vmatprep.subr.mxu0 0.0
  %2214 = vmatpush1.msra.mxu0 0.0
  %2215 = vmatprep.subr.mxu0 0.0
  %2216 = vmatpush1.msra.mxu0 0.0
  %2217 = vmatprep.subr.mxu0 0.0
  %2218 = vmatpush1.msra.mxu0 0.0
  %2219 = vmatprep.subr.mxu0 0.0
  %2220 = vmatpush1.msra.mxu0 0.0
  %2221 = vmatprep.subr.mxu0 0.0
  %2222 = vmatpush1.msra.mxu0 0.0
  %2223 = vmatprep.subr.mxu0 0.0
  %2224 = vmatpush1.msra.mxu0 0.0
  %2225 = vmatprep.subr.mxu0 0.0
  %2226 = vmatpush1.msra.mxu0 0.0
  %2227 = vmatprep.subr.mxu0 0.0
  %2228 = vmatpush1.msra.mxu0 0.0
  %2229 = vmatprep.subr.mxu0 0.0
  %2230 = vmatpush1.msra.mxu0 0.0
  %2231 = vmatprep.subr.mxu0 0.0
  %2232 = vmatpush1.msra.mxu0 0.0
  %2233 = vmatprep.subr.mxu0 0.0
  %2234 = vmatpush1.msra.mxu0 0.0
  %2235 = vmatprep.subr.mxu0 0.0
  %2236 = vmatpush1.msra.mxu0 0.0
  %2237 = vmatprep.mubr.f32.mxu0 0.0
  %2238 = vmatmul.mubr.f32.gmra.mrb[0].mxu0 %v2171
  %v2239 = vpop.f32.mrb[0].mxu0
  %v2240 = vadd.f32 0.0, %v2239
  %v2241 = vpop.f32.mrb[0].mxu0
  %2242 = vdwg.mxu0
  %v2243 = vlaneseq
  %v2244 = vshrl.u32 %v2243, 7
  %v2245 = vsub.s32 0, %v2244
  %v2246 = vrot.slane %v2167, %v2245
  %v2247 = vlaneseq
  %v2248 = vshrl.u32 %v2247, 7
  %v2249 = vsub.s32 0, %v2248
  %v2250 = vrot.slane %v2240, %v2249
  %v2251 = vmul.f32 %v644, %v2246
  %v2252 = vmul.f32 %v649, %v2250
  %v2254 = vsel %vm156, %v2251, 0
  %2256 = vmatprep.subr.mxu0 0.0
  %2257 = vmatpush1.xpose.msra.mxu0 %v1177
  %2258 = vmatprep.subr.mxu0 0.0
  %2259 = vmatpush1.xpose.msra.mxu0 0.0
  %2260 = vmatprep.subr.mxu0 0.0
  %2261 = vmatpush1.xpose.msra.mxu0 0.0
  %2262 = vmatprep.subr.mxu0 0.0
  %2263 = vmatpush1.xpose.msra.mxu0 0.0
  %2264 = vmatprep.subr.mxu0 0.0
  %2265 = vmatpush1.xpose.msra.mxu0 0.0
  %2266 = vmatprep.subr.mxu0 0.0
  %2267 = vmatpush1.xpose.msra.mxu0 0.0
  %2268 = vmatprep.subr.mxu0 0.0
  %2269 = vmatpush1.xpose.msra.mxu0 0.0
  %2270 = vmatprep.subr.mxu0 0.0
  %2271 = vmatpush1.xpose.msra.mxu0 0.0
  %2272 = vmatprep.subr.mxu0 0.0
  %2273 = vmatpush1.xpose.msra.mxu0 0.0
  %2274 = vmatprep.subr.mxu0 0.0
  %2275 = vmatpush1.xpose.msra.mxu0 0.0
  %2276 = vmatprep.subr.mxu0 0.0
  %2277 = vmatpush1.xpose.msra.mxu0 0.0
  %2278 = vmatprep.subr.mxu0 0.0
  %2279 = vmatpush1.xpose.msra.mxu0 0.0
  %2280 = vmatprep.subr.mxu0 0.0
  %2281 = vmatpush1.xpose.msra.mxu0 0.0
  %2282 = vmatprep.subr.mxu0 0.0
  %2283 = vmatpush1.xpose.msra.mxu0 0.0
  %2284 = vmatprep.subr.mxu0 0.0
  %2285 = vmatpush1.xpose.msra.mxu0 0.0
  %2286 = vmatprep.subr.mxu0 0.0
  %2287 = vmatpush1.xpose.msra.mxu0 0.0
  %2288 = vmatprep.subr.mxu0 0.0
  %2289 = vmatpush1.xpose.msra.mxu0 0.0
  %2290 = vmatprep.subr.mxu0 0.0
  %2291 = vmatpush1.xpose.msra.mxu0 0.0
  %2292 = vmatprep.subr.mxu0 0.0
  %2293 = vmatpush1.xpose.msra.mxu0 0.0
  %2294 = vmatprep.subr.mxu0 0.0
  %2295 = vmatpush1.xpose.msra.mxu0 0.0
  %2296 = vmatprep.subr.mxu0 0.0
  %2297 = vmatpush1.xpose.msra.mxu0 0.0
  %2298 = vmatprep.subr.mxu0 0.0
  %2299 = vmatpush1.xpose.msra.mxu0 0.0
  %2300 = vmatprep.subr.mxu0 0.0
  %2301 = vmatpush1.xpose.msra.mxu0 0.0
  %2302 = vmatprep.subr.mxu0 0.0
  %2303 = vmatpush1.xpose.msra.mxu0 0.0
  %2304 = vmatprep.subr.mxu0 0.0
  %2305 = vmatpush1.xpose.msra.mxu0 0.0
  %2306 = vmatprep.subr.mxu0 0.0
  %2307 = vmatpush1.xpose.msra.mxu0 0.0
  %2308 = vmatprep.subr.mxu0 0.0
  %2309 = vmatpush1.xpose.msra.mxu0 0.0
  %2310 = vmatprep.subr.mxu0 0.0
  %2311 = vmatpush1.xpose.msra.mxu0 0.0
  %2312 = vmatprep.subr.mxu0 0.0
  %2313 = vmatpush1.xpose.msra.mxu0 0.0
  %2314 = vmatprep.subr.mxu0 0.0
  %2315 = vmatpush1.xpose.msra.mxu0 0.0
  %2316 = vmatprep.subr.mxu0 0.0
  %2317 = vmatpush1.xpose.msra.mxu0 0.0
  %2318 = vmatprep.subr.mxu0 0.0
  %2319 = vmatpush1.xpose.msra.mxu0 0.0
  %2320 = vmatprep.mubr.f32.mxu0 0.0
  %2321 = vmatmul.mubr.f32.gmra.mrb[0].mxu0 %v2254
  %v2322 = vpop.f32.mrb[0].mxu0
  %v2323 = vadd.f32 0.0, %v2322
  %v2324 = vpop.f32.mrb[0].mxu0
  %2325 = vdwg.mxu0
  %v2327 = vsel %vm156, %v2252, 0
  %2329 = vmatprep.subr.mxu0 0.0
  %2330 = vmatpush1.xpose.msra.mxu0 %v1255
  %2331 = vmatprep.subr.mxu0 0.0
  %2332 = vmatpush1.xpose.msra.mxu0 0.0
  %2333 = vmatprep.subr.mxu0 0.0
  %2334 = vmatpush1.xpose.msra.mxu0 0.0
  %2335 = vmatprep.subr.mxu0 0.0
  %2336 = vmatpush1.xpose.msra.mxu0 0.0
  %2337 = vmatprep.subr.mxu0 0.0
  %2338 = vmatpush1.xpose.msra.mxu0 0.0
  %2339 = vmatprep.subr.mxu0 0.0
  %2340 = vmatpush1.xpose.msra.mxu0 0.0
  %2341 = vmatprep.subr.mxu0 0.0
  %2342 = vmatpush1.xpose.msra.mxu0 0.0
  %2343 = vmatprep.subr.mxu0 0.0
  %2344 = vmatpush1.xpose.msra.mxu0 0.0
  %2345 = vmatprep.subr.mxu0 0.0
  %2346 = vmatpush1.xpose.msra.mxu0 0.0
  %2347 = vmatprep.subr.mxu0 0.0
  %2348 = vmatpush1.xpose.msra.mxu0 0.0
  %2349 = vmatprep.subr.mxu0 0.0
  %2350 = vmatpush1.xpose.msra.mxu0 0.0
  %2351 = vmatprep.subr.mxu0 0.0
  %2352 = vmatpush1.xpose.msra.mxu0 0.0
  %2353 = vmatprep.subr.mxu0 0.0
  %2354 = vmatpush1.xpose.msra.mxu0 0.0
  %2355 = vmatprep.subr.mxu0 0.0
  %2356 = vmatpush1.xpose.msra.mxu0 0.0
  %2357 = vmatprep.subr.mxu0 0.0
  %2358 = vmatpush1.xpose.msra.mxu0 0.0
  %2359 = vmatprep.subr.mxu0 0.0
  %2360 = vmatpush1.xpose.msra.mxu0 0.0
  %2361 = vmatprep.subr.mxu0 0.0
  %2362 = vmatpush1.xpose.msra.mxu0 0.0
  %2363 = vmatprep.subr.mxu0 0.0
  %2364 = vmatpush1.xpose.msra.mxu0 0.0
  %2365 = vmatprep.subr.mxu0 0.0
  %2366 = vmatpush1.xpose.msra.mxu0 0.0
  %2367 = vmatprep.subr.mxu0 0.0
  %2368 = vmatpush1.xpose.msra.mxu0 0.0
  %2369 = vmatprep.subr.mxu0 0.0
  %2370 = vmatpush1.xpose.msra.mxu0 0.0
  %2371 = vmatprep.subr.mxu0 0.0
  %2372 = vmatpush1.xpose.msra.mxu0 0.0
  %2373 = vmatprep.subr.mxu0 0.0
  %2374 = vmatpush1.xpose.msra.mxu0 0.0
  %2375 = vmatprep.subr.mxu0 0.0
  %2376 = vmatpush1.xpose.msra.mxu0 0.0
  %2377 = vmatprep.subr.mxu0 0.0
  %2378 = vmatpush1.xpose.msra.mxu0 0.0
  %2379 = vmatprep.subr.mxu0 0.0
  %2380 = vmatpush1.xpose.msra.mxu0 0.0
  %2381 = vmatprep.subr.mxu0 0.0
  %2382 = vmatpush1.xpose.msra.mxu0 0.0
  %2383 = vmatprep.subr.mxu0 0.0
  %2384 = vmatpush1.xpose.msra.mxu0 0.0
  %2385 = vmatprep.subr.mxu0 0.0
  %2386 = vmatpush1.xpose.msra.mxu0 0.0
  %2387 = vmatprep.subr.mxu0 0.0
  %2388 = vmatpush1.xpose.msra.mxu0 0.0
  %2389 = vmatprep.subr.mxu0 0.0
  %2390 = vmatpush1.xpose.msra.mxu0 0.0
  %2391 = vmatprep.subr.mxu0 0.0
  %2392 = vmatpush1.xpose.msra.mxu0 0.0
  %2393 = vmatprep.mubr.f32.mxu0 0.0
  %2394 = vmatmul.mubr.f32.gmra.mrb[0].mxu0 %v2327
  %v2395 = vpop.f32.mrb[0].mxu0
  %v2396 = vadd.f32 0.0, %v2395
  %v2397 = vpop.f32.mrb[0].mxu0
  %2398 = vdwg.mxu0
  %v2399 = vmul.f32 %v2323, 0.17677669
  %v2400 = vmul.f32 %v2396, 0.17677669
  %v2401 = vadd.f32 %v2399, %v721
  %v2402 = vadd.f32 %v2400, %v726
  %v2403 = vsel %vm337, %v2401, -inf
  %2404 = vmax.xlane.f32.xlu0 %v2403
  %v2405 = vpop.xlane.xlu0 %2404
  %v2406 = vsel %vm337, %v2402, -inf
  %2407 = vmax.xlane.f32.xlu0 %v2406
  %v2408 = vpop.xlane.xlu0 %2407
  %v2409 = vsub.f32 %v2401, %v2405
  %v2410 = vsub.f32 %v2402, %v2408
  %v2411 = vmul.f32 %v2409, 1.442695
  %v2412 = vpow.pop %v2411
  %v2413 = vmul.f32 %v2410, 1.442695
  %v2414 = vpow.pop %v2413
  %v2415 = vsel %vm337, %v2412, 0.0
  %2416 = vadd.xlane.f32.xlu0 %v2415
  %v2417 = vpop.xlane.xlu0 %2416
  %v2418 = vsel %vm337, %v2414, 0.0
  %2419 = vadd.xlane.f32.xlu0 %v2418
  %v2420 = vpop.xlane.xlu0 %2419
  %v2421 = vadd.f32 %v2417, 1e-09
  %v2422 = vadd.f32 %v2420, 1e-09
  %v2423 = vrcp.pop %v2421
  %v2424 = vmul.f32 %v2412, %v2423
  %v2425 = vrcp.pop %v2422
  %v2426 = vmul.f32 %v2414, %v2425
  %v2428 = vsel %vm337, %v2424, 0
  %2430 = vmatprep.subr.mxu0 0.0
  %2431 = vmatpush1.msra.mxu0 %v1356
  %2432 = vmatprep.subr.mxu0 0.0
  %2433 = vmatpush1.msra.mxu0 0.0
  %2434 = vmatprep.subr.mxu0 0.0
  %2435 = vmatpush1.msra.mxu0 0.0
  %2436 = vmatprep.subr.mxu0 0.0
  %2437 = vmatpush1.msra.mxu0 0.0
  %2438 = vmatprep.subr.mxu0 0.0
  %2439 = vmatpush1.msra.mxu0 0.0
  %2440 = vmatprep.subr.mxu0 0.0
  %2441 = vmatpush1.msra.mxu0 0.0
  %2442 = vmatprep.subr.mxu0 0.0
  %2443 = vmatpush1.msra.mxu0 0.0
  %2444 = vmatprep.subr.mxu0 0.0
  %2445 = vmatpush1.msra.mxu0 0.0
  %2446 = vmatprep.subr.mxu0 0.0
  %2447 = vmatpush1.msra.mxu0 0.0
  %2448 = vmatprep.subr.mxu0 0.0
  %2449 = vmatpush1.msra.mxu0 0.0
  %2450 = vmatprep.subr.mxu0 0.0
  %2451 = vmatpush1.msra.mxu0 0.0
  %2452 = vmatprep.subr.mxu0 0.0
  %2453 = vmatpush1.msra.mxu0 0.0
  %2454 = vmatprep.subr.mxu0 0.0
  %2455 = vmatpush1.msra.mxu0 0.0
  %2456 = vmatprep.subr.mxu0 0.0
  %2457 = vmatpush1.msra.mxu0 0.0
  %2458 = vmatprep.subr.mxu0 0.0
  %2459 = vmatpush1.msra.mxu0 0.0
  %2460 = vmatprep.subr.mxu0 0.0
  %2461 = vmatpush1.msra.mxu0 0.0
  %2462 = vmatprep.subr.mxu0 0.0
  %2463 = vmatpush1.msra.mxu0 0.0
  %2464 = vmatprep.subr.mxu0 0.0
  %2465 = vmatpush1.msra.mxu0 0.0
  %2466 = vmatprep.subr.mxu0 0.0
  %2467 = vmatpush1.msra.mxu0 0.0
  %2468 = vmatprep.subr.mxu0 0.0
  %2469 = vmatpush1.msra.mxu0 0.0
  %2470 = vmatprep.subr.mxu0 0.0
  %2471 = vmatpush1.msra.mxu0 0.0
  %2472 = vmatprep.subr.mxu0 0.0
  %2473 = vmatpush1.msra.mxu0 0.0
  %2474 = vmatprep.subr.mxu0 0.0
  %2475 = vmatpush1.msra.mxu0 0.0
  %2476 = vmatprep.subr.mxu0 0.0
  %2477 = vmatpush1.msra.mxu0 0.0
  %2478 = vmatprep.subr.mxu0 0.0
  %2479 = vmatpush1.msra.mxu0 0.0
  %2480 = vmatprep.subr.mxu0 0.0
  %2481 = vmatpush1.msra.mxu0 0.0
  %2482 = vmatprep.subr.mxu0 0.0
  %2483 = vmatpush1.msra.mxu0 0.0
  %2484 = vmatprep.subr.mxu0 0.0
  %2485 = vmatpush1.msra.mxu0 0.0
  %2486 = vmatprep.subr.mxu0 0.0
  %2487 = vmatpush1.msra.mxu0 0.0
  %2488 = vmatprep.subr.mxu0 0.0
  %2489 = vmatpush1.msra.mxu0 0.0
  %2490 = vmatprep.subr.mxu0 0.0
  %2491 = vmatpush1.msra.mxu0 0.0
  %2492 = vmatprep.subr.mxu0 0.0
  %2493 = vmatpush1.msra.mxu0 0.0
  %2494 = vmatprep.mubr.f32.mxu0 0.0
  %2495 = vmatmul.mubr.f32.gmra.mrb[0].mxu0 %v2428
  %v2496 = vpop.f32.mrb[0].mxu0
  %v2497 = vadd.f32 %v1356, %v2496
  %v2498 = vpop.f32.mrb[0].mxu0
  %2499 = vdwg.mxu0
  %v2501 = vsel %vm337, %v2426, 0
  %2503 = vmatprep.subr.mxu0 0.0
  %2504 = vmatpush1.msra.mxu0 %v1432
  %2505 = vmatprep.subr.mxu0 0.0
  %2506 = vmatpush1.msra.mxu0 0.0
  %2507 = vmatprep.subr.mxu0 0.0
  %2508 = vmatpush1.msra.mxu0 0.0
  %2509 = vmatprep.subr.mxu0 0.0
  %2510 = vmatpush1.msra.mxu0 0.0
  %2511 = vmatprep.subr.mxu0 0.0
  %2512 = vmatpush1.msra.mxu0 0.0
  %2513 = vmatprep.subr.mxu0 0.0
  %2514 = vmatpush1.msra.mxu0 0.0
  %2515 = vmatprep.subr.mxu0 0.0
  %2516 = vmatpush1.msra.mxu0 0.0
  %2517 = vmatprep.subr.mxu0 0.0
  %2518 = vmatpush1.msra.mxu0 0.0
  %2519 = vmatprep.subr.mxu0 0.0
  %2520 = vmatpush1.msra.mxu0 0.0
  %2521 = vmatprep.subr.mxu0 0.0
  %2522 = vmatpush1.msra.mxu0 0.0
  %2523 = vmatprep.subr.mxu0 0.0
  %2524 = vmatpush1.msra.mxu0 0.0
  %2525 = vmatprep.subr.mxu0 0.0
  %2526 = vmatpush1.msra.mxu0 0.0
  %2527 = vmatprep.subr.mxu0 0.0
  %2528 = vmatpush1.msra.mxu0 0.0
  %2529 = vmatprep.subr.mxu0 0.0
  %2530 = vmatpush1.msra.mxu0 0.0
  %2531 = vmatprep.subr.mxu0 0.0
  %2532 = vmatpush1.msra.mxu0 0.0
  %2533 = vmatprep.subr.mxu0 0.0
  %2534 = vmatpush1.msra.mxu0 0.0
  %2535 = vmatprep.subr.mxu0 0.0
  %2536 = vmatpush1.msra.mxu0 0.0
  %2537 = vmatprep.subr.mxu0 0.0
  %2538 = vmatpush1.msra.mxu0 0.0
  %2539 = vmatprep.subr.mxu0 0.0
  %2540 = vmatpush1.msra.mxu0 0.0
  %2541 = vmatprep.subr.mxu0 0.0
  %2542 = vmatpush1.msra.mxu0 0.0
  %2543 = vmatprep.subr.mxu0 0.0
  %2544 = vmatpush1.msra.mxu0 0.0
  %2545 = vmatprep.subr.mxu0 0.0
  %2546 = vmatpush1.msra.mxu0 0.0
  %2547 = vmatprep.subr.mxu0 0.0
  %2548 = vmatpush1.msra.mxu0 0.0
  %2549 = vmatprep.subr.mxu0 0.0
  %2550 = vmatpush1.msra.mxu0 0.0
  %2551 = vmatprep.subr.mxu0 0.0
  %2552 = vmatpush1.msra.mxu0 0.0
  %2553 = vmatprep.subr.mxu0 0.0
  %2554 = vmatpush1.msra.mxu0 0.0
  %2555 = vmatprep.subr.mxu0 0.0
  %2556 = vmatpush1.msra.mxu0 0.0
  %2557 = vmatprep.subr.mxu0 0.0
  %2558 = vmatpush1.msra.mxu0 0.0
  %2559 = vmatprep.subr.mxu0 0.0
  %2560 = vmatpush1.msra.mxu0 0.0
  %2561 = vmatprep.subr.mxu0 0.0
  %2562 = vmatpush1.msra.mxu0 0.0
  %2563 = vmatprep.subr.mxu0 0.0
  %2564 = vmatpush1.msra.mxu0 0.0
  %2565 = vmatprep.subr.mxu0 0.0
  %2566 = vmatpush1.msra.mxu0 0.0
  %2567 = vmatprep.mubr.f32.mxu0 0.0
  %2568 = vmatmul.mubr.f32.gmra.mrb[0].mxu0 %v2501
  %v2569 = vpop.f32.mrb[0].mxu0
  %v2570 = vadd.f32 %v1432, %v2569
  %v2571 = vpop.f32.mrb[0].mxu0
  %2572 = vdwg.mxu0
  %v2573 = vmax.f32 %v2497, 0.0
  %v2574 = vmax.f32 %v2570, 0.0
  %v2576 = vsel %vm156, %v2573, 0
  %2578 = vmatprep.subr.mxu0 0.0
  %2579 = vmatpush1.xpose.msra.mxu0 %v2576
  %2580 = vmatprep.subr.mxu0 0.0
  %2581 = vmatpush1.xpose.msra.mxu0 0.0
  %2582 = vmatprep.subr.mxu0 0.0
  %2583 = vmatpush1.xpose.msra.mxu0 0.0
  %2584 = vmatprep.subr.mxu0 0.0
  %2585 = vmatpush1.xpose.msra.mxu0 0.0
  %2586 = vmatprep.subr.mxu0 0.0
  %2587 = vmatpush1.xpose.msra.mxu0 0.0
  %2588 = vmatprep.subr.mxu0 0.0
  %2589 = vmatpush1.xpose.msra.mxu0 0.0
  %2590 = vmatprep.subr.mxu0 0.0
  %2591 = vmatpush1.xpose.msra.mxu0 0.0
  %2592 = vmatprep.subr.mxu0 0.0
  %2593 = vmatpush1.xpose.msra.mxu0 0.0
  %2594 = vmatprep.subr.mxu0 0.0
  %2595 = vmatpush1.xpose.msra.mxu0 0.0
  %2596 = vmatprep.subr.mxu0 0.0
  %2597 = vmatpush1.xpose.msra.mxu0 0.0
  %2598 = vmatprep.subr.mxu0 0.0
  %2599 = vmatpush1.xpose.msra.mxu0 0.0
  %2600 = vmatprep.subr.mxu0 0.0
  %2601 = vmatpush1.xpose.msra.mxu0 0.0
  %2602 = vmatprep.subr.mxu0 0.0
  %2603 = vmatpush1.xpose.msra.mxu0 0.0
  %2604 = vmatprep.subr.mxu0 0.0
  %2605 = vmatpush1.xpose.msra.mxu0 0.0
  %2606 = vmatprep.subr.mxu0 0.0
  %2607 = vmatpush1.xpose.msra.mxu0 0.0
  %2608 = vmatprep.subr.mxu0 0.0
  %2609 = vmatpush1.xpose.msra.mxu0 0.0
  %2610 = vmatprep.subr.mxu0 0.0
  %2611 = vmatpush1.xpose.msra.mxu0 0.0
  %2612 = vmatprep.subr.mxu0 0.0
  %2613 = vmatpush1.xpose.msra.mxu0 0.0
  %2614 = vmatprep.subr.mxu0 0.0
  %2615 = vmatpush1.xpose.msra.mxu0 0.0
  %2616 = vmatprep.subr.mxu0 0.0
  %2617 = vmatpush1.xpose.msra.mxu0 0.0
  %2618 = vmatprep.subr.mxu0 0.0
  %2619 = vmatpush1.xpose.msra.mxu0 0.0
  %2620 = vmatprep.subr.mxu0 0.0
  %2621 = vmatpush1.xpose.msra.mxu0 0.0
  %2622 = vmatprep.subr.mxu0 0.0
  %2623 = vmatpush1.xpose.msra.mxu0 0.0
  %2624 = vmatprep.subr.mxu0 0.0
  %2625 = vmatpush1.xpose.msra.mxu0 0.0
  %2626 = vmatprep.subr.mxu0 0.0
  %2627 = vmatpush1.xpose.msra.mxu0 0.0
  %2628 = vmatprep.subr.mxu0 0.0
  %2629 = vmatpush1.xpose.msra.mxu0 0.0
  %2630 = vmatprep.subr.mxu0 0.0
  %2631 = vmatpush1.xpose.msra.mxu0 0.0
  %2632 = vmatprep.subr.mxu0 0.0
  %2633 = vmatpush1.xpose.msra.mxu0 0.0
  %2634 = vmatprep.subr.mxu0 0.0
  %2635 = vmatpush1.xpose.msra.mxu0 0.0
  %2636 = vmatprep.subr.mxu0 0.0
  %2637 = vmatpush1.xpose.msra.mxu0 0.0
  %2638 = vmatprep.subr.mxu0 0.0
  %2639 = vmatpush1.xpose.msra.mxu0 0.0
  %2640 = vmatprep.subr.mxu0 0.0
  %2641 = vmatpush1.xpose.msra.mxu0 0.0
  %2642 = vmatprep.mubr.f32.mxu0 0.0
  %2643 = vmatmul.mubr.f32.gmra.mrb[0].mxu0 %v1509
  %v2644 = vpop.f32.mrb[0].mxu0
  %v2645 = vadd.f32 0.0, %v2644
  %v2646 = vpop.f32.mrb[0].mxu0
  %2647 = vdwg.mxu0
  %v2649 = vsel %vm156, %v2574, 0
  %2651 = vmatprep.subr.mxu0 0.0
  %2652 = vmatpush1.xpose.msra.mxu0 %v2649
  %2653 = vmatprep.subr.mxu0 0.0
  %2654 = vmatpush1.xpose.msra.mxu0 0.0
  %2655 = vmatprep.subr.mxu0 0.0
  %2656 = vmatpush1.xpose.msra.mxu0 0.0
  %2657 = vmatprep.subr.mxu0 0.0
  %2658 = vmatpush1.xpose.msra.mxu0 0.0
  %2659 = vmatprep.subr.mxu0 0.0
  %2660 = vmatpush1.xpose.msra.mxu0 0.0
  %2661 = vmatprep.subr.mxu0 0.0
  %2662 = vmatpush1.xpose.msra.mxu0 0.0
  %2663 = vmatprep.subr.mxu0 0.0
  %2664 = vmatpush1.xpose.msra.mxu0 0.0
  %2665 = vmatprep.subr.mxu0 0.0
  %2666 = vmatpush1.xpose.msra.mxu0 0.0
  %2667 = vmatprep.subr.mxu0 0.0
  %2668 = vmatpush1.xpose.msra.mxu0 0.0
  %2669 = vmatprep.subr.mxu0 0.0
  %2670 = vmatpush1.xpose.msra.mxu0 0.0
  %2671 = vmatprep.subr.mxu0 0.0
  %2672 = vmatpush1.xpose.msra.mxu0 0.0
  %2673 = vmatprep.subr.mxu0 0.0
  %2674 = vmatpush1.xpose.msra.mxu0 0.0
  %2675 = vmatprep.subr.mxu0 0.0
  %2676 = vmatpush1.xpose.msra.mxu0 0.0
  %2677 = vmatprep.subr.mxu0 0.0
  %2678 = vmatpush1.xpose.msra.mxu0 0.0
  %2679 = vmatprep.subr.mxu0 0.0
  %2680 = vmatpush1.xpose.msra.mxu0 0.0
  %2681 = vmatprep.subr.mxu0 0.0
  %2682 = vmatpush1.xpose.msra.mxu0 0.0
  %2683 = vmatprep.subr.mxu0 0.0
  %2684 = vmatpush1.xpose.msra.mxu0 0.0
  %2685 = vmatprep.subr.mxu0 0.0
  %2686 = vmatpush1.xpose.msra.mxu0 0.0
  %2687 = vmatprep.subr.mxu0 0.0
  %2688 = vmatpush1.xpose.msra.mxu0 0.0
  %2689 = vmatprep.subr.mxu0 0.0
  %2690 = vmatpush1.xpose.msra.mxu0 0.0
  %2691 = vmatprep.subr.mxu0 0.0
  %2692 = vmatpush1.xpose.msra.mxu0 0.0
  %2693 = vmatprep.subr.mxu0 0.0
  %2694 = vmatpush1.xpose.msra.mxu0 0.0
  %2695 = vmatprep.subr.mxu0 0.0
  %2696 = vmatpush1.xpose.msra.mxu0 0.0
  %2697 = vmatprep.subr.mxu0 0.0
  %2698 = vmatpush1.xpose.msra.mxu0 0.0
  %2699 = vmatprep.subr.mxu0 0.0
  %2700 = vmatpush1.xpose.msra.mxu0 0.0
  %2701 = vmatprep.subr.mxu0 0.0
  %2702 = vmatpush1.xpose.msra.mxu0 0.0
  %2703 = vmatprep.subr.mxu0 0.0
  %2704 = vmatpush1.xpose.msra.mxu0 0.0
  %2705 = vmatprep.subr.mxu0 0.0
  %2706 = vmatpush1.xpose.msra.mxu0 0.0
  %2707 = vmatprep.subr.mxu0 0.0
  %2708 = vmatpush1.xpose.msra.mxu0 0.0
  %2709 = vmatprep.subr.mxu0 0.0
  %2710 = vmatpush1.xpose.msra.mxu0 0.0
  %2711 = vmatprep.subr.mxu0 0.0
  %2712 = vmatpush1.xpose.msra.mxu0 0.0
  %2713 = vmatprep.subr.mxu0 0.0
  %2714 = vmatpush1.xpose.msra.mxu0 0.0
  %2715 = vmatprep.mubr.f32.mxu0 0.0
  %2716 = vmatmul.mubr.f32.gmra.mrb[0].mxu0 %v1584
  %v2717 = vpop.f32.mrb[0].mxu0
  %v2718 = vadd.f32 0.0, %v2717
  %v2719 = vpop.f32.mrb[0].mxu0
  %2720 = vdwg.mxu0
  %v2721 = vmul.f32 %v2645, 0.17677669
  %v2722 = vmul.f32 %v2718, 0.17677669
  %v2723 = vsel %vm312, %v2721, -inf
  %2724 = vmax.xlane.f32.xlu0 %v2723
  %v2725 = vpop.xlane.xlu0 %2724
  %v2726 = vsel %vm312, %v2722, -inf
  %2727 = vmax.xlane.f32.xlu0 %v2726
  %v2728 = vpop.xlane.xlu0 %2727
  %v2729 = vsub.f32 %v2721, %v2725
  %v2730 = vsub.f32 %v2722, %v2728
  %v2731 = vmul.f32 %v2729, 1.442695
  %v2732 = vpow.pop %v2731
  %v2733 = vmul.f32 %v2730, 1.442695
  %v2734 = vpow.pop %v2733
  %v2735 = vsel %vm312, %v2732, 0.0
  %2736 = vadd.xlane.f32.xlu0 %v2735
  %v2737 = vpop.xlane.xlu0 %2736
  %v2738 = vsel %vm312, %v2734, 0.0
  %2739 = vadd.xlane.f32.xlu0 %v2738
  %v2740 = vpop.xlane.xlu0 %2739
  %v2741 = vadd.f32 %v2737, 1e-09
  %v2742 = vadd.f32 %v2740, 1e-09
  %v2743 = vrcp.pop %v2741
  %v2744 = vmul.f32 %v2732, %v2743
  %v2745 = vrcp.pop %v2742
  %v2746 = vmul.f32 %v2734, %v2745
  %v2748 = vsel %vm337, %v2744, 0
  %2750 = vmatprep.subr.mxu0 0.0
  %2751 = vmatpush1.msra.mxu0 %v2573
  %2752 = vmatprep.subr.mxu0 0.0
  %2753 = vmatpush1.msra.mxu0 0.0
  %2754 = vmatprep.subr.mxu0 0.0
  %2755 = vmatpush1.msra.mxu0 0.0
  %2756 = vmatprep.subr.mxu0 0.0
  %2757 = vmatpush1.msra.mxu0 0.0
  %2758 = vmatprep.subr.mxu0 0.0
  %2759 = vmatpush1.msra.mxu0 0.0
  %2760 = vmatprep.subr.mxu0 0.0
  %2761 = vmatpush1.msra.mxu0 0.0
  %2762 = vmatprep.subr.mxu0 0.0
  %2763 = vmatpush1.msra.mxu0 0.0
  %2764 = vmatprep.subr.mxu0 0.0
  %2765 = vmatpush1.msra.mxu0 0.0
  %2766 = vmatprep.subr.mxu0 0.0
  %2767 = vmatpush1.msra.mxu0 0.0
  %2768 = vmatprep.subr.mxu0 0.0
  %2769 = vmatpush1.msra.mxu0 0.0
  %2770 = vmatprep.subr.mxu0 0.0
  %2771 = vmatpush1.msra.mxu0 0.0
  %2772 = vmatprep.subr.mxu0 0.0
  %2773 = vmatpush1.msra.mxu0 0.0
  %2774 = vmatprep.subr.mxu0 0.0
  %2775 = vmatpush1.msra.mxu0 0.0
  %2776 = vmatprep.subr.mxu0 0.0
  %2777 = vmatpush1.msra.mxu0 0.0
  %2778 = vmatprep.subr.mxu0 0.0
  %2779 = vmatpush1.msra.mxu0 0.0
  %2780 = vmatprep.subr.mxu0 0.0
  %2781 = vmatpush1.msra.mxu0 0.0
  %2782 = vmatprep.subr.mxu0 0.0
  %2783 = vmatpush1.msra.mxu0 0.0
  %2784 = vmatprep.subr.mxu0 0.0
  %2785 = vmatpush1.msra.mxu0 0.0
  %2786 = vmatprep.subr.mxu0 0.0
  %2787 = vmatpush1.msra.mxu0 0.0
  %2788 = vmatprep.subr.mxu0 0.0
  %2789 = vmatpush1.msra.mxu0 0.0
  %2790 = vmatprep.subr.mxu0 0.0
  %2791 = vmatpush1.msra.mxu0 0.0
  %2792 = vmatprep.subr.mxu0 0.0
  %2793 = vmatpush1.msra.mxu0 0.0
  %2794 = vmatprep.subr.mxu0 0.0
  %2795 = vmatpush1.msra.mxu0 0.0
  %2796 = vmatprep.subr.mxu0 0.0
  %2797 = vmatpush1.msra.mxu0 0.0
  %2798 = vmatprep.subr.mxu0 0.0
  %2799 = vmatpush1.msra.mxu0 0.0
  %2800 = vmatprep.subr.mxu0 0.0
  %2801 = vmatpush1.msra.mxu0 0.0
  %2802 = vmatprep.subr.mxu0 0.0
  %2803 = vmatpush1.msra.mxu0 0.0
  %2804 = vmatprep.subr.mxu0 0.0
  %2805 = vmatpush1.msra.mxu0 0.0
  %2806 = vmatprep.subr.mxu0 0.0
  %2807 = vmatpush1.msra.mxu0 0.0
  %2808 = vmatprep.subr.mxu0 0.0
  %2809 = vmatpush1.msra.mxu0 0.0
  %2810 = vmatprep.subr.mxu0 0.0
  %2811 = vmatpush1.msra.mxu0 0.0
  %2812 = vmatprep.subr.mxu0 0.0
  %2813 = vmatpush1.msra.mxu0 0.0
  %2814 = vmatprep.mubr.f32.mxu0 0.0
  %2815 = vmatmul.mubr.f32.gmra.mrb[0].mxu0 %v2748
  %v2816 = vpop.f32.mrb[0].mxu0
  %v2817 = vadd.f32 0.0, %v2816
  %v2818 = vpop.f32.mrb[0].mxu0
  %2819 = vdwg.mxu0
  %v2821 = vsel %vm337, %v2746, 0
  %2823 = vmatprep.subr.mxu0 0.0
  %2824 = vmatpush1.msra.mxu0 %v2574
  %2825 = vmatprep.subr.mxu0 0.0
  %2826 = vmatpush1.msra.mxu0 0.0
  %2827 = vmatprep.subr.mxu0 0.0
  %2828 = vmatpush1.msra.mxu0 0.0
  %2829 = vmatprep.subr.mxu0 0.0
  %2830 = vmatpush1.msra.mxu0 0.0
  %2831 = vmatprep.subr.mxu0 0.0
  %2832 = vmatpush1.msra.mxu0 0.0
  %2833 = vmatprep.subr.mxu0 0.0
  %2834 = vmatpush1.msra.mxu0 0.0
  %2835 = vmatprep.subr.mxu0 0.0
  %2836 = vmatpush1.msra.mxu0 0.0
  %2837 = vmatprep.subr.mxu0 0.0
  %2838 = vmatpush1.msra.mxu0 0.0
  %2839 = vmatprep.subr.mxu0 0.0
  %2840 = vmatpush1.msra.mxu0 0.0
  %2841 = vmatprep.subr.mxu0 0.0
  %2842 = vmatpush1.msra.mxu0 0.0
  %2843 = vmatprep.subr.mxu0 0.0
  %2844 = vmatpush1.msra.mxu0 0.0
  %2845 = vmatprep.subr.mxu0 0.0
  %2846 = vmatpush1.msra.mxu0 0.0
  %2847 = vmatprep.subr.mxu0 0.0
  %2848 = vmatpush1.msra.mxu0 0.0
  %2849 = vmatprep.subr.mxu0 0.0
  %2850 = vmatpush1.msra.mxu0 0.0
  %2851 = vmatprep.subr.mxu0 0.0
  %2852 = vmatpush1.msra.mxu0 0.0
  %2853 = vmatprep.subr.mxu0 0.0
  %2854 = vmatpush1.msra.mxu0 0.0
  %2855 = vmatprep.subr.mxu0 0.0
  %2856 = vmatpush1.msra.mxu0 0.0
  %2857 = vmatprep.subr.mxu0 0.0
  %2858 = vmatpush1.msra.mxu0 0.0
  %2859 = vmatprep.subr.mxu0 0.0
  %2860 = vmatpush1.msra.mxu0 0.0
  %2861 = vmatprep.subr.mxu0 0.0
  %2862 = vmatpush1.msra.mxu0 0.0
  %2863 = vmatprep.subr.mxu0 0.0
  %2864 = vmatpush1.msra.mxu0 0.0
  %2865 = vmatprep.subr.mxu0 0.0
  %2866 = vmatpush1.msra.mxu0 0.0
  %2867 = vmatprep.subr.mxu0 0.0
  %2868 = vmatpush1.msra.mxu0 0.0
  %2869 = vmatprep.subr.mxu0 0.0
  %2870 = vmatpush1.msra.mxu0 0.0
  %2871 = vmatprep.subr.mxu0 0.0
  %2872 = vmatpush1.msra.mxu0 0.0
  %2873 = vmatprep.subr.mxu0 0.0
  %2874 = vmatpush1.msra.mxu0 0.0
  %2875 = vmatprep.subr.mxu0 0.0
  %2876 = vmatpush1.msra.mxu0 0.0
  %2877 = vmatprep.subr.mxu0 0.0
  %2878 = vmatpush1.msra.mxu0 0.0
  %2879 = vmatprep.subr.mxu0 0.0
  %2880 = vmatpush1.msra.mxu0 0.0
  %2881 = vmatprep.subr.mxu0 0.0
  %2882 = vmatpush1.msra.mxu0 0.0
  %2883 = vmatprep.subr.mxu0 0.0
  %2884 = vmatpush1.msra.mxu0 0.0
  %2885 = vmatprep.subr.mxu0 0.0
  %2886 = vmatpush1.msra.mxu0 0.0
  %2887 = vmatprep.mubr.f32.mxu0 0.0
  %2888 = vmatmul.mubr.f32.gmra.mrb[0].mxu0 %v2821
  %v2889 = vpop.f32.mrb[0].mxu0
  %v2890 = vadd.f32 0.0, %v2889
  %v2891 = vpop.f32.mrb[0].mxu0
  %2892 = vdwg.mxu0
  %v2895 = vrot.slane %v2890, 7
  %v2896 = vsel %vm491, %v2895, %v2817
  %v2897 = vsel %vm156, %v2896, 0
  %2899 = vmatprep.subr.mxu0 0.0
  %2900 = vmatpush1.msra.mxu0 %v33
  %2901 = vmatprep.subr.mxu0 0.0
  %2902 = vmatpush1.msra.mxu0 %v34
  %2903 = vmatprep.subr.mxu0 0.0
  %2904 = vmatpush1.msra.mxu0 %v35
  %2905 = vmatprep.subr.mxu0 0.0
  %2906 = vmatpush1.msra.mxu0 %v36
  %2907 = vmatprep.subr.mxu0 0.0
  %2908 = vmatpush1.msra.mxu0 0.0
  %2909 = vmatprep.subr.mxu0 0.0
  %2910 = vmatpush1.msra.mxu0 0.0
  %2911 = vmatprep.subr.mxu0 0.0
  %2912 = vmatpush1.msra.mxu0 0.0
  %2913 = vmatprep.subr.mxu0 0.0
  %2914 = vmatpush1.msra.mxu0 0.0
  %2915 = vmatprep.subr.mxu0 0.0
  %2916 = vmatpush1.msra.mxu0 0.0
  %2917 = vmatprep.subr.mxu0 0.0
  %2918 = vmatpush1.msra.mxu0 0.0
  %2919 = vmatprep.subr.mxu0 0.0
  %2920 = vmatpush1.msra.mxu0 0.0
  %2921 = vmatprep.subr.mxu0 0.0
  %2922 = vmatpush1.msra.mxu0 0.0
  %2923 = vmatprep.subr.mxu0 0.0
  %2924 = vmatpush1.msra.mxu0 0.0
  %2925 = vmatprep.subr.mxu0 0.0
  %2926 = vmatpush1.msra.mxu0 0.0
  %2927 = vmatprep.subr.mxu0 0.0
  %2928 = vmatpush1.msra.mxu0 0.0
  %2929 = vmatprep.subr.mxu0 0.0
  %2930 = vmatpush1.msra.mxu0 0.0
  %2931 = vmatprep.subr.mxu0 0.0
  %2932 = vmatpush1.msra.mxu0 0.0
  %2933 = vmatprep.subr.mxu0 0.0
  %2934 = vmatpush1.msra.mxu0 0.0
  %2935 = vmatprep.subr.mxu0 0.0
  %2936 = vmatpush1.msra.mxu0 0.0
  %2937 = vmatprep.subr.mxu0 0.0
  %2938 = vmatpush1.msra.mxu0 0.0
  %2939 = vmatprep.subr.mxu0 0.0
  %2940 = vmatpush1.msra.mxu0 0.0
  %2941 = vmatprep.subr.mxu0 0.0
  %2942 = vmatpush1.msra.mxu0 0.0
  %2943 = vmatprep.subr.mxu0 0.0
  %2944 = vmatpush1.msra.mxu0 0.0
  %2945 = vmatprep.subr.mxu0 0.0
  %2946 = vmatpush1.msra.mxu0 0.0
  %2947 = vmatprep.subr.mxu0 0.0
  %2948 = vmatpush1.msra.mxu0 0.0
  %2949 = vmatprep.subr.mxu0 0.0
  %2950 = vmatpush1.msra.mxu0 0.0
  %2951 = vmatprep.subr.mxu0 0.0
  %2952 = vmatpush1.msra.mxu0 0.0
  %2953 = vmatprep.subr.mxu0 0.0
  %2954 = vmatpush1.msra.mxu0 0.0
  %2955 = vmatprep.subr.mxu0 0.0
  %2956 = vmatpush1.msra.mxu0 0.0
  %2957 = vmatprep.subr.mxu0 0.0
  %2958 = vmatpush1.msra.mxu0 0.0
  %2959 = vmatprep.subr.mxu0 0.0
  %2960 = vmatpush1.msra.mxu0 0.0
  %2961 = vmatprep.subr.mxu0 0.0
  %2962 = vmatpush1.msra.mxu0 0.0
  %2963 = vmatprep.mubr.f32.mxu0 0.0
  %2964 = vmatmul.mubr.f32.gmra.mrb[0].mxu0 %v2897
  %v2965 = vpop.f32.mrb[0].mxu0
  %v2966 = vadd.f32 %v1834, %v2965
  %v2967 = vpop.f32.mrb[0].mxu0
  %2968 = vdwg.mxu0
  %v2969 = vmax.f32 %v2966, 0.0
  %v2970 = vadd.f32 %v1912, %v2969
  %v2971 = vmul.f32 %v2970, 0.5
  %v2972 = vmul.f32 %v2971, %v819
  %v2973 = vlaneseq
  %v2974 = vshrl.u32 %v2973, 7
  %v2975 = vsub.s32 0, %v2974
  %v2976 = vrot.slane %v63, %v2975
  %v2978 = vsel %vm156, %v2972, 0
  %2980 = vmatprep.subr.mxu0 0.0
  %2981 = vmatpush1.msra.mxu0 %v37
  %2982 = vmatprep.subr.mxu0 0.0
  %2983 = vmatpush1.msra.mxu0 %v38
  %2984 = vmatprep.subr.mxu0 0.0
  %2985 = vmatpush1.msra.mxu0 %v39
  %2986 = vmatprep.subr.mxu0 0.0
  %2987 = vmatpush1.msra.mxu0 %v40
  %2988 = vmatprep.subr.mxu0 0.0
  %2989 = vmatpush1.msra.mxu0 0.0
  %2990 = vmatprep.subr.mxu0 0.0
  %2991 = vmatpush1.msra.mxu0 0.0
  %2992 = vmatprep.subr.mxu0 0.0
  %2993 = vmatpush1.msra.mxu0 0.0
  %2994 = vmatprep.subr.mxu0 0.0
  %2995 = vmatpush1.msra.mxu0 0.0
  %2996 = vmatprep.subr.mxu0 0.0
  %2997 = vmatpush1.msra.mxu0 0.0
  %2998 = vmatprep.subr.mxu0 0.0
  %2999 = vmatpush1.msra.mxu0 0.0
  %3000 = vmatprep.subr.mxu0 0.0
  %3001 = vmatpush1.msra.mxu0 0.0
  %3002 = vmatprep.subr.mxu0 0.0
  %3003 = vmatpush1.msra.mxu0 0.0
  %3004 = vmatprep.subr.mxu0 0.0
  %3005 = vmatpush1.msra.mxu0 0.0
  %3006 = vmatprep.subr.mxu0 0.0
  %3007 = vmatpush1.msra.mxu0 0.0
  %3008 = vmatprep.subr.mxu0 0.0
  %3009 = vmatpush1.msra.mxu0 0.0
  %3010 = vmatprep.subr.mxu0 0.0
  %3011 = vmatpush1.msra.mxu0 0.0
  %3012 = vmatprep.subr.mxu0 0.0
  %3013 = vmatpush1.msra.mxu0 0.0
  %3014 = vmatprep.subr.mxu0 0.0
  %3015 = vmatpush1.msra.mxu0 0.0
  %3016 = vmatprep.subr.mxu0 0.0
  %3017 = vmatpush1.msra.mxu0 0.0
  %3018 = vmatprep.subr.mxu0 0.0
  %3019 = vmatpush1.msra.mxu0 0.0
  %3020 = vmatprep.subr.mxu0 0.0
  %3021 = vmatpush1.msra.mxu0 0.0
  %3022 = vmatprep.subr.mxu0 0.0
  %3023 = vmatpush1.msra.mxu0 0.0
  %3024 = vmatprep.subr.mxu0 0.0
  %3025 = vmatpush1.msra.mxu0 0.0
  %3026 = vmatprep.subr.mxu0 0.0
  %3027 = vmatpush1.msra.mxu0 0.0
  %3028 = vmatprep.subr.mxu0 0.0
  %3029 = vmatpush1.msra.mxu0 0.0
  %3030 = vmatprep.subr.mxu0 0.0
  %3031 = vmatpush1.msra.mxu0 0.0
  %3032 = vmatprep.subr.mxu0 0.0
  %3033 = vmatpush1.msra.mxu0 0.0
  %3034 = vmatprep.subr.mxu0 0.0
  %3035 = vmatpush1.msra.mxu0 0.0
  %3036 = vmatprep.subr.mxu0 0.0
  %3037 = vmatpush1.msra.mxu0 0.0
  %3038 = vmatprep.subr.mxu0 0.0
  %3039 = vmatpush1.msra.mxu0 0.0
  %3040 = vmatprep.subr.mxu0 0.0
  %3041 = vmatpush1.msra.mxu0 0.0
  %3042 = vmatprep.subr.mxu0 0.0
  %3043 = vmatpush1.msra.mxu0 0.0
  %3044 = vmatprep.mubr.f32.mxu0 0.0
  %3045 = vmatmul.mubr.f32.gmra.mrb[0].mxu0 %v2978
  %v3046 = vpop.f32.mrb[0].mxu0
  %v3047 = vadd.f32 %v2976, %v3046
  %v3048 = vpop.f32.mrb[0].mxu0
  %3049 = vdwg.mxu0
  %v3050 = vrot.slane %v2746, 7
  %v3051 = vsel %vm491, %v3050, %v2744
  %v3053 = vsel %vm337, %v3051, 0.0
  %v3056 = vunpack.c.l.s4 1966171168
  %v3057 = vunpack.c.0.s8 %v3056
  %v3058 = vlaneseq
  %v3059 = vshrl.u32 %v3058, 7
  %v3060 = vsub.s32 %v3057, %v3059
  %v3061 = vrot.slane %v3047, %v3060
  %v3062 = vcombine.high %v3061, %v3061
  %v3064 = vunpack.c.l.s4 1966171168
  %v3065 = vunpack.c.0.s8 %v3064
  %v3066 = vlaneseq
  %v3067 = vshrl.u32 %v3066, 7
  %v3068 = vsub.s32 %v3065, %v3067
  %v3069 = vrot.slane %v3061, %v3068
  %v3071 = vunpack.c.l.s4 1966171168
  %v3072 = vunpack.c.0.s8 %v3071
  %v3073 = vlaneseq
  %v3074 = vshrl.u32 %v3073, 7
  %v3075 = vsub.s32 %v3072, %v3074
  %v3076 = vrot.slane %v3062, %v3075
  %v3081 = vunpack.c.l.s4 1966171168
  %v3082 = vunpack.c.0.s8 %v3081
  %v3083 = vlaneseq
  %v3084 = vshrl.u32 %v3083, 7
  %v3085 = vsub.s32 %v3082, %v3084
  %v3086 = vrot.slane %v3053, %v3085
  %v3087 = vcombine.high %v3086, %v3086
  %v3089 = vunpack.c.l.s4 1966171168
  %v3090 = vunpack.c.0.s8 %v3089
  %v3091 = vlaneseq
  %v3092 = vshrl.u32 %v3091, 7
  %v3093 = vsub.s32 %v3090, %v3092
  %v3094 = vrot.slane %v3086, %v3093
  %v3096 = vunpack.c.l.s4 1966171168
  %v3097 = vunpack.c.0.s8 %v3096
  %v3098 = vlaneseq
  %v3099 = vshrl.u32 %v3098, 7
  %v3100 = vsub.s32 %v3097, %v3099
  %v3101 = vrot.slane %v3087, %v3100
  %v3102 = vlaneseq
  %v3103 = vshrl.u32 %v3102, 7
  %v3104 = vsub.s32 0, %v3103
  %v3105 = vrot.slane %v3094, %v3104
  %v3106 = vlaneseq
  %v3107 = vshrl.u32 %v3106, 7
  %v3108 = vsub.s32 0, %v3107
  %v3109 = vrot.slane %v3101, %v3108
  %vm3112 = vcmask 1040384
  %v3113 = vsel %vm3112, %v3069, %v3105
  %v3114 = vsel %vm3112, %v3076, %v3109
  %3115 = vst [vmem:[%s6] sm:$0x3] %v3113
  %3116 = vst [vmem:[%s6 + $0x2] sm:$0x3] %v3114
  // Predicated region
  $region26: #{regat_forward.1} parent=0 // pred_check
    _
  $region27: #{regat_forward.1} parent=0 // pred_check_branch
    %3118 = sbr.rel (0) target = $region29
  $region28: #{regat_forward.1} parent=0 // pred_region
    _
  $region29: #{regat_forward.1} parent=0 // pred_fallthru
    _
  // Predicated region
  $region30: #{regat_forward.1} parent=0 // pred_check
    _
  $region31: #{regat_forward.1} parent=0 // pred_check_branch
    %3120 = sbr.rel (0) target = $region33
  $region32: #{regat_forward.1} parent=0 // pred_region
    _
  $region33: #{regat_forward.1} parent=0 // pred_fallthru
    _

</llo_original>
